<compile_context>
chip_gen: v7x
topology: tpu7x:2x2x1
jax: 0.10.0
libtpu: 0.0.40
codegen_flags: <defaults>
</compile_context>

<pallas_src>
import jax
import jax.numpy as jnp
from jax.experimental import pallas as pl
from jax.experimental.pallas import tpu as pltpu


# ----------------------------------------------------------------------------
# Pallas kernel: one H3 layer (H3Block -> ReLU -> Linear) for a batch block
# ----------------------------------------------------------------------------
def h3_layer_kernel(x_ref,
                    wqkv_ref, bqkv_ref,          # fused QKV projection
                    sk_ref, sd_ref,              # shift-SSM depthwise taps + skip
                    dT_ref, dD_ref,              # diag-SSM Toeplitz (per head) + skip
                    wo_ref, bo_ref,              # H3Block output projection
                    w2_ref, b2_ref,              # trailing Linear(model_dim, model_dim)
                    out_ref,
                    y_scr):                      # VMEM scratch (bt*L, D) for head outputs
    Bt, L, D = x_ref.shape
    H = dT_ref.shape[0]
    W = sk_ref.shape[0]
    dh = D // H
    M = Bt * L
    f32 = jnp.float32
    bf16 = jnp.bfloat16

    # ---- fused QKV projection: one (bt*L, D) x (D, 3D) MXU matmul (bf16 in, f32 acc)
    xm = x_ref[...].reshape(M, D).astype(bf16)
    qkv = jnp.dot(xm, wqkv_ref[...], preferred_element_type=f32) + bqkv_ref[...]
    q = qkv[:, 0 * D:1 * D]                                        # (M, D)
    k = qkv[:, 1 * D:2 * D]
    v = qkv[:, 2 * D:3 * D]

    # ---- shift SSM on K: causal depthwise conv (W taps) via XLU sublane rolls ----
    sk = sk_ref[...]                                               # (W, D)
    sd = sd_ref[...]                                               # (1, D)
    # time index within each sequence (rows are (batch, time) flattened)
    t_idx = jax.lax.broadcasted_iota(jnp.int32, (Bt, L, D), 1).reshape(M, D)
    kbar = k * (sd + sk[0:1, :])                                   # skip + tap 0
    for s in range(1, min(W, L)):                                  # taps >= L hit only zero padding
        rolled = pltpu.roll(k, shift=s, axis=0)                    # k[t - s]; wrap masked below
        kbar = kbar + jnp.where(t_idx >= s, rolled, 0.0) * sk[s:s + 1, :]

    # ---- per-head attention-like state-space mixing ----
    dD = dD_ref[...]                                               # (1, H)
    for h in range(H):                                             # static unroll over heads
        # outer product per timestep; batch folded into the N dim: (L, bt*dh*dh)
        kv_parts = []
        for b in range(Bt):
            kh = kbar[b * L:(b + 1) * L, h * dh:(h + 1) * dh]      # (L, dh)
            vh = v[b * L:(b + 1) * L, h * dh:(h + 1) * dh]         # (L, dh)
            kv_parts.append((vh[:, :, None] * kh[:, None, :]).reshape(L, dh * dh))
        kv_h = jnp.concatenate(kv_parts, axis=1)                   # (L, bt*dh*dh)

        # diag-S4D SSM over time == lower-triangular Toeplitz matmul (MXU, bf16)
        s_h = (jnp.dot(dT_ref[h], kv_h.astype(bf16), preferred_element_type=f32)
               + dD[:, h:h + 1] * kv_h)                            # (L, bt*dh*dh)

        # contract with Q:  y[t, i] = sum_j S[t, i, j] * q[t, j]; write into scratch
        for b in range(Bt):
            qh = q[b * L:(b + 1) * L, h * dh:(h + 1) * dh]         # (L, dh)
            s_bh = s_h[:, b * dh * dh:(b + 1) * dh * dh].reshape(L, dh, dh)
            y_scr[b * L:(b + 1) * L, h * dh:(h + 1) * dh] = (
                jnp.sum(s_bh * qh[:, None, :], axis=-1))           # (L, dh)

    # ---- H3Block output projection -> ReLU -> trailing Linear (bf16 MXU, f32 acc)
    y = jnp.dot(y_scr[...].astype(bf16), wo_ref[...],
                preferred_element_type=f32) + bo_ref[...]
    y = jnp.maximum(y, 0.0)                                        # ReLU
    y = jnp.dot(y.astype(bf16), w2_ref[...],
                preferred_element_type=f32) + b2_ref[...]

    out_ref[...] = y.reshape(Bt, L, D).astype(out_ref.dtype)


# ----------------------------------------------------------------------------
# Wrapper: pallas_call for one H3 layer
# ----------------------------------------------------------------------------
def h3_layer(x, p, bt=1):
    B, L, D = x.shape
    if B % bt != 0:
        bt = 1

    def full(arr):
        nd = arr.ndim
        # grid-invariant operands: constant index map -> no per-step re-DMA
        return pl.BlockSpec(arr.shape, lambda b, _nd=nd: (0,) * _nd)

    return pl.pallas_call(
        h3_layer_kernel,
        out_shape=jax.ShapeDtypeStruct((B, L, D), x.dtype),
        grid=(B // bt,),
        in_specs=[
            pl.BlockSpec((bt, L, D), lambda b: (b, 0, 0)),         # x (batch block)
            full(p["wqkv"]), full(p["bqkv"]),                      # fused QKV weight/bias
            full(p["shift_k"]), full(p["shift_d"]),                # shift taps, shift skip
            full(p["diag_T"]), full(p["diag_d"]),                  # diag Toeplitz, diag skip
            full(p["wo"]), full(p["bo"]),                          # Wo, bo
            full(p["w2"]), full(p["b2"]),                          # W2, b2
        ],
        out_specs=pl.BlockSpec((bt, L, D), lambda b: (b, 0, 0)),
        scratch_shapes=[pltpu.VMEM((bt * L, D), jnp.float32)],     # head-output slab
        compiler_params=pltpu.CompilerParams(
            dimension_semantics=("parallel",),                     # batch blocks -> 2 TCs on v7x
            vmem_limit_bytes=48 * 1024 * 1024),
    )(x, p["wqkv"], p["bqkv"], p["shift_k"], p["shift_d"],
      p["diag_T"], p["diag_d"], p["wo"], p["bo"], p["w2"], p["b2"])


# ----------------------------------------------------------------------------
# Deterministic parameter setup (plain-JAX glue)
# ----------------------------------------------------------------------------
def init_params(key, model_dim, hid_dim, heads, seq_len, dt, n_layers):
    D, N, H, L = model_dim, hid_dim, heads, seq_len
    bound = D ** -0.5
    bf16 = jnp.bfloat16

    def linear(k):
        k1, k2 = jax.random.split(k)
        w = jax.random.uniform(k1, (D, D), jnp.float32, -bound, bound)
        b = jax.random.uniform(k2, (1, D), jnp.float32, -bound, bound)
        return w, b

    params = []
    for _ in range(n_layers):
        keys = jax.random.split(key, 12)
        key = keys[0]
        wq, bq = linear(keys[1])
        wk, bk = linear(keys[2])
        wv, bv = linear(keys[3])
        wo, bo = linear(keys[4])
        w2, b2 = linear(keys[5])

        # fused QKV: (D, 3D) weight; MXU operands stored in bf16 (f32 accumulate in-kernel)
        wqkv = jnp.concatenate([wq, wk, wv], axis=1).astype(bf16)
        bqkv = jnp.concatenate([bq, bk, bv], axis=1)               # f32 (added post-acc)

        # S4 shift block: A = shift matrix, B = e1  =>  conv kernel == C (N taps)
        shift_k = jax.random.normal(keys[6], (N, D), jnp.float32) * (N ** -0.5)
        shift_d = jax.random.normal(keys[7], (1, D), jnp.float32)

        # S4 diagonal block: S4D-Inv init, bilinear discretization, dt=0.1
        n = jnp.arange(N, dtype=jnp.float32)
        A = -0.5 + 1j * (N / jnp.pi) * (N / (2.0 * n + 1.0) - 1.0)   # (N,)
        A = jnp.broadcast_to(A, (H, N))
        Cre = jax.random.normal(keys[8], (H, N), jnp.float32)
        Cim = jax.random.normal(keys[9], (H, N), jnp.float32)
        C = (Cre + 1j * Cim) * (0.5 ** 0.5)
        dA = (1.0 + dt * A / 2.0) / (1.0 - dt * A / 2.0)
        dB = dt / (1.0 - dt * A / 2.0)                                # B = 1
        t = jnp.arange(L, dtype=jnp.float32)
        powers = dA[:, :, None] ** t[None, None, :]                   # (H, N, L)
        Kd = (2.0 * (C * dB)[:, :, None] * powers).sum(axis=1).real.astype(jnp.float32)
        idx = jnp.arange(L)
        diff = idx[:, None] - idx[None, :]                            # (L, L)
        diag_T = jnp.where(diff[None] >= 0,
                           Kd[:, jnp.clip(diff, 0, L - 1)], 0.0)      # (H, L, L)
        diag_d = jax.random.normal(keys[10], (1, H), jnp.float32)

        params.append(dict(wqkv=wqkv, bqkv=bqkv,
                           shift_k=shift_k, shift_d=shift_d,
                           diag_T=diag_T.astype(bf16), diag_d=diag_d,
                           wo=wo.astype(bf16), bo=bo,
                           w2=w2.astype(bf16), b2=b2))
    return params


def h3_forward(x, params, bt=1):
    y = x
    for p in params:
        y = h3_layer(y, p, bt=bt)
    return y


# ----------------------------------------------------------------------------
if __name__ == "__main__":
    B, L, D = 4, 8, 32          # batch, sequence, model_dim
    heads, hid_dim = 2, 16      # heads | model_dim ; SSM state dimension
    n_layers, dt = 2, 0.1
    bt = 2                      # batch elements per grid step (grid stays >= 2 for v7x)

    key = jax.random.PRNGKey(0)
    key, xk = jax.random.split(key)
    x = jax.random.normal(xk, (B, L, D), jnp.float32)

    params = init_params(key, D, hid_dim, heads, L, dt, n_layers)

    y = h3_forward(x, params, bt=bt)
    jax.block_until_ready(y)
    assert y.shape == (B, L, D)
    print("KERNEL_OK")
</pallas_src>

<mosaic_0001>
module attributes {stable_mosaic.version = 11 : i64} {
  func.func @h3_layer_kernel(%arg0: i32, %arg1: memref<2x8x32xf32, #tpu.memory_space<vmem>>, %arg2: memref<32x96xbf16, #tpu.memory_space<vmem>>, %arg3: memref<1x96xf32, #tpu.memory_space<vmem>>, %arg4: memref<16x32xf32, #tpu.memory_space<vmem>>, %arg5: memref<1x32xf32, #tpu.memory_space<vmem>>, %arg6: memref<2x8x8xbf16, #tpu.memory_space<vmem>>, %arg7: memref<1x2xf32, #tpu.memory_space<vmem>>, %arg8: memref<32x32xbf16, #tpu.memory_space<vmem>>, %arg9: memref<1x32xf32, #tpu.memory_space<vmem>>, %arg10: memref<32x32xbf16, #tpu.memory_space<vmem>>, %arg11: memref<1x32xf32, #tpu.memory_space<vmem>>, %arg12: memref<2x8x32xf32, #tpu.memory_space<vmem>>, %arg13: memref<16x32xf32, #tpu.memory_space<vmem>>) attributes {dimension_semantics = [#tpu.dimension_semantics<parallel>], iteration_bounds = array<i64: 2>, scalar_prefetch = 0 : i64, scratch_operands = 1 : i64, tpu.core_type = #tpu.core_type<tc>, window_params = [{transform_indices = @transform_0, window_bounds = array<i64: 2, 8, 32>}, {pipeline_mode = #tpu.pipeline_mode<synchronous>, transform_indices = @transform_1, window_bounds = array<i64: 32, 96>}, {pipeline_mode = #tpu.pipeline_mode<synchronous>, transform_indices = @transform_2, window_bounds = array<i64: 1, 96>}, {pipeline_mode = #tpu.pipeline_mode<synchronous>, transform_indices = @transform_3, window_bounds = array<i64: 16, 32>}, {pipeline_mode = #tpu.pipeline_mode<synchronous>, transform_indices = @transform_4, window_bounds = array<i64: 1, 32>}, {pipeline_mode = #tpu.pipeline_mode<synchronous>, transform_indices = @transform_5, window_bounds = array<i64: 2, 8, 8>}, {pipeline_mode = #tpu.pipeline_mode<synchronous>, transform_indices = @transform_6, window_bounds = array<i64: 1, 2>}, {pipeline_mode = #tpu.pipeline_mode<synchronous>, transform_indices = @transform_7, window_bounds = array<i64: 32, 32>}, {pipeline_mode = #tpu.pipeline_mode<synchronous>, transform_indices = @transform_8, window_bounds = array<i64: 1, 32>}, {pipeline_mode = #tpu.pipeline_mode<synchronous>, transform_indices = @transform_9, window_bounds = array<i64: 32, 32>}, {pipeline_mode = #tpu.pipeline_mode<synchronous>, transform_indices = @transform_10, window_bounds = array<i64: 1, 32>}, {transform_indices = @transform_11, window_bounds = array<i64: 2, 8, 32>}]} {
    %c0 = arith.constant 0 : index
    %c0_0 = arith.constant 0 : index
    %c0_1 = arith.constant 0 : index
    %0 = vector.load %arg1[%c0, %c0_0, %c0_1] : memref<2x8x32xf32, #tpu.memory_space<vmem>>, vector<2x8x32xf32>
    %1 = vector.shape_cast %0 : vector<2x8x32xf32> to vector<16x32xf32>
    %2 = arith.truncf %1 : vector<16x32xf32> to vector<16x32xbf16>
    %c0_2 = arith.constant 0 : index
    %c0_3 = arith.constant 0 : index
    %3 = vector.load %arg2[%c0_2, %c0_3] : memref<32x96xbf16, #tpu.memory_space<vmem>>, vector<32x96xbf16>
    %cst = arith.constant dense<0.000000e+00> : vector<16x96xf32>
    %4 = tpu.matmul %2, %3, %cst {dimension_numbers = #tpu.dot_dimension_numbers<[1], [0], [0], [1], [0, 0, 1, 1], [], []>} : vector<16x32xbf16>, vector<32x96xbf16>, vector<16x96xf32> -> vector<16x96xf32>
    %c0_4 = arith.constant 0 : index
    %c0_5 = arith.constant 0 : index
    %5 = vector.load %arg3[%c0_4, %c0_5] : memref<1x96xf32, #tpu.memory_space<vmem>>, vector<1x96xf32>
    %6 = vector.broadcast %5 : vector<1x96xf32> to vector<16x96xf32>
    %7 = arith.addf %4, %6 : vector<16x96xf32>
    %8 = vector.extract_strided_slice %7 {offsets = [0, 0], sizes = [16, 32], strides = [1, 1]} : vector<16x96xf32> to vector<16x32xf32>
    %9 = vector.extract_strided_slice %7 {offsets = [0, 32], sizes = [16, 32], strides = [1, 1]} : vector<16x96xf32> to vector<16x32xf32>
    %10 = vector.extract_strided_slice %7 {offsets = [0, 64], sizes = [16, 32], strides = [1, 1]} : vector<16x96xf32> to vector<16x32xf32>
    %c0_6 = arith.constant 0 : index
    %c0_7 = arith.constant 0 : index
    %11 = vector.load %arg4[%c0_6, %c0_7] : memref<16x32xf32, #tpu.memory_space<vmem>>, vector<16x32xf32>
    %c0_8 = arith.constant 0 : index
    %c0_9 = arith.constant 0 : index
    %12 = vector.load %arg5[%c0_8, %c0_9] : memref<1x32xf32, #tpu.memory_space<vmem>>, vector<1x32xf32>
    %13 = tpu.iota {dimensions = array<i32: 1>} : vector<2x8x32xi32>
    %14 = vector.shape_cast %13 : vector<2x8x32xi32> to vector<16x32xi32>
    %15 = vector.extract_strided_slice %11 {offsets = [0, 0], sizes = [1, 32], strides = [1, 1]} : vector<16x32xf32> to vector<1x32xf32>
    %16 = arith.addf %12, %15 : vector<1x32xf32>
    %17 = vector.broadcast %16 : vector<1x32xf32> to vector<16x32xf32>
    %18 = arith.mulf %9, %17 : vector<16x32xf32>
    %c1_i32 = arith.constant 1 : i32
    %19 = tpu.dynamic_rotate %9 by %c1_i32 dim 0 : vector<16x32xf32>, i32 -> vector<16x32xf32>
    %c1_i32_10 = arith.constant 1 : i32
    %20 = vector.broadcast %c1_i32_10 : i32 to vector<16x32xi32>
    %21 = arith.cmpi sge, %14, %20 : vector<16x32xi32>
    %cst_11 = arith.constant 0.000000e+00 : f32
    %22 = vector.broadcast %cst_11 : f32 to vector<16x32xf32>
    %23 = arith.select %21, %19, %22 : vector<16x32xi1>, vector<16x32xf32>
    %24 = vector.extract_strided_slice %11 {offsets = [1, 0], sizes = [1, 32], strides = [1, 1]} : vector<16x32xf32> to vector<1x32xf32>
    %25 = vector.broadcast %24 : vector<1x32xf32> to vector<16x32xf32>
    %26 = arith.mulf %23, %25 : vector<16x32xf32>
    %27 = arith.addf %18, %26 : vector<16x32xf32>
    %c2_i32 = arith.constant 2 : i32
    %28 = tpu.dynamic_rotate %9 by %c2_i32 dim 0 : vector<16x32xf32>, i32 -> vector<16x32xf32>
    %c2_i32_12 = arith.constant 2 : i32
    %29 = vector.broadcast %c2_i32_12 : i32 to vector<16x32xi32>
    %30 = arith.cmpi sge, %14, %29 : vector<16x32xi32>
    %cst_13 = arith.constant 0.000000e+00 : f32
    %31 = vector.broadcast %cst_13 : f32 to vector<16x32xf32>
    %32 = arith.select %30, %28, %31 : vector<16x32xi1>, vector<16x32xf32>
    %33 = vector.extract_strided_slice %11 {offsets = [2, 0], sizes = [1, 32], strides = [1, 1]} : vector<16x32xf32> to vector<1x32xf32>
    %34 = vector.broadcast %33 : vector<1x32xf32> to vector<16x32xf32>
    %35 = arith.mulf %32, %34 : vector<16x32xf32>
    %36 = arith.addf %27, %35 : vector<16x32xf32>
    %c3_i32 = arith.constant 3 : i32
    %37 = tpu.dynamic_rotate %9 by %c3_i32 dim 0 : vector<16x32xf32>, i32 -> vector<16x32xf32>
    %c3_i32_14 = arith.constant 3 : i32
    %38 = vector.broadcast %c3_i32_14 : i32 to vector<16x32xi32>
    %39 = arith.cmpi sge, %14, %38 : vector<16x32xi32>
    %cst_15 = arith.constant 0.000000e+00 : f32
    %40 = vector.broadcast %cst_15 : f32 to vector<16x32xf32>
    %41 = arith.select %39, %37, %40 : vector<16x32xi1>, vector<16x32xf32>
    %42 = vector.extract_strided_slice %11 {offsets = [3, 0], sizes = [1, 32], strides = [1, 1]} : vector<16x32xf32> to vector<1x32xf32>
    %43 = vector.broadcast %42 : vector<1x32xf32> to vector<16x32xf32>
    %44 = arith.mulf %41, %43 : vector<16x32xf32>
    %45 = arith.addf %36, %44 : vector<16x32xf32>
    %c4_i32 = arith.constant 4 : i32
    %46 = tpu.dynamic_rotate %9 by %c4_i32 dim 0 : vector<16x32xf32>, i32 -> vector<16x32xf32>
    %c4_i32_16 = arith.constant 4 : i32
    %47 = vector.broadcast %c4_i32_16 : i32 to vector<16x32xi32>
    %48 = arith.cmpi sge, %14, %47 : vector<16x32xi32>
    %cst_17 = arith.constant 0.000000e+00 : f32
    %49 = vector.broadcast %cst_17 : f32 to vector<16x32xf32>
    %50 = arith.select %48, %46, %49 : vector<16x32xi1>, vector<16x32xf32>
    %51 = vector.extract_strided_slice %11 {offsets = [4, 0], sizes = [1, 32], strides = [1, 1]} : vector<16x32xf32> to vector<1x32xf32>
    %52 = vector.broadcast %51 : vector<1x32xf32> to vector<16x32xf32>
    %53 = arith.mulf %50, %52 : vector<16x32xf32>
    %54 = arith.addf %45, %53 : vector<16x32xf32>
    %c5_i32 = arith.constant 5 : i32
    %55 = tpu.dynamic_rotate %9 by %c5_i32 dim 0 : vector<16x32xf32>, i32 -> vector<16x32xf32>
    %c5_i32_18 = arith.constant 5 : i32
    %56 = vector.broadcast %c5_i32_18 : i32 to vector<16x32xi32>
    %57 = arith.cmpi sge, %14, %56 : vector<16x32xi32>
    %cst_19 = arith.constant 0.000000e+00 : f32
    %58 = vector.broadcast %cst_19 : f32 to vector<16x32xf32>
    %59 = arith.select %57, %55, %58 : vector<16x32xi1>, vector<16x32xf32>
    %60 = vector.extract_strided_slice %11 {offsets = [5, 0], sizes = [1, 32], strides = [1, 1]} : vector<16x32xf32> to vector<1x32xf32>
    %61 = vector.broadcast %60 : vector<1x32xf32> to vector<16x32xf32>
    %62 = arith.mulf %59, %61 : vector<16x32xf32>
    %63 = arith.addf %54, %62 : vector<16x32xf32>
    %c6_i32 = arith.constant 6 : i32
    %64 = tpu.dynamic_rotate %9 by %c6_i32 dim 0 : vector<16x32xf32>, i32 -> vector<16x32xf32>
    %c6_i32_20 = arith.constant 6 : i32
    %65 = vector.broadcast %c6_i32_20 : i32 to vector<16x32xi32>
    %66 = arith.cmpi sge, %14, %65 : vector<16x32xi32>
    %cst_21 = arith.constant 0.000000e+00 : f32
    %67 = vector.broadcast %cst_21 : f32 to vector<16x32xf32>
    %68 = arith.select %66, %64, %67 : vector<16x32xi1>, vector<16x32xf32>
    %69 = vector.extract_strided_slice %11 {offsets = [6, 0], sizes = [1, 32], strides = [1, 1]} : vector<16x32xf32> to vector<1x32xf32>
    %70 = vector.broadcast %69 : vector<1x32xf32> to vector<16x32xf32>
    %71 = arith.mulf %68, %70 : vector<16x32xf32>
    %72 = arith.addf %63, %71 : vector<16x32xf32>
    %c7_i32 = arith.constant 7 : i32
    %73 = tpu.dynamic_rotate %9 by %c7_i32 dim 0 : vector<16x32xf32>, i32 -> vector<16x32xf32>
    %c7_i32_22 = arith.constant 7 : i32
    %74 = vector.broadcast %c7_i32_22 : i32 to vector<16x32xi32>
    %75 = arith.cmpi sge, %14, %74 : vector<16x32xi32>
    %cst_23 = arith.constant 0.000000e+00 : f32
    %76 = vector.broadcast %cst_23 : f32 to vector<16x32xf32>
    %77 = arith.select %75, %73, %76 : vector<16x32xi1>, vector<16x32xf32>
    %78 = vector.extract_strided_slice %11 {offsets = [7, 0], sizes = [1, 32], strides = [1, 1]} : vector<16x32xf32> to vector<1x32xf32>
    %79 = vector.broadcast %78 : vector<1x32xf32> to vector<16x32xf32>
    %80 = arith.mulf %77, %79 : vector<16x32xf32>
    %81 = arith.addf %72, %80 : vector<16x32xf32>
    %c0_24 = arith.constant 0 : index
    %c0_25 = arith.constant 0 : index
    %82 = vector.load %arg7[%c0_24, %c0_25] : memref<1x2xf32, #tpu.memory_space<vmem>>, vector<1x2xf32>
    %83 = vector.extract_strided_slice %81 {offsets = [0, 0], sizes = [8, 16], strides = [1, 1]} : vector<16x32xf32> to vector<8x16xf32>
    %84 = vector.extract_strided_slice %10 {offsets = [0, 0], sizes = [8, 16], strides = [1, 1]} : vector<16x32xf32> to vector<8x16xf32>
    %85 = vector.shape_cast %84 : vector<8x16xf32> to vector<8x16x1xf32>
    %86 = vector.shape_cast %83 : vector<8x16xf32> to vector<8x1x16xf32>
    %87 = vector.broadcast %85 : vector<8x16x1xf32> to vector<8x16x16xf32>
    %88 = vector.broadcast %86 : vector<8x1x16xf32> to vector<8x16x16xf32>
    %89 = arith.mulf %87, %88 : vector<8x16x16xf32>
    %90 = vector.shape_cast %89 : vector<8x16x16xf32> to vector<8x256xf32>
    %91 = vector.extract_strided_slice %81 {offsets = [8, 0], sizes = [8, 16], strides = [1, 1]} : vector<16x32xf32> to vector<8x16xf32>
    %92 = vector.extract_strided_slice %10 {offsets = [8, 0], sizes = [8, 16], strides = [1, 1]} : vector<16x32xf32> to vector<8x16xf32>
    %93 = vector.shape_cast %92 : vector<8x16xf32> to vector<8x16x1xf32>
    %94 = vector.shape_cast %91 : vector<8x16xf32> to vector<8x1x16xf32>
    %95 = vector.broadcast %93 : vector<8x16x1xf32> to vector<8x16x16xf32>
    %96 = vector.broadcast %94 : vector<8x1x16xf32> to vector<8x16x16xf32>
    %97 = arith.mulf %95, %96 : vector<8x16x16xf32>
    %98 = vector.shape_cast %97 : vector<8x16x16xf32> to vector<8x256xf32>
    %99 = tpu.concatenate %90, %98 in 1 : vector<8x256xf32>, vector<8x256xf32> -> vector<8x512xf32>
    %c0_26 = arith.constant 0 : index
    %c0_27 = arith.constant 0 : index
    %c0_28 = arith.constant 0 : index
    %100 = vector.load %arg6[%c0_26, %c0_27, %c0_28] : memref<2x8x8xbf16, #tpu.memory_space<vmem>>, vector<1x8x8xbf16>
    %101 = vector.shape_cast %100 : vector<1x8x8xbf16> to vector<8x8xbf16>
    %102 = arith.truncf %99 : vector<8x512xf32> to vector<8x512xbf16>
    %cst_29 = arith.constant dense<0.000000e+00> : vector<8x512xf32>
    %103 = tpu.matmul %101, %102, %cst_29 {dimension_numbers = #tpu.dot_dimension_numbers<[1], [0], [0], [1], [0, 0, 1, 1], [], []>} : vector<8x8xbf16>, vector<8x512xbf16>, vector<8x512xf32> -> vector<8x512xf32>
    %104 = vector.extract_strided_slice %82 {offsets = [0, 0], sizes = [1, 1], strides = [1, 1]} : vector<1x2xf32> to vector<1x1xf32>
    %105 = vector.broadcast %104 : vector<1x1xf32> to vector<8x512xf32>
    %106 = arith.mulf %105, %99 : vector<8x512xf32>
    %107 = arith.addf %103, %106 : vector<8x512xf32>
    %108 = vector.extract_strided_slice %8 {offsets = [0, 0], sizes = [8, 16], strides = [1, 1]} : vector<16x32xf32> to vector<8x16xf32>
    %109 = vector.extract_strided_slice %107 {offsets = [0, 0], sizes = [8, 256], strides = [1, 1]} : vector<8x512xf32> to vector<8x256xf32>
    %110 = vector.shape_cast %109 : vector<8x256xf32> to vector<8x16x16xf32>
    %111 = vector.shape_cast %108 : vector<8x16xf32> to vector<8x1x16xf32>
    %112 = vector.broadcast %111 : vector<8x1x16xf32> to vector<8x16x16xf32>
    %113 = arith.mulf %110, %112 : vector<8x16x16xf32>
    %cst_30 = arith.constant dense<0.000000e+00> : vector<8x16xf32>
    %114 = vector.multi_reduction <add>, %113, %cst_30 [2] : vector<8x16x16xf32> to vector<8x16xf32>
    %c0_31 = arith.constant 0 : index
    %c0_32 = arith.constant 0 : index
    %115 = vector.load %arg13[%c0_31, %c0_32] : memref<16x32xf32, #tpu.memory_space<vmem>>, vector<8x16xf32>
    tpu.vector_store %arg13[%c0_31, %c0_32], %114 {strides = array<i32>} : memref<16x32xf32, #tpu.memory_space<vmem>>, vector<8x16xf32>,
    %116 = vector.extract_strided_slice %8 {offsets = [8, 0], sizes = [8, 16], strides = [1, 1]} : vector<16x32xf32> to vector<8x16xf32>
    %117 = vector.extract_strided_slice %107 {offsets = [0, 256], sizes = [8, 256], strides = [1, 1]} : vector<8x512xf32> to vector<8x256xf32>
    %118 = vector.shape_cast %117 : vector<8x256xf32> to vector<8x16x16xf32>
    %119 = vector.shape_cast %116 : vector<8x16xf32> to vector<8x1x16xf32>
    %120 = vector.broadcast %119 : vector<8x1x16xf32> to vector<8x16x16xf32>
    %121 = arith.mulf %118, %120 : vector<8x16x16xf32>
    %cst_33 = arith.constant dense<0.000000e+00> : vector<8x16xf32>
    %122 = vector.multi_reduction <add>, %121, %cst_33 [2] : vector<8x16x16xf32> to vector<8x16xf32>
    %c8 = arith.constant 8 : index
    %c0_34 = arith.constant 0 : index
    %123 = vector.load %arg13[%c8, %c0_34] : memref<16x32xf32, #tpu.memory_space<vmem>>, vector<8x16xf32>
    tpu.vector_store %arg13[%c8, %c0_34], %122 {strides = array<i32>} : memref<16x32xf32, #tpu.memory_space<vmem>>, vector<8x16xf32>,
    %124 = vector.extract_strided_slice %81 {offsets = [0, 16], sizes = [8, 16], strides = [1, 1]} : vector<16x32xf32> to vector<8x16xf32>
    %125 = vector.extract_strided_slice %10 {offsets = [0, 16], sizes = [8, 16], strides = [1, 1]} : vector<16x32xf32> to vector<8x16xf32>
    %126 = vector.shape_cast %125 : vector<8x16xf32> to vector<8x16x1xf32>
    %127 = vector.shape_cast %124 : vector<8x16xf32> to vector<8x1x16xf32>
    %128 = vector.broadcast %126 : vector<8x16x1xf32> to vector<8x16x16xf32>
    %129 = vector.broadcast %127 : vector<8x1x16xf32> to vector<8x16x16xf32>
    %130 = arith.mulf %128, %129 : vector<8x16x16xf32>
    %131 = vector.shape_cast %130 : vector<8x16x16xf32> to vector<8x256xf32>
    %132 = vector.extract_strided_slice %81 {offsets = [8, 16], sizes = [8, 16], strides = [1, 1]} : vector<16x32xf32> to vector<8x16xf32>
    %133 = vector.extract_strided_slice %10 {offsets = [8, 16], sizes = [8, 16], strides = [1, 1]} : vector<16x32xf32> to vector<8x16xf32>
    %134 = vector.shape_cast %133 : vector<8x16xf32> to vector<8x16x1xf32>
    %135 = vector.shape_cast %132 : vector<8x16xf32> to vector<8x1x16xf32>
    %136 = vector.broadcast %134 : vector<8x16x1xf32> to vector<8x16x16xf32>
    %137 = vector.broadcast %135 : vector<8x1x16xf32> to vector<8x16x16xf32>
    %138 = arith.mulf %136, %137 : vector<8x16x16xf32>
    %139 = vector.shape_cast %138 : vector<8x16x16xf32> to vector<8x256xf32>
    %140 = tpu.concatenate %131, %139 in 1 : vector<8x256xf32>, vector<8x256xf32> -> vector<8x512xf32>
    %c1 = arith.constant 1 : index
    %c0_35 = arith.constant 0 : index
    %c0_36 = arith.constant 0 : index
    %141 = vector.load %arg6[%c1, %c0_35, %c0_36] : memref<2x8x8xbf16, #tpu.memory_space<vmem>>, vector<1x8x8xbf16>
    %142 = vector.shape_cast %141 : vector<1x8x8xbf16> to vector<8x8xbf16>
    %143 = arith.truncf %140 : vector<8x512xf32> to vector<8x512xbf16>
    %cst_37 = arith.constant dense<0.000000e+00> : vector<8x512xf32>
    %144 = tpu.matmul %142, %143, %cst_37 {dimension_numbers = #tpu.dot_dimension_numbers<[1], [0], [0], [1], [0, 0, 1, 1], [], []>} : vector<8x8xbf16>, vector<8x512xbf16>, vector<8x512xf32> -> vector<8x512xf32>
    %145 = vector.extract_strided_slice %82 {offsets = [0, 1], sizes = [1, 1], strides = [1, 1]} : vector<1x2xf32> to vector<1x1xf32>
    %146 = vector.broadcast %145 : vector<1x1xf32> to vector<8x512xf32>
    %147 = arith.mulf %146, %140 : vector<8x512xf32>
    %148 = arith.addf %144, %147 : vector<8x512xf32>
    %149 = vector.extract_strided_slice %8 {offsets = [0, 16], sizes = [8, 16], strides = [1, 1]} : vector<16x32xf32> to vector<8x16xf32>
    %150 = vector.extract_strided_slice %148 {offsets = [0, 0], sizes = [8, 256], strides = [1, 1]} : vector<8x512xf32> to vector<8x256xf32>
    %151 = vector.shape_cast %150 : vector<8x256xf32> to vector<8x16x16xf32>
    %152 = vector.shape_cast %149 : vector<8x16xf32> to vector<8x1x16xf32>
    %153 = vector.broadcast %152 : vector<8x1x16xf32> to vector<8x16x16xf32>
    %154 = arith.mulf %151, %153 : vector<8x16x16xf32>
    %cst_38 = arith.constant dense<0.000000e+00> : vector<8x16xf32>
    %155 = vector.multi_reduction <add>, %154, %cst_38 [2] : vector<8x16x16xf32> to vector<8x16xf32>
    %c0_39 = arith.constant 0 : index
    %c16 = arith.constant 16 : index
    %156 = vector.load %arg13[%c0_39, %c16] : memref<16x32xf32, #tpu.memory_space<vmem>>, vector<8x16xf32>
    tpu.vector_store %arg13[%c0_39, %c16], %155 {strides = array<i32>} : memref<16x32xf32, #tpu.memory_space<vmem>>, vector<8x16xf32>,
    %157 = vector.extract_strided_slice %8 {offsets = [8, 16], sizes = [8, 16], strides = [1, 1]} : vector<16x32xf32> to vector<8x16xf32>
    %158 = vector.extract_strided_slice %148 {offsets = [0, 256], sizes = [8, 256], strides = [1, 1]} : vector<8x512xf32> to vector<8x256xf32>
    %159 = vector.shape_cast %158 : vector<8x256xf32> to vector<8x16x16xf32>
    %160 = vector.shape_cast %157 : vector<8x16xf32> to vector<8x1x16xf32>
    %161 = vector.broadcast %160 : vector<8x1x16xf32> to vector<8x16x16xf32>
    %162 = arith.mulf %159, %161 : vector<8x16x16xf32>
    %cst_40 = arith.constant dense<0.000000e+00> : vector<8x16xf32>
    %163 = vector.multi_reduction <add>, %162, %cst_40 [2] : vector<8x16x16xf32> to vector<8x16xf32>
    %c8_41 = arith.constant 8 : index
    %c16_42 = arith.constant 16 : index
    %164 = vector.load %arg13[%c8_41, %c16_42] : memref<16x32xf32, #tpu.memory_space<vmem>>, vector<8x16xf32>
    tpu.vector_store %arg13[%c8_41, %c16_42], %163 {strides = array<i32>} : memref<16x32xf32, #tpu.memory_space<vmem>>, vector<8x16xf32>,
    %c0_43 = arith.constant 0 : index
    %c0_44 = arith.constant 0 : index
    %165 = vector.load %arg13[%c0_43, %c0_44] : memref<16x32xf32, #tpu.memory_space<vmem>>, vector<16x32xf32>
    %166 = arith.truncf %165 : vector<16x32xf32> to vector<16x32xbf16>
    %c0_45 = arith.constant 0 : index
    %c0_46 = arith.constant 0 : index
    %167 = vector.load %arg8[%c0_45, %c0_46] : memref<32x32xbf16, #tpu.memory_space<vmem>>, vector<32x32xbf16>
    %cst_47 = arith.constant dense<0.000000e+00> : vector<16x32xf32>
    %168 = tpu.matmul %166, %167, %cst_47 {dimension_numbers = #tpu.dot_dimension_numbers<[1], [0], [0], [1], [0, 0, 1, 1], [], []>} : vector<16x32xbf16>, vector<32x32xbf16>, vector<16x32xf32> -> vector<16x32xf32>
    %c0_48 = arith.constant 0 : index
    %c0_49 = arith.constant 0 : index
    %169 = vector.load %arg9[%c0_48, %c0_49] : memref<1x32xf32, #tpu.memory_space<vmem>>, vector<1x32xf32>
    %170 = vector.broadcast %169 : vector<1x32xf32> to vector<16x32xf32>
    %171 = arith.addf %168, %170 : vector<16x32xf32>
    %cst_50 = arith.constant 0.000000e+00 : f32
    %172 = vector.broadcast %cst_50 : f32 to vector<16x32xf32>
    %173 = arith.maximumf %171, %172 : vector<16x32xf32>
    %174 = arith.truncf %173 : vector<16x32xf32> to vector<16x32xbf16>
    %c0_51 = arith.constant 0 : index
    %c0_52 = arith.constant 0 : index
    %175 = vector.load %arg10[%c0_51, %c0_52] : memref<32x32xbf16, #tpu.memory_space<vmem>>, vector<32x32xbf16>
    %cst_53 = arith.constant dense<0.000000e+00> : vector<16x32xf32>
    %176 = tpu.matmul %174, %175, %cst_53 {dimension_numbers = #tpu.dot_dimension_numbers<[1], [0], [0], [1], [0, 0, 1, 1], [], []>} : vector<16x32xbf16>, vector<32x32xbf16>, vector<16x32xf32> -> vector<16x32xf32>
    %c0_54 = arith.constant 0 : index
    %c0_55 = arith.constant 0 : index
    %177 = vector.load %arg11[%c0_54, %c0_55] : memref<1x32xf32, #tpu.memory_space<vmem>>, vector<1x32xf32>
    %178 = vector.broadcast %177 : vector<1x32xf32> to vector<16x32xf32>
    %179 = arith.addf %176, %178 : vector<16x32xf32>
    %180 = vector.shape_cast %179 : vector<16x32xf32> to vector<2x8x32xf32>
    %c0_56 = arith.constant 0 : index
    %c0_57 = arith.constant 0 : index
    %c0_58 = arith.constant 0 : index
    %181 = vector.load %arg12[%c0_56, %c0_57, %c0_58] : memref<2x8x32xf32, #tpu.memory_space<vmem>>, vector<2x8x32xf32>
    tpu.vector_store %arg12[%c0_56, %c0_57, %c0_58], %180 {strides = array<i32>} : memref<2x8x32xf32, #tpu.memory_space<vmem>>, vector<2x8x32xf32>,
    return
  }
  func.func @transform_0(%arg0: i32) -> (i32, i32, i32) {
    %c0_i32 = arith.constant 0 : i32
    %c0_i32_0 = arith.constant 0 : i32
    %c0_i32_1 = arith.constant 0 : i32
    return %arg0, %c0_i32, %c0_i32_0 : i32, i32, i32
  }
  func.func @transform_1(%arg0: i32) -> (i32, i32) {
    %c0_i32 = arith.constant 0 : i32
    %c0_i32_0 = arith.constant 0 : i32
    %c0_i32_1 = arith.constant 0 : i32
    return %c0_i32, %c0_i32_0 : i32, i32
  }
  func.func @transform_2(%arg0: i32) -> (i32, i32) {
    %c0_i32 = arith.constant 0 : i32
    %c0_i32_0 = arith.constant 0 : i32
    %c0_i32_1 = arith.constant 0 : i32
    return %c0_i32, %c0_i32_0 : i32, i32
  }
  func.func @transform_3(%arg0: i32) -> (i32, i32) {
    %c0_i32 = arith.constant 0 : i32
    %c0_i32_0 = arith.constant 0 : i32
    %c0_i32_1 = arith.constant 0 : i32
    return %c0_i32, %c0_i32_0 : i32, i32
  }
  func.func @transform_4(%arg0: i32) -> (i32, i32) {
    %c0_i32 = arith.constant 0 : i32
    %c0_i32_0 = arith.constant 0 : i32
    %c0_i32_1 = arith.constant 0 : i32
    return %c0_i32, %c0_i32_0 : i32, i32
  }
  func.func @transform_5(%arg0: i32) -> (i32, i32, i32) {
    %c0_i32 = arith.constant 0 : i32
    %c0_i32_0 = arith.constant 0 : i32
    %c0_i32_1 = arith.constant 0 : i32
    %c0_i32_2 = arith.constant 0 : i32
    return %c0_i32, %c0_i32_0, %c0_i32_1 : i32, i32, i32
  }
  func.func @transform_6(%arg0: i32) -> (i32, i32) {
    %c0_i32 = arith.constant 0 : i32
    %c0_i32_0 = arith.constant 0 : i32
    %c0_i32_1 = arith.constant 0 : i32
    return %c0_i32, %c0_i32_0 : i32, i32
  }
  func.func @transform_7(%arg0: i32) -> (i32, i32) {
    %c0_i32 = arith.constant 0 : i32
    %c0_i32_0 = arith.constant 0 : i32
    %c0_i32_1 = arith.constant 0 : i32
    return %c0_i32, %c0_i32_0 : i32, i32
  }
  func.func @transform_8(%arg0: i32) -> (i32, i32) {
    %c0_i32 = arith.constant 0 : i32
    %c0_i32_0 = arith.constant 0 : i32
    %c0_i32_1 = arith.constant 0 : i32
    return %c0_i32, %c0_i32_0 : i32, i32
  }
  func.func @transform_9(%arg0: i32) -> (i32, i32) {
    %c0_i32 = arith.constant 0 : i32
    %c0_i32_0 = arith.constant 0 : i32
    %c0_i32_1 = arith.constant 0 : i32
    return %c0_i32, %c0_i32_0 : i32, i32
  }
  func.func @transform_10(%arg0: i32) -> (i32, i32) {
    %c0_i32 = arith.constant 0 : i32
    %c0_i32_0 = arith.constant 0 : i32
    %c0_i32_1 = arith.constant 0 : i32
    return %c0_i32, %c0_i32_0 : i32, i32
  }
  func.func @transform_11(%arg0: i32) -> (i32, i32, i32) {
    %c0_i32 = arith.constant 0 : i32
    %c0_i32_0 = arith.constant 0 : i32
    %c0_i32_1 = arith.constant 0 : i32
    return %arg0, %c0_i32, %c0_i32_0 : i32, i32, i32
  }
}

</mosaic_0001>

<llo_original>
// kernel: tpu_custom_call.1
$region0: #{tpu_custom_call.1}
  #allocation0 [shape = 'u32[]', space=smem, size = 0x4, offset = 0x4, fixed_abs, tag = 'smem constant byte address 0x4 - core index']
  #allocation1 [shape = 'u32[144,128]{1,0:T(1,128)}', space=vmem, size = 0x12000, scoped, tag = 'internal scratch']
  #allocation2 [shape = 'f32[16,32]{1,0:T(8,128)}', space=vmem, size = 0x2000, scoped, tag = 'scratch operand']
  %s0 = inlined_call_operand.hbm [shape: f32[4,8,32], index: 0, kind: input, shape index: {}]
  %s1 = inlined_call_operand.hbm [shape: bf16[32,96], index: 1, kind: input, shape index: {}]
  %s2 = inlined_call_operand.vmem [shape: f32[1,96], index: 2, kind: input, shape index: {}]
  %s3 = inlined_call_operand.hbm [shape: f32[16,32], index: 3, kind: input, shape index: {}]
  %s4 = inlined_call_operand.vmem [shape: f32[1,32], index: 4, kind: input, shape index: {}]
  %s5 = inlined_call_operand.hbm [shape: bf16[2,8,8], index: 5, kind: input, shape index: {}]
  %s6 = inlined_call_operand.hbm [shape: f32[1,2], index: 6, kind: input, shape index: {}]
  %s7 = inlined_call_operand.vmem [shape: bf16[32,32], index: 7, kind: input, shape index: {}]
  %s8 = inlined_call_operand.hbm [shape: f32[1,32], index: 8, kind: input, shape index: {}]
  %s9 = inlined_call_operand.vmem [shape: bf16[32,32], index: 9, kind: input, shape index: {}]
  %s10 = inlined_call_operand.vmem [shape: f32[1,32], index: 10, kind: input, shape index: {}]
  %s11 = inlined_call_operand.hbm [shape: f32[4,8,32], index: 11, kind: output, shape index: {}]
  %s12 = sld [smem:[#allocation0]]
  $region101: #{tpu_custom_call.1} parent=0
    _
  %s14 = ssub.s32 1, %s12
  %s15 = scalar_select 0, %s14, %s12
  $region1: #{tpu_custom_call.1} parent=0
    #allocation3 [shape = 'u8[16384]{0}', space=vmem, size = 0x4000, scoped, tag = 'input window, operand 0']
    #allocation4 [shape = 's32[2]{0}', space=sflag, size = 0x8, scoped, tag = 'scoped memory for tpu_custom_call.1']
    #allocation5 [shape = 's32[2]{0}', space=sflag, size = 0x8, scoped, tag = 'scoped memory for tpu_custom_call.1']
    #allocation6 [shape = 'u8[8192]{0}', space=vmem, size = 0x2000, scoped, tag = 'input window, operand 1, single buffered']
    #allocation7 [shape = 's32[1]{0}', space=sflag, size = 0x4, scoped, tag = 'scoped memory for tpu_custom_call.1']
    #allocation8 [shape = 'u8[8192]{0}', space=vmem, size = 0x2000, scoped, tag = 'input window, operand 3, single buffered']
    #allocation9 [shape = 'u8[4096]{0}', space=vmem, size = 0x1000, scoped, tag = 'input window, operand 5, single buffered']
    #allocation10 [shape = 's32[1]{0}', space=sflag, size = 0x4, scoped, tag = 'scoped memory for tpu_custom_call.1']
    #allocation11 [shape = 'u8[512]{0}', space=vmem, size = 0x400, scoped, tag = 'input window, operand 6, single buffered']
    #allocation12 [shape = 'u8[512]{0}', space=vmem, size = 0x400, scoped, tag = 'input window, operand 8, single buffered']
    #allocation13 [shape = 's32[1]{0}', space=sflag, size = 0x4, scoped, tag = 'scoped memory for tpu_custom_call.1']
    #allocation14 [shape = 'u8[16384]{0}', space=vmem, size = 0x4000, scoped, tag = 'output window, operand 0']
    %16 = vsyncpa [#allocation4], 0
    %s17 = scalar_lea.sflag [#allocation4], 1
    %18 = vsyncpa %s17, 0
    %19 = vsyncpa [#allocation7], 0
    %20 = vsyncpa [#allocation10], 0
    %21 = vsyncpa [#allocation13], 0
    %22 = vsyncpa [#allocation5], 0
    %s23 = scalar_lea.sflag [#allocation5], 1
    %24 = vsyncpa %s23, 0
    loop: start=0, step=1, limit=4
    $region2: #{tpu_custom_call.1} parent=1 // loop_pre_header
      _
    $region3: #{tpu_custom_call.1} parent=1 // loop_header
      %s26 = sphi 0, %s30
      %p27 = scmp.ge.s32.totalorder %s26, 4
      %s36 = sphi 0, %s38
      %s39 = sphi 0, %s36
      %s40 = sphi 0, %s39
      %s56 = sphi 0, %s40
      %s60 = sphi 0, %s60
      %s62 = sphi 0, %s60
      %s63 = sphi 0, %s62
      %s77 = sphi 0, %s63
      %s81 = sphi 0, %s81
      %s83 = sphi 0, %s81
      %s84 = sphi 0, %s83
      %s98 = sphi 0, %s84
      %s102 = sphi 0, %s102
      %s104 = sphi 0, %s102
      %s105 = sphi 0, %s104
      %s119 = sphi 0, %s105
      %s123 = sphi 0, %s123
      %s125 = sphi 0, %s123
      %s126 = sphi 0, %s125
      %s140 = sphi 0, %s126
      %s144 = sphi 0, %s144
      %s146 = sphi 0, %s144
      %s147 = sphi 0, %s146
      %s161 = sphi 0, %s147
      %s165 = sphi 0, %s165
      %s167 = sphi 0, %s165
      %s168 = sphi 0, %s167
      %s182 = sphi 0, %s168
      %s186 = sphi 0, %s186
      %s188 = sphi 0, %s186
      %s189 = sphi 0, %s188
      %s203 = sphi 0, %s189
      %s207 = sphi 0, %s207
      %s209 = sphi 0, %s207
      %s210 = sphi 0, %s209
      %s224 = sphi 0, %s210
      %s228 = sphi 0, %s228
      %s230 = sphi 0, %s228
      %s231 = sphi 0, %s230
      %s245 = sphi 0, %s231
      %s249 = sphi 0, %s249
      %s251 = sphi 0, %s249
      %s252 = sphi 0, %s251
      %s266 = sphi 0, %s252
      %s272 = sphi 0, %s274
      %s275 = sphi 0, %s272
      %s276 = sphi 0, %s275
      %s292 = sphi 0, %s276
    $region4: #{tpu_custom_call.1} parent=1 // loop_header_branch
      %29 = sbr.rel (%p27) target = $region8
    $region5: #{tpu_custom_call.1} parent=1 // loop_body
      %s31 = ssub.s32 %s26, 1
      %s32 = ssub.s32 %s26, 2
      %s33 = sadd.s32 %s26, 1
      %s34 = ssub.s32 %s26, %s33
      %p35 = scmp.eq.s32.totalorder %s34, 0
      %s37 = sadd.s32 %s36, 1
      %s38 = scalar_select %p35, %s36, %s37
      %p41 = pneg %p35
      %p42 = scmp.eq.s32.totalorder %s26, 1
      %p43 = por %p41, %p42
      %p44 = scmp.ne.s32.totalorder %s36, %s39
      %p45 = scmp.eq.s32.totalorder %s26, 0
      %p46 = por %p44, %p45
      %p47 = scmp.ne.s32.totalorder %s36, %s39
      %p48 = scmp.eq.s32.totalorder %s31, 1
      %p49 = por %p47, %p48
      %p50 = scmp.ne.s32.totalorder %s39, %s40
      %p51 = scmp.eq.s32.totalorder %s31, 0
      %p52 = por %p50, %p51
      %p53 = scmp.ne.s32.totalorder %s39, %s40
      %p54 = scmp.eq.s32.totalorder %s32, 1
      %p55 = por %p53, %p54
      %p57 = scmp.ne.s32.totalorder %s40, %s56
      %p58 = scmp.eq.s32.totalorder %s32, 0
      %p59 = por %p57, %p58
      %s61 = sadd.s32 %s60, 1
      %p64 = scmp.eq.s32.totalorder %s26, 1
      %p65 = scmp.ne.s32.totalorder %s60, %s62
      %p66 = scmp.eq.s32.totalorder %s26, 0
      %p67 = por %p65, %p66
      %p68 = scmp.ne.s32.totalorder %s60, %s62
      %p69 = scmp.eq.s32.totalorder %s31, 1
      %p70 = por %p68, %p69
      %p71 = scmp.ne.s32.totalorder %s62, %s63
      %p72 = scmp.eq.s32.totalorder %s31, 0
      %p73 = por %p71, %p72
      %p74 = scmp.ne.s32.totalorder %s62, %s63
      %p75 = scmp.eq.s32.totalorder %s32, 1
      %p76 = por %p74, %p75
      %p78 = scmp.ne.s32.totalorder %s63, %s77
      %p79 = scmp.eq.s32.totalorder %s32, 0
      %p80 = por %p78, %p79
      %s82 = sadd.s32 %s81, 1
      %p85 = scmp.eq.s32.totalorder %s26, 1
      %p86 = scmp.ne.s32.totalorder %s81, %s83
      %p87 = scmp.eq.s32.totalorder %s26, 0
      %p88 = por %p86, %p87
      %p89 = scmp.ne.s32.totalorder %s81, %s83
      %p90 = scmp.eq.s32.totalorder %s31, 1
      %p91 = por %p89, %p90
      %p92 = scmp.ne.s32.totalorder %s83, %s84
      %p93 = scmp.eq.s32.totalorder %s31, 0
      %p94 = por %p92, %p93
      %p95 = scmp.ne.s32.totalorder %s83, %s84
      %p96 = scmp.eq.s32.totalorder %s32, 1
      %p97 = por %p95, %p96
      %p99 = scmp.ne.s32.totalorder %s84, %s98
      %p100 = scmp.eq.s32.totalorder %s32, 0
      %p101 = por %p99, %p100
      %s103 = sadd.s32 %s102, 1
      %p106 = scmp.eq.s32.totalorder %s26, 1
      %p107 = scmp.ne.s32.totalorder %s102, %s104
      %p108 = scmp.eq.s32.totalorder %s26, 0
      %p109 = por %p107, %p108
      %p110 = scmp.ne.s32.totalorder %s102, %s104
      %p111 = scmp.eq.s32.totalorder %s31, 1
      %p112 = por %p110, %p111
      %p113 = scmp.ne.s32.totalorder %s104, %s105
      %p114 = scmp.eq.s32.totalorder %s31, 0
      %p115 = por %p113, %p114
      %p116 = scmp.ne.s32.totalorder %s104, %s105
      %p117 = scmp.eq.s32.totalorder %s32, 1
      %p118 = por %p116, %p117
      %p120 = scmp.ne.s32.totalorder %s105, %s119
      %p121 = scmp.eq.s32.totalorder %s32, 0
      %p122 = por %p120, %p121
      %s124 = sadd.s32 %s123, 1
      %p127 = scmp.eq.s32.totalorder %s26, 1
      %p128 = scmp.ne.s32.totalorder %s123, %s125
      %p129 = scmp.eq.s32.totalorder %s26, 0
      %p130 = por %p128, %p129
      %p131 = scmp.ne.s32.totalorder %s123, %s125
      %p132 = scmp.eq.s32.totalorder %s31, 1
      %p133 = por %p131, %p132
      %p134 = scmp.ne.s32.totalorder %s125, %s126
      %p135 = scmp.eq.s32.totalorder %s31, 0
      %p136 = por %p134, %p135
      %p137 = scmp.ne.s32.totalorder %s125, %s126
      %p138 = scmp.eq.s32.totalorder %s32, 1
      %p139 = por %p137, %p138
      %p141 = scmp.ne.s32.totalorder %s126, %s140
      %p142 = scmp.eq.s32.totalorder %s32, 0
      %p143 = por %p141, %p142
      %s145 = sadd.s32 %s144, 1
      %p148 = scmp.eq.s32.totalorder %s26, 1
      %p149 = scmp.ne.s32.totalorder %s144, %s146
      %p150 = scmp.eq.s32.totalorder %s26, 0
      %p151 = por %p149, %p150
      %p152 = scmp.ne.s32.totalorder %s144, %s146
      %p153 = scmp.eq.s32.totalorder %s31, 1
      %p154 = por %p152, %p153
      %p155 = scmp.ne.s32.totalorder %s146, %s147
      %p156 = scmp.eq.s32.totalorder %s31, 0
      %p157 = por %p155, %p156
      %p158 = scmp.ne.s32.totalorder %s146, %s147
      %p159 = scmp.eq.s32.totalorder %s32, 1
      %p160 = por %p158, %p159
      %p162 = scmp.ne.s32.totalorder %s147, %s161
      %p163 = scmp.eq.s32.totalorder %s32, 0
      %p164 = por %p162, %p163
      %s166 = sadd.s32 %s165, 1
      %p169 = scmp.eq.s32.totalorder %s26, 1
      %p170 = scmp.ne.s32.totalorder %s165, %s167
      %p171 = scmp.eq.s32.totalorder %s26, 0
      %p172 = por %p170, %p171
      %p173 = scmp.ne.s32.totalorder %s165, %s167
      %p174 = scmp.eq.s32.totalorder %s31, 1
      %p175 = por %p173, %p174
      %p176 = scmp.ne.s32.totalorder %s167, %s168
      %p177 = scmp.eq.s32.totalorder %s31, 0
      %p178 = por %p176, %p177
      %p179 = scmp.ne.s32.totalorder %s167, %s168
      %p180 = scmp.eq.s32.totalorder %s32, 1
      %p181 = por %p179, %p180
      %p183 = scmp.ne.s32.totalorder %s168, %s182
      %p184 = scmp.eq.s32.totalorder %s32, 0
      %p185 = por %p183, %p184
      %s187 = sadd.s32 %s186, 1
      %p190 = scmp.eq.s32.totalorder %s26, 1
      %p191 = scmp.ne.s32.totalorder %s186, %s188
      %p192 = scmp.eq.s32.totalorder %s26, 0
      %p193 = por %p191, %p192
      %p194 = scmp.ne.s32.totalorder %s186, %s188
      %p195 = scmp.eq.s32.totalorder %s31, 1
      %p196 = por %p194, %p195
      %p197 = scmp.ne.s32.totalorder %s188, %s189
      %p198 = scmp.eq.s32.totalorder %s31, 0
      %p199 = por %p197, %p198
      %p200 = scmp.ne.s32.totalorder %s188, %s189
      %p201 = scmp.eq.s32.totalorder %s32, 1
      %p202 = por %p200, %p201
      %p204 = scmp.ne.s32.totalorder %s189, %s203
      %p205 = scmp.eq.s32.totalorder %s32, 0
      %p206 = por %p204, %p205
      %s208 = sadd.s32 %s207, 1
      %p211 = scmp.eq.s32.totalorder %s26, 1
      %p212 = scmp.ne.s32.totalorder %s207, %s209
      %p213 = scmp.eq.s32.totalorder %s26, 0
      %p214 = por %p212, %p213
      %p215 = scmp.ne.s32.totalorder %s207, %s209
      %p216 = scmp.eq.s32.totalorder %s31, 1
      %p217 = por %p215, %p216
      %p218 = scmp.ne.s32.totalorder %s209, %s210
      %p219 = scmp.eq.s32.totalorder %s31, 0
      %p220 = por %p218, %p219
      %p221 = scmp.ne.s32.totalorder %s209, %s210
      %p222 = scmp.eq.s32.totalorder %s32, 1
      %p223 = por %p221, %p222
      %p225 = scmp.ne.s32.totalorder %s210, %s224
      %p226 = scmp.eq.s32.totalorder %s32, 0
      %p227 = por %p225, %p226
      %s229 = sadd.s32 %s228, 1
      %p232 = scmp.eq.s32.totalorder %s26, 1
      %p233 = scmp.ne.s32.totalorder %s228, %s230
      %p234 = scmp.eq.s32.totalorder %s26, 0
      %p235 = por %p233, %p234
      %p236 = scmp.ne.s32.totalorder %s228, %s230
      %p237 = scmp.eq.s32.totalorder %s31, 1
      %p238 = por %p236, %p237
      %p239 = scmp.ne.s32.totalorder %s230, %s231
      %p240 = scmp.eq.s32.totalorder %s31, 0
      %p241 = por %p239, %p240
      %p242 = scmp.ne.s32.totalorder %s230, %s231
      %p243 = scmp.eq.s32.totalorder %s32, 1
      %p244 = por %p242, %p243
      %p246 = scmp.ne.s32.totalorder %s231, %s245
      %p247 = scmp.eq.s32.totalorder %s32, 0
      %p248 = por %p246, %p247
      %s250 = sadd.s32 %s249, 1
      %p253 = scmp.eq.s32.totalorder %s26, 1
      %p254 = scmp.ne.s32.totalorder %s249, %s251
      %p255 = scmp.eq.s32.totalorder %s26, 0
      %p256 = por %p254, %p255
      %p257 = scmp.ne.s32.totalorder %s249, %s251
      %p258 = scmp.eq.s32.totalorder %s31, 1
      %p259 = por %p257, %p258
      %p260 = scmp.ne.s32.totalorder %s251, %s252
      %p261 = scmp.eq.s32.totalorder %s31, 0
      %p262 = por %p260, %p261
      %p263 = scmp.ne.s32.totalorder %s251, %s252
      %p264 = scmp.eq.s32.totalorder %s32, 1
      %p265 = por %p263, %p264
      %p267 = scmp.ne.s32.totalorder %s252, %s266
      %p268 = scmp.eq.s32.totalorder %s32, 0
      %p269 = por %p267, %p268
      %s270 = ssub.s32 %s26, %s33
      %p271 = scmp.eq.s32.totalorder %s270, 0
      %s273 = sadd.s32 %s272, 1
      %s274 = scalar_select %p271, %s272, %s273
      %p277 = pneg %p271
      %p278 = scmp.eq.s32.totalorder %s26, 1
      %p279 = por %p277, %p278
      %p280 = scmp.ne.s32.totalorder %s272, %s275
      %p281 = scmp.eq.s32.totalorder %s26, 0
      %p282 = por %p280, %p281
      %p283 = scmp.ne.s32.totalorder %s272, %s275
      %p284 = scmp.eq.s32.totalorder %s31, 1
      %p285 = por %p283, %p284
      %p286 = scmp.ne.s32.totalorder %s275, %s276
      %p287 = scmp.eq.s32.totalorder %s31, 0
      %p288 = por %p286, %p287
      %p289 = scmp.ne.s32.totalorder %s275, %s276
      %p290 = scmp.eq.s32.totalorder %s32, 1
      %p291 = por %p289, %p290
      %p293 = scmp.ne.s32.totalorder %s276, %s292
      %p294 = scmp.eq.s32.totalorder %s32, 0
      %p295 = por %p293, %p294
      %p296 = scmp.le.s32.totalorder 1, %s26
      %p297 = scmp.lt.s32.totalorder %s26, 3
      %p298 = pnand %p296, %p297
      %p299 = pneg %p298
      // Predicated region
      $region9: #{tpu_custom_call.1} parent=5 // pred_check
        _
      $region10: #{tpu_custom_call.1} parent=5 // pred_check_branch
        %301 = sbr.rel (%p298) target = $region12
      $region11: #{tpu_custom_call.1} parent=5 // pred_region
        %s302 = ssub.s32 %s26, 1
        // Predicated region
        $region13: #{tpu_custom_call.1} parent=11 // pred_check
          %p303 = pneg %p73
        $region14: #{tpu_custom_call.1} parent=11 // pred_check_branch
          %305 = sbr.rel (%p303) target = $region16
        $region15: #{tpu_custom_call.1} parent=11 // pred_region
          %s307 = ssub.s32 256, 256
          %308 = vsyncadd [#allocation7], %s307
          %s309 = sshll.u32 [#allocation6], 4
          %s310 = int_to_ptr.vmem [resolvable:$true] %s309
          %315 = dma.hbm_to_vmem [thread:$0]  %s1, 256, %s310, [#allocation7], 64, 64, 4
        $region16: #{tpu_custom_call.1} parent=11 // pred_fallthru
          _
        // Predicated region
        $region17: #{tpu_custom_call.1} parent=11 // pred_check
          %p316 = pneg %p94
        $region18: #{tpu_custom_call.1} parent=11 // pred_check_branch
          %318 = sbr.rel (%p316) target = $region20
        $region19: #{tpu_custom_call.1} parent=11 // pred_region
          _
        $region20: #{tpu_custom_call.1} parent=11 // pred_fallthru
          _
        // Predicated region
        $region21: #{tpu_custom_call.1} parent=11 // pred_check
          %p319 = pneg %p115
        $region22: #{tpu_custom_call.1} parent=11 // pred_check_branch
          %321 = sbr.rel (%p319) target = $region24
        $region23: #{tpu_custom_call.1} parent=11 // pred_region
          %s323 = ssub.s32 256, 256
          %324 = vsyncadd [#allocation7], %s323
          %s325 = sshll.u32 [#allocation8], 4
          %s326 = int_to_ptr.vmem [resolvable:$true] %s325
          %331 = dma.hbm_to_vmem [thread:$0]  %s3, 256, %s326, [#allocation7], 128, 128, 8
        $region24: #{tpu_custom_call.1} parent=11 // pred_fallthru
          _
        // Predicated region
        $region25: #{tpu_custom_call.1} parent=11 // pred_check
          %p332 = pneg %p136
        $region26: #{tpu_custom_call.1} parent=11 // pred_check_branch
          %334 = sbr.rel (%p332) target = $region28
        $region27: #{tpu_custom_call.1} parent=11 // pred_region
          _
        $region28: #{tpu_custom_call.1} parent=11 // pred_fallthru
          _
        // Predicated region
        $region29: #{tpu_custom_call.1} parent=11 // pred_check
          %p335 = pneg %p157
        $region30: #{tpu_custom_call.1} parent=11 // pred_check_branch
          %337 = sbr.rel (%p335) target = $region32
        $region31: #{tpu_custom_call.1} parent=11 // pred_region
          %s339 = ssub.s32 128, 128
          %340 = vsyncadd [#allocation10], %s339
          %s341 = sshll.u32 [#allocation9], 4
          %s342 = int_to_ptr.vmem [resolvable:$true] %s341
          %347 = dma.hbm_to_vmem [thread:$0]  %s5, 128, %s342, [#allocation10], 64, 64, 4
        $region32: #{tpu_custom_call.1} parent=11 // pred_fallthru
          _
        // Predicated region
        $region33: #{tpu_custom_call.1} parent=11 // pred_check
          %p348 = pneg %p178
        $region34: #{tpu_custom_call.1} parent=11 // pred_check_branch
          %350 = sbr.rel (%p348) target = $region36
        $region35: #{tpu_custom_call.1} parent=11 // pred_region
          %s352 = ssub.s32 16, 16
          %353 = vsyncadd [#allocation10], %s352
          %s355 = sshll.u32 [#allocation11], 4
          %s356 = int_to_ptr.vmem [resolvable:$true] %s355
          %358 = dma.hbm_to_vmem [thread:$0]  %s6, 16, %s356, [#allocation10]
        $region36: #{tpu_custom_call.1} parent=11 // pred_fallthru
          _
        // Predicated region
        $region37: #{tpu_custom_call.1} parent=11 // pred_check
          %p359 = pneg %p199
        $region38: #{tpu_custom_call.1} parent=11 // pred_check_branch
          %361 = sbr.rel (%p359) target = $region40
        $region39: #{tpu_custom_call.1} parent=11 // pred_region
          _
        $region40: #{tpu_custom_call.1} parent=11 // pred_fallthru
          _
        // Predicated region
        $region41: #{tpu_custom_call.1} parent=11 // pred_check
          %p362 = pneg %p220
        $region42: #{tpu_custom_call.1} parent=11 // pred_check_branch
          %364 = sbr.rel (%p362) target = $region44
        $region43: #{tpu_custom_call.1} parent=11 // pred_region
          %s366 = ssub.s32 16, 16
          %367 = vsyncadd [#allocation13], %s366
          %s369 = sshll.u32 [#allocation12], 4
          %s370 = int_to_ptr.vmem [resolvable:$true] %s369
          %372 = dma.hbm_to_vmem [thread:$0]  %s8, 16, %s370, [#allocation13]
        $region44: #{tpu_custom_call.1} parent=11 // pred_fallthru
          _
        // Predicated region
        $region45: #{tpu_custom_call.1} parent=11 // pred_check
          %p373 = pneg %p241
        $region46: #{tpu_custom_call.1} parent=11 // pred_check_branch
          %375 = sbr.rel (%p373) target = $region48
        $region47: #{tpu_custom_call.1} parent=11 // pred_region
          _
        $region48: #{tpu_custom_call.1} parent=11 // pred_fallthru
          _
        // Predicated region
        $region49: #{tpu_custom_call.1} parent=11 // pred_check
          %p376 = pneg %p262
        $region50: #{tpu_custom_call.1} parent=11 // pred_check_branch
          %378 = sbr.rel (%p376) target = $region52
        $region51: #{tpu_custom_call.1} parent=11 // pred_region
          _
        $region52: #{tpu_custom_call.1} parent=11 // pred_fallthru
          _
      $region12: #{tpu_custom_call.1} parent=5 // pred_fallthru
        _
      %p379 = scmp.lt.s32.totalorder %s26, 2
      // Predicated region
      $region53: #{tpu_custom_call.1} parent=5 // pred_check
        %p380 = pneg %p379
      $region54: #{tpu_custom_call.1} parent=5 // pred_check_branch
        %382 = sbr.rel (%p380) target = $region56
      $region55: #{tpu_custom_call.1} parent=5 // pred_region
        // Predicated region
        $region57: #{tpu_custom_call.1} parent=55 // pred_check
          %p383 = pneg %p46
        $region58: #{tpu_custom_call.1} parent=55 // pred_check_branch
          %385 = sbr.rel (%p383) target = $region60
        $region59: #{tpu_custom_call.1} parent=55 // pred_region
          %s386 = sand.u32 %s36, 1
          %s387 = scalar_lea.sflag [#allocation4], %s386
          %s388 = sand.u32 %s36, 1
          %s389 = smul.addr %s388, 16
          %s390 = scalar_lea.vmem [#allocation3], %s389
          %s391 = smul.u32 2, %s26
          %s393 = ssub.s32 256, 256
          %394 = vsyncadd %s387, %s393
          %s395 = smul.addr %s391, 128
          %s396 = scalar_lea.hbm %s0, %s395
          %s397 = sshll.u32 %s390, 4
          %s398 = int_to_ptr.vmem [resolvable:$true] %s397
          %403 = dma.hbm_to_vmem [thread:$0]  %s396, 256, %s398, %s387, 128, 128, 8
        $region60: #{tpu_custom_call.1} parent=55 // pred_fallthru
          _
      $region56: #{tpu_custom_call.1} parent=5 // pred_fallthru
        _
      %p404 = scmp.le.s32.totalorder 1, %s26
      %p405 = scmp.lt.s32.totalorder %s26, 3
      %p406 = pnand %p404, %p405
      %p407 = pneg %p406
      // Predicated region
      $region61: #{tpu_custom_call.1} parent=5 // pred_check
        _
      $region62: #{tpu_custom_call.1} parent=5 // pred_check_branch
        %409 = sbr.rel (%p406) target = $region64
      $region63: #{tpu_custom_call.1} parent=5 // pred_region
        %s410 = ssub.s32 %s26, 1
        %s411 = sand.u32 %s39, 1
        %s412 = scalar_lea.sflag [#allocation4], %s411
        %s413 = sand.u32 %s39, 1
        %s414 = smul.addr %s413, 16
        %s415 = scalar_lea.vmem [#allocation3], %s414
        // Predicated region
        $region65: #{tpu_custom_call.1} parent=63 // pred_check
          %p416 = pneg %p52
        $region66: #{tpu_custom_call.1} parent=63 // pred_check_branch
          %418 = sbr.rel (%p416) target = $region68
        $region67: #{tpu_custom_call.1} parent=63 // pred_region
          %419 = dma.done %s412, 256
        $region68: #{tpu_custom_call.1} parent=63 // pred_fallthru
          _
        // Predicated region
        $region69: #{tpu_custom_call.1} parent=63 // pred_check
          %p420 = pneg %p73
        $region70: #{tpu_custom_call.1} parent=63 // pred_check_branch
          %422 = sbr.rel (%p420) target = $region72
        $region71: #{tpu_custom_call.1} parent=63 // pred_region
          %423 = dma.done [#allocation7], 256
        $region72: #{tpu_custom_call.1} parent=63 // pred_fallthru
          _
        // Predicated region
        $region73: #{tpu_custom_call.1} parent=63 // pred_check
          %p424 = pneg %p115
        $region74: #{tpu_custom_call.1} parent=63 // pred_check_branch
          %426 = sbr.rel (%p424) target = $region76
        $region75: #{tpu_custom_call.1} parent=63 // pred_region
          %427 = dma.done [#allocation7], 256
        $region76: #{tpu_custom_call.1} parent=63 // pred_fallthru
          _
        // Predicated region
        $region77: #{tpu_custom_call.1} parent=63 // pred_check
          %p428 = pneg %p157
        $region78: #{tpu_custom_call.1} parent=63 // pred_check_branch
          %430 = sbr.rel (%p428) target = $region80
        $region79: #{tpu_custom_call.1} parent=63 // pred_region
          %431 = dma.done [#allocation10], 128
        $region80: #{tpu_custom_call.1} parent=63 // pred_fallthru
          _
        // Predicated region
        $region81: #{tpu_custom_call.1} parent=63 // pred_check
          %p432 = pneg %p178
        $region82: #{tpu_custom_call.1} parent=63 // pred_check_branch
          %434 = sbr.rel (%p432) target = $region84
        $region83: #{tpu_custom_call.1} parent=63 // pred_region
          %435 = dma.done [#allocation10], 16
        $region84: #{tpu_custom_call.1} parent=63 // pred_fallthru
          _
        // Predicated region
        $region85: #{tpu_custom_call.1} parent=63 // pred_check
          %p436 = pneg %p220
        $region86: #{tpu_custom_call.1} parent=63 // pred_check_branch
          %438 = sbr.rel (%p436) target = $region88
        $region87: #{tpu_custom_call.1} parent=63 // pred_region
          %439 = dma.done [#allocation13], 16
        $region88: #{tpu_custom_call.1} parent=63 // pred_fallthru
          _
        %s440 = sand.u32 %s39, 1
        %s441 = scalar_lea.sflag [#allocation4], %s440
        %s442 = sand.u32 %s39, 1
        %s443 = smul.addr %s442, 16
        %s444 = scalar_lea.vmem [#allocation3], %s443
        %p445 = pneg %p52
        %p446 = pneg %p49
        %p447 = pneg %p73
        %p448 = pneg %p70
        %p449 = pneg %p94
        %p450 = pneg %p91
        %p451 = pneg %p115
        %p452 = pneg %p112
        %p453 = pneg %p136
        %p454 = pneg %p133
        %p455 = pneg %p157
        %p456 = pneg %p154
        %p457 = pneg %p178
        %p458 = pneg %p175
        %p459 = pneg %p199
        %p460 = pneg %p196
        %p461 = pneg %p220
        %p462 = pneg %p217
        %p463 = pneg %p241
        %p464 = pneg %p238
        %p465 = pneg %p262
        %p466 = pneg %p259
        %p467 = pneg %p288
        %p468 = pneg %p285
        %s469 = sand.u32 %s275, 1
        %s470 = scalar_lea.sflag [#allocation5], %s469
        %s471 = sand.u32 %s275, 1
        %s472 = smul.addr %s471, 16
        %s473 = scalar_lea.vmem [#allocation14], %s472
        %s474 = smul.u32 2, %s31
        %s475 = smul.u32 2, %s31
        %v477 = vld [vmem:[%s415] sm:$0xff]
        %v478 = vld [vmem:[%s415 + $0x8] sm:$0xff]
        %v479 = vpack.c.bf16 %v478, %v477
        %v480 = vld [vmem:[#allocation6] sm:$0xf]
        %v481 = vld [vmem:[#allocation6 + $0x4] sm:$0xf]
        %v482 = vld [vmem:[#allocation6 + $0x8] sm:$0xf]
        %v483 = vld [vmem:[#allocation6 + $0xc] sm:$0xf]
        %v484 = vld [vmem:[%s2] sm:$0x1]
        %v486 = vlaneseq
        %v487 = vshrl.u32 %v486, 7
        %v488 = vsub.s32 0, %v487
        %v489 = vrot.slane %v484, %v488
        %v495 = vunpack.c.l.b16 %v480
        %v496 = vunpack.c.l.b16 %v481
        %v497 = vunpack.c.l.b16 %v482
        %v498 = vunpack.c.l.b16 %v483
        %v499 = vpack.c.b16 %v496, %v495
        %v500 = vpack.c.b16 %v498, %v497
        %vm503 = vcmask 261120
        %v505 = vsel %vm503, %v479, 0
        %507 = vmatprep.subr.bf16.mxu0 0
        %508 = vmatpush1.bf16.msra.mxu0 %v499
        %509 = vmatprep.subr.bf16.mxu0 0
        %510 = vmatpush1.bf16.msra.mxu0 %v500
        %511 = vmatprep.subr.bf16.mxu0 0
        %512 = vmatpush1.bf16.msra.mxu0 0
        %513 = vmatprep.subr.bf16.mxu0 0
        %514 = vmatpush1.bf16.msra.mxu0 0
        %515 = vmatprep.subr.bf16.mxu0 0
        %516 = vmatpush1.bf16.msra.mxu0 0
        %517 = vmatprep.subr.bf16.mxu0 0
        %518 = vmatpush1.bf16.msra.mxu0 0
        %519 = vmatprep.subr.bf16.mxu0 0
        %520 = vmatpush1.bf16.msra.mxu0 0
        %521 = vmatprep.subr.bf16.mxu0 0
        %522 = vmatpush1.bf16.msra.mxu0 0
        %523 = vmatprep.subr.bf16.mxu0 0
        %524 = vmatpush1.bf16.msra.mxu0 0
        %525 = vmatprep.subr.bf16.mxu0 0
        %526 = vmatpush1.bf16.msra.mxu0 0
        %527 = vmatprep.subr.bf16.mxu0 0
        %528 = vmatpush1.bf16.msra.mxu0 0
        %529 = vmatprep.subr.bf16.mxu0 0
        %530 = vmatpush1.bf16.msra.mxu0 0
        %531 = vmatprep.subr.bf16.mxu0 0
        %532 = vmatpush1.bf16.msra.mxu0 0
        %533 = vmatprep.subr.bf16.mxu0 0
        %534 = vmatpush1.bf16.msra.mxu0 0
        %535 = vmatprep.subr.bf16.mxu0 0
        %536 = vmatpush1.bf16.msra.mxu0 0
        %537 = vmatprep.subr.bf16.mxu0 0
        %538 = vmatpush1.bf16.msra.mxu0 0
        %539 = vmatprep.mubr.bf16.mxu0 0
        %540 = vmatmul.mubr.bf16.gmra.mrb[0].mxu0 %v505
        %v541 = vpop.f32.mrb[0].mxu0
        %v542 = vadd.f32 %v489, %v541
        %v543 = vpop.f32.mrb[0].mxu0
        %v544 = vpop.f32.mrb[0].mxu0
        %v545 = vadd.f32 %v489, %v544
        %v546 = vpop.f32.mrb[0].mxu0
        %547 = vdwg.mxu0
        %v548 = vld [vmem:[#allocation8] sm:$0xff]
        %v549 = vld [vmem:[%s4] sm:$0x1]
        %v550 = vlaneseq
        %v551 = vshrl.u32 %v550, 7
        %v552 = vadd.f32 %v549, %v548
        %v554 = vlaneseq
        %v555 = vshrl.u32 %v554, 7
        %v556 = vsub.s32 0, %v555
        %v557 = vrot.slane %v552, %v556
        %558 = vrot.lane.b32.xlu0 %v557, 32
        %v559 = vpop.permute.xlu0 %558
        %v561 = vmul.f32 %v542, %v559
        %v562 = vmul.f32 %v545, %v559
        %565 = vrot.lane.b32.xlu0 %v542, 96
        %v566 = vpop.permute.xlu0 %565
        %567 = vrot.lane.b32.xlu0 %v545, 96
        %v568 = vpop.permute.xlu0 %567
        %v571 = vrot.slane %v566, 7
        %v572 = vrot.slane %v568, 7
        %vm573 = vcmp.lt.s32.totalorder %v551, 1
        %v574 = vsel %vm573, %v571, %v572
        %v575 = vsel %vm573, %v572, %v571
        %vm576 = vcmp.ge.s32.totalorder %v551, 1
        %v577 = vsel %vm576, %v575, 0.0
        %v578 = vsel %vm576, %v574, 0.0
        %v579 = vlaneseq
        %v580 = vshrl.u32 %v579, 7
        %v581 = vsub.s32 1, %v580
        %v582 = vrot.slane %v548, %v581
        %v583 = vmul.f32 %v577, %v582
        %v584 = vmul.f32 %v578, %v582
        %587 = vrot.lane.b32.xlu0 %v583, 32
        %v588 = vpop.permute.xlu0 %587
        %589 = vrot.lane.b32.xlu0 %v584, 32
        %v590 = vpop.permute.xlu0 %589
        %v593 = vadd.f32 %v561, %v588
        %v594 = vadd.f32 %v562, %v590
        %v595 = vrot.slane %v566, 6
        %v596 = vrot.slane %v568, 6
        %vm597 = vcmp.lt.s32.totalorder %v551, 2
        %v598 = vsel %vm597, %v595, %v596
        %v599 = vsel %vm597, %v596, %v595
        %vm600 = vcmp.ge.s32.totalorder %v551, 2
        %v601 = vsel %vm600, %v599, 0.0
        %v602 = vsel %vm600, %v598, 0.0
        %v603 = vlaneseq
        %v604 = vshrl.u32 %v603, 7
        %v605 = vsub.s32 2, %v604
        %v606 = vrot.slane %v548, %v605
        %v607 = vmul.f32 %v601, %v606
        %v608 = vmul.f32 %v602, %v606
        %611 = vrot.lane.b32.xlu0 %v607, 32
        %v612 = vpop.permute.xlu0 %611
        %613 = vrot.lane.b32.xlu0 %v608, 32
        %v614 = vpop.permute.xlu0 %613
        %v617 = vadd.f32 %v593, %v612
        %v618 = vadd.f32 %v594, %v614
        %v619 = vrot.slane %v566, 5
        %v620 = vrot.slane %v568, 5
        %vm621 = vcmp.lt.s32.totalorder %v551, 3
        %v622 = vsel %vm621, %v619, %v620
        %v623 = vsel %vm621, %v620, %v619
        %vm624 = vcmp.ge.s32.totalorder %v551, 3
        %v625 = vsel %vm624, %v623, 0.0
        %v626 = vsel %vm624, %v622, 0.0
        %v627 = vlaneseq
        %v628 = vshrl.u32 %v627, 7
        %v629 = vsub.s32 3, %v628
        %v630 = vrot.slane %v548, %v629
        %v631 = vmul.f32 %v625, %v630
        %v632 = vmul.f32 %v626, %v630
        %635 = vrot.lane.b32.xlu0 %v631, 32
        %v636 = vpop.permute.xlu0 %635
        %637 = vrot.lane.b32.xlu0 %v632, 32
        %v638 = vpop.permute.xlu0 %637
        %v641 = vadd.f32 %v617, %v636
        %v642 = vadd.f32 %v618, %v638
        %v643 = vrot.slane %v566, 4
        %v644 = vrot.slane %v568, 4
        %vm645 = vcmp.lt.s32.totalorder %v551, 4
        %v646 = vsel %vm645, %v643, %v644
        %v647 = vsel %vm645, %v644, %v643
        %vm648 = vcmp.ge.s32.totalorder %v551, 4
        %v649 = vsel %vm648, %v647, 0.0
        %v650 = vsel %vm648, %v646, 0.0
        %v651 = vlaneseq
        %v652 = vshrl.u32 %v651, 7
        %v653 = vsub.s32 4, %v652
        %v654 = vrot.slane %v548, %v653
        %v655 = vmul.f32 %v649, %v654
        %v656 = vmul.f32 %v650, %v654
        %659 = vrot.lane.b32.xlu0 %v655, 32
        %v660 = vpop.permute.xlu0 %659
        %661 = vrot.lane.b32.xlu0 %v656, 32
        %v662 = vpop.permute.xlu0 %661
        %v665 = vadd.f32 %v641, %v660
        %v666 = vadd.f32 %v642, %v662
        %v667 = vrot.slane %v566, 3
        %v668 = vrot.slane %v568, 3
        %vm669 = vcmp.lt.s32.totalorder %v551, 5
        %v670 = vsel %vm669, %v667, %v668
        %v671 = vsel %vm669, %v668, %v667
        %vm672 = vcmp.ge.s32.totalorder %v551, 5
        %v673 = vsel %vm672, %v671, 0.0
        %v674 = vsel %vm672, %v670, 0.0
        %v675 = vlaneseq
        %v676 = vshrl.u32 %v675, 7
        %v677 = vsub.s32 5, %v676
        %v678 = vrot.slane %v548, %v677
        %v679 = vmul.f32 %v673, %v678
        %v680 = vmul.f32 %v674, %v678
        %683 = vrot.lane.b32.xlu0 %v679, 32
        %v684 = vpop.permute.xlu0 %683
        %685 = vrot.lane.b32.xlu0 %v680, 32
        %v686 = vpop.permute.xlu0 %685
        %v689 = vadd.f32 %v665, %v684
        %v690 = vadd.f32 %v666, %v686
        %v691 = vrot.slane %v566, 2
        %v692 = vrot.slane %v568, 2
        %vm693 = vcmp.lt.s32.totalorder %v551, 6
        %v694 = vsel %vm693, %v691, %v692
        %v695 = vsel %vm693, %v692, %v691
        %vm696 = vcmp.ge.s32.totalorder %v551, 6
        %v697 = vsel %vm696, %v695, 0.0
        %v698 = vsel %vm696, %v694, 0.0
        %v699 = vlaneseq
        %v700 = vshrl.u32 %v699, 7
        %v701 = vsub.s32 6, %v700
        %v702 = vrot.slane %v548, %v701
        %v703 = vmul.f32 %v697, %v702
        %v704 = vmul.f32 %v698, %v702
        %707 = vrot.lane.b32.xlu0 %v703, 32
        %v708 = vpop.permute.xlu0 %707
        %709 = vrot.lane.b32.xlu0 %v704, 32
        %v710 = vpop.permute.xlu0 %709
        %v713 = vadd.f32 %v689, %v708
        %v714 = vadd.f32 %v690, %v710
        %v715 = vrot.slane %v566, 1
        %v716 = vrot.slane %v568, 1
        %vm717 = vcmp.lt.s32.totalorder %v551, 7
        %v718 = vsel %vm717, %v715, %v716
        %v719 = vsel %vm717, %v716, %v715
        %vm720 = vcmp.ge.s32.totalorder %v551, 7
        %v721 = vsel %vm720, %v719, 0.0
        %v722 = vsel %vm720, %v718, 0.0
        %v723 = vlaneseq
        %v724 = vshrl.u32 %v723, 7
        %v725 = vsub.s32 7, %v724
        %v726 = vrot.slane %v548, %v725
        %v727 = vmul.f32 %v721, %v726
        %v728 = vmul.f32 %v722, %v726
        %731 = vrot.lane.b32.xlu0 %v727, 32
        %v732 = vpop.permute.xlu0 %731
        %733 = vrot.lane.b32.xlu0 %v728, 32
        %v734 = vpop.permute.xlu0 %733
        %v737 = vadd.f32 %v713, %v732
        %v738 = vadd.f32 %v714, %v734
        %v739 = vld [vmem:[#allocation11] sm:$0x1]
        %v740 = vlaneseq
        %v741 = vshrl.u32 %v740, 7
        %v742 = vsub.s32 0, %v741
        %v743 = vrot.slane %v542, %v742
        %s745 = sor.u32 256, 64
        %746 = vbcast.lane.b32.xlu0 %v743, %s745
        %v747 = vpop.permute.xlu0 %746
        %s749 = sor.u32 256, 72
        %750 = vbcast.lane.b32.xlu0 %v743, %s749
        %v751 = vpop.permute.xlu0 %750
        %v752 = vlaneseq
        %v753 = vshrl.u32 %v752, 7
        %v754 = vsub.s32 1, %v753
        %v755 = vrot.slane %v542, %v754
        %s757 = sor.u32 256, 64
        %758 = vbcast.lane.b32.xlu0 %v755, %s757
        %v759 = vpop.permute.xlu0 %758
        %s761 = sor.u32 256, 72
        %762 = vbcast.lane.b32.xlu0 %v755, %s761
        %v763 = vpop.permute.xlu0 %762
        %v764 = vlaneseq
        %v765 = vshrl.u32 %v764, 7
        %v766 = vsub.s32 2, %v765
        %v767 = vrot.slane %v542, %v766
        %s769 = sor.u32 256, 64
        %770 = vbcast.lane.b32.xlu0 %v767, %s769
        %v771 = vpop.permute.xlu0 %770
        %s773 = sor.u32 256, 72
        %774 = vbcast.lane.b32.xlu0 %v767, %s773
        %v775 = vpop.permute.xlu0 %774
        %v776 = vlaneseq
        %v777 = vshrl.u32 %v776, 7
        %v778 = vsub.s32 3, %v777
        %v779 = vrot.slane %v542, %v778
        %s781 = sor.u32 256, 64
        %782 = vbcast.lane.b32.xlu0 %v779, %s781
        %v783 = vpop.permute.xlu0 %782
        %s785 = sor.u32 256, 72
        %786 = vbcast.lane.b32.xlu0 %v779, %s785
        %v787 = vpop.permute.xlu0 %786
        %v788 = vlaneseq
        %v789 = vshrl.u32 %v788, 7
        %v790 = vsub.s32 4, %v789
        %v791 = vrot.slane %v542, %v790
        %s793 = sor.u32 256, 64
        %794 = vbcast.lane.b32.xlu0 %v791, %s793
        %v795 = vpop.permute.xlu0 %794
        %s797 = sor.u32 256, 72
        %798 = vbcast.lane.b32.xlu0 %v791, %s797
        %v799 = vpop.permute.xlu0 %798
        %v800 = vlaneseq
        %v801 = vshrl.u32 %v800, 7
        %v802 = vsub.s32 5, %v801
        %v803 = vrot.slane %v542, %v802
        %s805 = sor.u32 256, 64
        %806 = vbcast.lane.b32.xlu0 %v803, %s805
        %v807 = vpop.permute.xlu0 %806
        %s809 = sor.u32 256, 72
        %810 = vbcast.lane.b32.xlu0 %v803, %s809
        %v811 = vpop.permute.xlu0 %810
        %v812 = vlaneseq
        %v813 = vshrl.u32 %v812, 7
        %v814 = vsub.s32 6, %v813
        %v815 = vrot.slane %v542, %v814
        %s817 = sor.u32 256, 64
        %818 = vbcast.lane.b32.xlu0 %v815, %s817
        %v819 = vpop.permute.xlu0 %818
        %s821 = sor.u32 256, 72
        %822 = vbcast.lane.b32.xlu0 %v815, %s821
        %v823 = vpop.permute.xlu0 %822
        %v824 = vlaneseq
        %v825 = vshrl.u32 %v824, 7
        %v826 = vsub.s32 7, %v825
        %v827 = vrot.slane %v542, %v826
        %s829 = sor.u32 256, 64
        %830 = vbcast.lane.b32.xlu0 %v827, %s829
        %v831 = vpop.permute.xlu0 %830
        %s833 = sor.u32 256, 72
        %834 = vbcast.lane.b32.xlu0 %v827, %s833
        %v835 = vpop.permute.xlu0 %834
        %v837 = vcombine.high %v737, %v737
        %v839 = vunpack.c.l.s4 1966171168
        %v840 = vunpack.c.0.s8 %v839
        %v841 = vlaneseq
        %v842 = vshrl.u32 %v841, 7
        %v843 = vsub.s32 %v840, %v842
        %v844 = vrot.slane %v737, %v843
        %v846 = vunpack.c.l.s4 1966171168
        %v847 = vunpack.c.0.s8 %v846
        %v848 = vlaneseq
        %v849 = vshrl.u32 %v848, 7
        %v850 = vsub.s32 %v847, %v849
        %v851 = vrot.slane %v837, %v850
        %v852 = vcombine.high %v844, %v844
        %v853 = vcombine.high %v851, %v851
        %v855 = vunpack.c.l.s4 1966171168
        %v856 = vunpack.c.0.s8 %v855
        %v857 = vlaneseq
        %v858 = vshrl.u32 %v857, 7
        %v859 = vsub.s32 %v856, %v858
        %v860 = vrot.slane %v844, %v859
        %v862 = vunpack.c.l.s4 1966171168
        %v863 = vunpack.c.0.s8 %v862
        %v864 = vlaneseq
        %v865 = vshrl.u32 %v864, 7
        %v866 = vsub.s32 %v863, %v865
        %v867 = vrot.slane %v851, %v866
        %v869 = vunpack.c.l.s4 1966171168
        %v870 = vunpack.c.0.s8 %v869
        %v871 = vlaneseq
        %v872 = vshrl.u32 %v871, 7
        %v873 = vsub.s32 %v870, %v872
        %v874 = vrot.slane %v852, %v873
        %v876 = vunpack.c.l.s4 1966171168
        %v877 = vunpack.c.0.s8 %v876
        %v878 = vlaneseq
        %v879 = vshrl.u32 %v878, 7
        %v880 = vsub.s32 %v877, %v879
        %v881 = vrot.slane %v853, %v880
        %v882 = vcombine.high %v860, %v860
        %v883 = vcombine.high %v867, %v867
        %v884 = vcombine.high %v874, %v874
        %v885 = vcombine.high %v881, %v881
        %v886 = vlaneseq
        %v887 = vshrl.u32 %v886, 7
        %v888 = vsub.s32 0, %v887
        %v889 = vrot.slane %v860, %v888
        %v890 = vlaneseq
        %v891 = vshrl.u32 %v890, 7
        %v892 = vsub.s32 0, %v891
        %v893 = vrot.slane %v874, %v892
        %v894 = vlaneseq
        %v895 = vshrl.u32 %v894, 7
        %v896 = vsub.s32 0, %v895
        %v897 = vrot.slane %v882, %v896
        %v898 = vlaneseq
        %v899 = vshrl.u32 %v898, 7
        %v900 = vsub.s32 0, %v899
        %v901 = vrot.slane %v884, %v900
        %v902 = vlaneseq
        %v903 = vshrl.u32 %v902, 7
        %v904 = vsub.s32 0, %v903
        %v905 = vrot.slane %v867, %v904
        %v906 = vlaneseq
        %v907 = vshrl.u32 %v906, 7
        %v908 = vsub.s32 0, %v907
        %v909 = vrot.slane %v881, %v908
        %v910 = vlaneseq
        %v911 = vshrl.u32 %v910, 7
        %v912 = vsub.s32 0, %v911
        %v913 = vrot.slane %v883, %v912
        %v914 = vlaneseq
        %v915 = vshrl.u32 %v914, 7
        %v916 = vsub.s32 0, %v915
        %v917 = vrot.slane %v885, %v916
        %v926 = vmul.f32 %v747, %v889
        %v927 = vmul.f32 %v751, %v889
        %v928 = vmul.f32 %v759, %v893
        %v929 = vmul.f32 %v763, %v893
        %v930 = vmul.f32 %v771, %v897
        %v931 = vmul.f32 %v775, %v897
        %v932 = vmul.f32 %v783, %v901
        %v933 = vmul.f32 %v787, %v901
        %v934 = vmul.f32 %v795, %v905
        %v935 = vmul.f32 %v799, %v905
        %v936 = vmul.f32 %v807, %v909
        %v937 = vmul.f32 %v811, %v909
        %v938 = vmul.f32 %v819, %v913
        %v939 = vmul.f32 %v823, %v913
        %v940 = vmul.f32 %v831, %v917
        %v941 = vmul.f32 %v835, %v917
        %958 = vrot.lane.b32.xlu0 %v926, 96
        %v959 = vpop.permute.xlu0 %958
        %960 = vrot.lane.b32.xlu0 %v927, 96
        %v961 = vpop.permute.xlu0 %960
        %962 = vrot.lane.b32.xlu0 %v928, 96
        %v963 = vpop.permute.xlu0 %962
        %964 = vrot.lane.b32.xlu0 %v929, 96
        %v965 = vpop.permute.xlu0 %964
        %966 = vrot.lane.b32.xlu0 %v930, 96
        %v967 = vpop.permute.xlu0 %966
        %968 = vrot.lane.b32.xlu0 %v931, 96
        %v969 = vpop.permute.xlu0 %968
        %970 = vrot.lane.b32.xlu0 %v932, 96
        %v971 = vpop.permute.xlu0 %970
        %972 = vrot.lane.b32.xlu0 %v933, 96
        %v973 = vpop.permute.xlu0 %972
        %974 = vrot.lane.b32.xlu0 %v934, 96
        %v975 = vpop.permute.xlu0 %974
        %976 = vrot.lane.b32.xlu0 %v935, 96
        %v977 = vpop.permute.xlu0 %976
        %978 = vrot.lane.b32.xlu0 %v936, 96
        %v979 = vpop.permute.xlu0 %978
        %980 = vrot.lane.b32.xlu0 %v937, 96
        %v981 = vpop.permute.xlu0 %980
        %982 = vrot.lane.b32.xlu0 %v938, 96
        %v983 = vpop.permute.xlu0 %982
        %984 = vrot.lane.b32.xlu0 %v939, 96
        %v985 = vpop.permute.xlu0 %984
        %986 = vrot.lane.b32.xlu0 %v940, 96
        %v987 = vpop.permute.xlu0 %986
        %988 = vrot.lane.b32.xlu0 %v941, 96
        %v989 = vpop.permute.xlu0 %988
        %v1006 = vcombine.low %v959, %v967
        %v1007 = vcombine.high %v959, %v967
        %v1009 = vunpack.c.l.s4 1983009808
        %v1010 = vunpack.c.0.s8 %v1009
        %v1011 = vlaneseq
        %v1012 = vshrl.u32 %v1011, 7
        %v1013 = vsub.s32 %v1010, %v1012
        %v1014 = vrot.slane %v1006, %v1013
        %v1016 = vunpack.c.l.s4 1983009808
        %v1017 = vunpack.c.0.s8 %v1016
        %v1018 = vlaneseq
        %v1019 = vshrl.u32 %v1018, 7
        %v1020 = vsub.s32 %v1017, %v1019
        %v1021 = vrot.slane %v1007, %v1020
        %v1022 = vcombine.low %v963, %v971
        %v1023 = vcombine.high %v963, %v971
        %v1025 = vunpack.c.l.s4 1983009808
        %v1026 = vunpack.c.0.s8 %v1025
        %v1027 = vlaneseq
        %v1028 = vshrl.u32 %v1027, 7
        %v1029 = vsub.s32 %v1026, %v1028
        %v1030 = vrot.slane %v1022, %v1029
        %v1032 = vunpack.c.l.s4 1983009808
        %v1033 = vunpack.c.0.s8 %v1032
        %v1034 = vlaneseq
        %v1035 = vshrl.u32 %v1034, 7
        %v1036 = vsub.s32 %v1033, %v1035
        %v1037 = vrot.slane %v1023, %v1036
        %v1038 = vcombine.low %v975, %v983
        %v1039 = vcombine.high %v975, %v983
        %v1041 = vunpack.c.l.s4 1983009808
        %v1042 = vunpack.c.0.s8 %v1041
        %v1043 = vlaneseq
        %v1044 = vshrl.u32 %v1043, 7
        %v1045 = vsub.s32 %v1042, %v1044
        %v1046 = vrot.slane %v1038, %v1045
        %v1048 = vunpack.c.l.s4 1983009808
        %v1049 = vunpack.c.0.s8 %v1048
        %v1050 = vlaneseq
        %v1051 = vshrl.u32 %v1050, 7
        %v1052 = vsub.s32 %v1049, %v1051
        %v1053 = vrot.slane %v1039, %v1052
        %v1054 = vcombine.low %v979, %v987
        %v1055 = vcombine.high %v979, %v987
        %v1057 = vunpack.c.l.s4 1983009808
        %v1058 = vunpack.c.0.s8 %v1057
        %v1059 = vlaneseq
        %v1060 = vshrl.u32 %v1059, 7
        %v1061 = vsub.s32 %v1058, %v1060
        %v1062 = vrot.slane %v1054, %v1061
        %v1064 = vunpack.c.l.s4 1983009808
        %v1065 = vunpack.c.0.s8 %v1064
        %v1066 = vlaneseq
        %v1067 = vshrl.u32 %v1066, 7
        %v1068 = vsub.s32 %v1065, %v1067
        %v1069 = vrot.slane %v1055, %v1068
        %v1070 = vcombine.low %v1014, %v1030
        %v1071 = vcombine.high %v1014, %v1030
        %v1073 = vunpack.c.l.s4 1934713408
        %v1074 = vunpack.c.0.s8 %v1073
        %v1075 = vlaneseq
        %v1076 = vshrl.u32 %v1075, 7
        %v1077 = vsub.s32 %v1074, %v1076
        %v1078 = vrot.slane %v1070, %v1077
        %v1080 = vunpack.c.l.s4 1934713408
        %v1081 = vunpack.c.0.s8 %v1080
        %v1082 = vlaneseq
        %v1083 = vshrl.u32 %v1082, 7
        %v1084 = vsub.s32 %v1081, %v1083
        %v1085 = vrot.slane %v1071, %v1084
        %v1086 = vcombine.low %v1021, %v1037
        %v1087 = vcombine.high %v1021, %v1037
        %v1089 = vunpack.c.l.s4 1934713408
        %v1090 = vunpack.c.0.s8 %v1089
        %v1091 = vlaneseq
        %v1092 = vshrl.u32 %v1091, 7
        %v1093 = vsub.s32 %v1090, %v1092
        %v1094 = vrot.slane %v1086, %v1093
        %v1096 = vunpack.c.l.s4 1934713408
        %v1097 = vunpack.c.0.s8 %v1096
        %v1098 = vlaneseq
        %v1099 = vshrl.u32 %v1098, 7
        %v1100 = vsub.s32 %v1097, %v1099
        %v1101 = vrot.slane %v1087, %v1100
        %v1102 = vcombine.low %v1046, %v1062
        %v1103 = vcombine.high %v1046, %v1062
        %v1105 = vunpack.c.l.s4 1934713408
        %v1106 = vunpack.c.0.s8 %v1105
        %v1107 = vlaneseq
        %v1108 = vshrl.u32 %v1107, 7
        %v1109 = vsub.s32 %v1106, %v1108
        %v1110 = vrot.slane %v1102, %v1109
        %v1112 = vunpack.c.l.s4 1934713408
        %v1113 = vunpack.c.0.s8 %v1112
        %v1114 = vlaneseq
        %v1115 = vshrl.u32 %v1114, 7
        %v1116 = vsub.s32 %v1113, %v1115
        %v1117 = vrot.slane %v1103, %v1116
        %v1118 = vcombine.low %v1053, %v1069
        %v1119 = vcombine.high %v1053, %v1069
        %v1121 = vunpack.c.l.s4 1934713408
        %v1122 = vunpack.c.0.s8 %v1121
        %v1123 = vlaneseq
        %v1124 = vshrl.u32 %v1123, 7
        %v1125 = vsub.s32 %v1122, %v1124
        %v1126 = vrot.slane %v1118, %v1125
        %v1128 = vunpack.c.l.s4 1934713408
        %v1129 = vunpack.c.0.s8 %v1128
        %v1130 = vlaneseq
        %v1131 = vshrl.u32 %v1130, 7
        %v1132 = vsub.s32 %v1129, %v1131
        %v1133 = vrot.slane %v1119, %v1132
        %v1134 = vcombine.low %v1078, %v1110
        %v1135 = vcombine.high %v1078, %v1110
        %v1136 = vcombine.low %v1085, %v1117
        %v1137 = vcombine.high %v1085, %v1117
        %v1138 = vcombine.low %v1094, %v1126
        %v1139 = vcombine.high %v1094, %v1126
        %v1140 = vcombine.low %v1101, %v1133
        %v1141 = vcombine.high %v1101, %v1133
        %v1142 = vcombine.low %v961, %v969
        %v1143 = vcombine.high %v961, %v969
        %v1145 = vunpack.c.l.s4 1983009808
        %v1146 = vunpack.c.0.s8 %v1145
        %v1147 = vlaneseq
        %v1148 = vshrl.u32 %v1147, 7
        %v1149 = vsub.s32 %v1146, %v1148
        %v1150 = vrot.slane %v1142, %v1149
        %v1152 = vunpack.c.l.s4 1983009808
        %v1153 = vunpack.c.0.s8 %v1152
        %v1154 = vlaneseq
        %v1155 = vshrl.u32 %v1154, 7
        %v1156 = vsub.s32 %v1153, %v1155
        %v1157 = vrot.slane %v1143, %v1156
        %v1158 = vcombine.low %v965, %v973
        %v1159 = vcombine.high %v965, %v973
        %v1161 = vunpack.c.l.s4 1983009808
        %v1162 = vunpack.c.0.s8 %v1161
        %v1163 = vlaneseq
        %v1164 = vshrl.u32 %v1163, 7
        %v1165 = vsub.s32 %v1162, %v1164
        %v1166 = vrot.slane %v1158, %v1165
        %v1168 = vunpack.c.l.s4 1983009808
        %v1169 = vunpack.c.0.s8 %v1168
        %v1170 = vlaneseq
        %v1171 = vshrl.u32 %v1170, 7
        %v1172 = vsub.s32 %v1169, %v1171
        %v1173 = vrot.slane %v1159, %v1172
        %v1174 = vcombine.low %v977, %v985
        %v1175 = vcombine.high %v977, %v985
        %v1177 = vunpack.c.l.s4 1983009808
        %v1178 = vunpack.c.0.s8 %v1177
        %v1179 = vlaneseq
        %v1180 = vshrl.u32 %v1179, 7
        %v1181 = vsub.s32 %v1178, %v1180
        %v1182 = vrot.slane %v1174, %v1181
        %v1184 = vunpack.c.l.s4 1983009808
        %v1185 = vunpack.c.0.s8 %v1184
        %v1186 = vlaneseq
        %v1187 = vshrl.u32 %v1186, 7
        %v1188 = vsub.s32 %v1185, %v1187
        %v1189 = vrot.slane %v1175, %v1188
        %v1190 = vcombine.low %v981, %v989
        %v1191 = vcombine.high %v981, %v989
        %v1193 = vunpack.c.l.s4 1983009808
        %v1194 = vunpack.c.0.s8 %v1193
        %v1195 = vlaneseq
        %v1196 = vshrl.u32 %v1195, 7
        %v1197 = vsub.s32 %v1194, %v1196
        %v1198 = vrot.slane %v1190, %v1197
        %v1200 = vunpack.c.l.s4 1983009808
        %v1201 = vunpack.c.0.s8 %v1200
        %v1202 = vlaneseq
        %v1203 = vshrl.u32 %v1202, 7
        %v1204 = vsub.s32 %v1201, %v1203
        %v1205 = vrot.slane %v1191, %v1204
        %v1206 = vcombine.low %v1150, %v1166
        %v1207 = vcombine.high %v1150, %v1166
        %v1209 = vunpack.c.l.s4 1934713408
        %v1210 = vunpack.c.0.s8 %v1209
        %v1211 = vlaneseq
        %v1212 = vshrl.u32 %v1211, 7
        %v1213 = vsub.s32 %v1210, %v1212
        %v1214 = vrot.slane %v1206, %v1213
        %v1216 = vunpack.c.l.s4 1934713408
        %v1217 = vunpack.c.0.s8 %v1216
        %v1218 = vlaneseq
        %v1219 = vshrl.u32 %v1218, 7
        %v1220 = vsub.s32 %v1217, %v1219
        %v1221 = vrot.slane %v1207, %v1220
        %v1222 = vcombine.low %v1157, %v1173
        %v1223 = vcombine.high %v1157, %v1173
        %v1225 = vunpack.c.l.s4 1934713408
        %v1226 = vunpack.c.0.s8 %v1225
        %v1227 = vlaneseq
        %v1228 = vshrl.u32 %v1227, 7
        %v1229 = vsub.s32 %v1226, %v1228
        %v1230 = vrot.slane %v1222, %v1229
        %v1232 = vunpack.c.l.s4 1934713408
        %v1233 = vunpack.c.0.s8 %v1232
        %v1234 = vlaneseq
        %v1235 = vshrl.u32 %v1234, 7
        %v1236 = vsub.s32 %v1233, %v1235
        %v1237 = vrot.slane %v1223, %v1236
        %v1238 = vcombine.low %v1182, %v1198
        %v1239 = vcombine.high %v1182, %v1198
        %v1241 = vunpack.c.l.s4 1934713408
        %v1242 = vunpack.c.0.s8 %v1241
        %v1243 = vlaneseq
        %v1244 = vshrl.u32 %v1243, 7
        %v1245 = vsub.s32 %v1242, %v1244
        %v1246 = vrot.slane %v1238, %v1245
        %v1248 = vunpack.c.l.s4 1934713408
        %v1249 = vunpack.c.0.s8 %v1248
        %v1250 = vlaneseq
        %v1251 = vshrl.u32 %v1250, 7
        %v1252 = vsub.s32 %v1249, %v1251
        %v1253 = vrot.slane %v1239, %v1252
        %v1254 = vcombine.low %v1189, %v1205
        %v1255 = vcombine.high %v1189, %v1205
        %v1257 = vunpack.c.l.s4 1934713408
        %v1258 = vunpack.c.0.s8 %v1257
        %v1259 = vlaneseq
        %v1260 = vshrl.u32 %v1259, 7
        %v1261 = vsub.s32 %v1258, %v1260
        %v1262 = vrot.slane %v1254, %v1261
        %v1264 = vunpack.c.l.s4 1934713408
        %v1265 = vunpack.c.0.s8 %v1264
        %v1266 = vlaneseq
        %v1267 = vshrl.u32 %v1266, 7
        %v1268 = vsub.s32 %v1265, %v1267
        %v1269 = vrot.slane %v1255, %v1268
        %v1270 = vcombine.low %v1214, %v1246
        %v1271 = vcombine.high %v1214, %v1246
        %v1272 = vcombine.low %v1221, %v1253
        %v1273 = vcombine.high %v1221, %v1253
        %v1274 = vcombine.low %v1230, %v1262
        %v1275 = vcombine.high %v1230, %v1262
        %v1276 = vcombine.low %v1237, %v1269
        %v1277 = vcombine.high %v1237, %v1269
        %1279 = vrot.lane.b32.xlu0 %v1135, 16
        %v1280 = vpop.permute.xlu0 %1279
        %1283 = vrot.lane.b32.xlu0 %v1136, 32
        %v1284 = vpop.permute.xlu0 %1283
        %1287 = vrot.lane.b32.xlu0 %v1137, 48
        %v1288 = vpop.permute.xlu0 %1287
        %1291 = vrot.lane.b32.xlu0 %v1138, 64
        %v1292 = vpop.permute.xlu0 %1291
        %1295 = vrot.lane.b32.xlu0 %v1139, 80
        %v1296 = vpop.permute.xlu0 %1295
        %1299 = vrot.lane.b32.xlu0 %v1140, 96
        %v1300 = vpop.permute.xlu0 %1299
        %1303 = vrot.lane.b32.xlu0 %v1141, 112
        %v1304 = vpop.permute.xlu0 %1303
        %1307 = vrot.lane.b32.xlu0 %v1271, 16
        %v1308 = vpop.permute.xlu0 %1307
        %1311 = vrot.lane.b32.xlu0 %v1272, 32
        %v1312 = vpop.permute.xlu0 %1311
        %1315 = vrot.lane.b32.xlu0 %v1273, 48
        %v1316 = vpop.permute.xlu0 %1315
        %1319 = vrot.lane.b32.xlu0 %v1274, 64
        %v1320 = vpop.permute.xlu0 %1319
        %1323 = vrot.lane.b32.xlu0 %v1275, 80
        %v1324 = vpop.permute.xlu0 %1323
        %1327 = vrot.lane.b32.xlu0 %v1276, 96
        %v1328 = vpop.permute.xlu0 %1327
        %1331 = vrot.lane.b32.xlu0 %v1277, 112
        %v1332 = vpop.permute.xlu0 %1331
        %vm1334 = vcmask 130048
        %v1335 = vsel %vm1334, %v1134, %v1280
        %v1336 = vsel %vm503, %v1335, %v1284
        %vm1337 = vcmask 392192
        %v1338 = vsel %vm1337, %v1336, %v1288
        %vm1339 = vcmask 523264
        %v1340 = vsel %vm1339, %v1338, %v1292
        %vm1341 = vcmask 654336
        %v1342 = vsel %vm1341, %v1340, %v1296
        %vm1343 = vcmask 785408
        %v1344 = vsel %vm1343, %v1342, %v1300
        %vm1345 = vcmask 916480
        %v1346 = vsel %vm1345, %v1344, %v1304
        %v1347 = vsel %vm1334, %v1270, %v1308
        %v1348 = vsel %vm503, %v1347, %v1312
        %v1349 = vsel %vm1337, %v1348, %v1316
        %v1350 = vsel %vm1339, %v1349, %v1320
        %v1351 = vsel %vm1341, %v1350, %v1324
        %v1352 = vsel %vm1343, %v1351, %v1328
        %v1353 = vsel %vm1345, %v1352, %v1332
        %v1354 = vlaneseq
        %v1355 = vshrl.u32 %v1354, 7
        %v1356 = vsub.s32 0, %v1355
        %v1357 = vrot.slane %v545, %v1356
        %s1359 = sor.u32 256, 64
        %1360 = vbcast.lane.b32.xlu0 %v1357, %s1359
        %v1361 = vpop.permute.xlu0 %1360
        %s1363 = sor.u32 256, 72
        %1364 = vbcast.lane.b32.xlu0 %v1357, %s1363
        %v1365 = vpop.permute.xlu0 %1364
        %v1366 = vlaneseq
        %v1367 = vshrl.u32 %v1366, 7
        %v1368 = vsub.s32 1, %v1367
        %v1369 = vrot.slane %v545, %v1368
        %s1371 = sor.u32 256, 64
        %1372 = vbcast.lane.b32.xlu0 %v1369, %s1371
        %v1373 = vpop.permute.xlu0 %1372
        %s1375 = sor.u32 256, 72
        %1376 = vbcast.lane.b32.xlu0 %v1369, %s1375
        %v1377 = vpop.permute.xlu0 %1376
        %v1378 = vlaneseq
        %v1379 = vshrl.u32 %v1378, 7
        %v1380 = vsub.s32 2, %v1379
        %v1381 = vrot.slane %v545, %v1380
        %s1383 = sor.u32 256, 64
        %1384 = vbcast.lane.b32.xlu0 %v1381, %s1383
        %v1385 = vpop.permute.xlu0 %1384
        %s1387 = sor.u32 256, 72
        %1388 = vbcast.lane.b32.xlu0 %v1381, %s1387
        %v1389 = vpop.permute.xlu0 %1388
        %v1390 = vlaneseq
        %v1391 = vshrl.u32 %v1390, 7
        %v1392 = vsub.s32 3, %v1391
        %v1393 = vrot.slane %v545, %v1392
        %s1395 = sor.u32 256, 64
        %1396 = vbcast.lane.b32.xlu0 %v1393, %s1395
        %v1397 = vpop.permute.xlu0 %1396
        %s1399 = sor.u32 256, 72
        %1400 = vbcast.lane.b32.xlu0 %v1393, %s1399
        %v1401 = vpop.permute.xlu0 %1400
        %v1402 = vlaneseq
        %v1403 = vshrl.u32 %v1402, 7
        %v1404 = vsub.s32 4, %v1403
        %v1405 = vrot.slane %v545, %v1404
        %s1407 = sor.u32 256, 64
        %1408 = vbcast.lane.b32.xlu0 %v1405, %s1407
        %v1409 = vpop.permute.xlu0 %1408
        %s1411 = sor.u32 256, 72
        %1412 = vbcast.lane.b32.xlu0 %v1405, %s1411
        %v1413 = vpop.permute.xlu0 %1412
        %v1414 = vlaneseq
        %v1415 = vshrl.u32 %v1414, 7
        %v1416 = vsub.s32 5, %v1415
        %v1417 = vrot.slane %v545, %v1416
        %s1419 = sor.u32 256, 64
        %1420 = vbcast.lane.b32.xlu0 %v1417, %s1419
        %v1421 = vpop.permute.xlu0 %1420
        %s1423 = sor.u32 256, 72
        %1424 = vbcast.lane.b32.xlu0 %v1417, %s1423
        %v1425 = vpop.permute.xlu0 %1424
        %v1426 = vlaneseq
        %v1427 = vshrl.u32 %v1426, 7
        %v1428 = vsub.s32 6, %v1427
        %v1429 = vrot.slane %v545, %v1428
        %s1431 = sor.u32 256, 64
        %1432 = vbcast.lane.b32.xlu0 %v1429, %s1431
        %v1433 = vpop.permute.xlu0 %1432
        %s1435 = sor.u32 256, 72
        %1436 = vbcast.lane.b32.xlu0 %v1429, %s1435
        %v1437 = vpop.permute.xlu0 %1436
        %v1438 = vlaneseq
        %v1439 = vshrl.u32 %v1438, 7
        %v1440 = vsub.s32 7, %v1439
        %v1441 = vrot.slane %v545, %v1440
        %s1443 = sor.u32 256, 64
        %1444 = vbcast.lane.b32.xlu0 %v1441, %s1443
        %v1445 = vpop.permute.xlu0 %1444
        %s1447 = sor.u32 256, 72
        %1448 = vbcast.lane.b32.xlu0 %v1441, %s1447
        %v1449 = vpop.permute.xlu0 %1448
        %v1451 = vcombine.high %v738, %v738
        %v1453 = vunpack.c.l.s4 1966171168
        %v1454 = vunpack.c.0.s8 %v1453
        %v1455 = vlaneseq
        %v1456 = vshrl.u32 %v1455, 7
        %v1457 = vsub.s32 %v1454, %v1456
        %v1458 = vrot.slane %v738, %v1457
        %v1460 = vunpack.c.l.s4 1966171168
        %v1461 = vunpack.c.0.s8 %v1460
        %v1462 = vlaneseq
        %v1463 = vshrl.u32 %v1462, 7
        %v1464 = vsub.s32 %v1461, %v1463
        %v1465 = vrot.slane %v1451, %v1464
        %v1466 = vcombine.high %v1458, %v1458
        %v1467 = vcombine.high %v1465, %v1465
        %v1469 = vunpack.c.l.s4 1966171168
        %v1470 = vunpack.c.0.s8 %v1469
        %v1471 = vlaneseq
        %v1472 = vshrl.u32 %v1471, 7
        %v1473 = vsub.s32 %v1470, %v1472
        %v1474 = vrot.slane %v1458, %v1473
        %v1476 = vunpack.c.l.s4 1966171168
        %v1477 = vunpack.c.0.s8 %v1476
        %v1478 = vlaneseq
        %v1479 = vshrl.u32 %v1478, 7
        %v1480 = vsub.s32 %v1477, %v1479
        %v1481 = vrot.slane %v1465, %v1480
        %v1483 = vunpack.c.l.s4 1966171168
        %v1484 = vunpack.c.0.s8 %v1483
        %v1485 = vlaneseq
        %v1486 = vshrl.u32 %v1485, 7
        %v1487 = vsub.s32 %v1484, %v1486
        %v1488 = vrot.slane %v1466, %v1487
        %v1490 = vunpack.c.l.s4 1966171168
        %v1491 = vunpack.c.0.s8 %v1490
        %v1492 = vlaneseq
        %v1493 = vshrl.u32 %v1492, 7
        %v1494 = vsub.s32 %v1491, %v1493
        %v1495 = vrot.slane %v1467, %v1494
        %v1496 = vcombine.high %v1474, %v1474
        %v1497 = vcombine.high %v1481, %v1481
        %v1498 = vcombine.high %v1488, %v1488
        %v1499 = vcombine.high %v1495, %v1495
        %v1500 = vlaneseq
        %v1501 = vshrl.u32 %v1500, 7
        %v1502 = vsub.s32 0, %v1501
        %v1503 = vrot.slane %v1474, %v1502
        %v1504 = vlaneseq
        %v1505 = vshrl.u32 %v1504, 7
        %v1506 = vsub.s32 0, %v1505
        %v1507 = vrot.slane %v1488, %v1506
        %v1508 = vlaneseq
        %v1509 = vshrl.u32 %v1508, 7
        %v1510 = vsub.s32 0, %v1509
        %v1511 = vrot.slane %v1496, %v1510
        %v1512 = vlaneseq
        %v1513 = vshrl.u32 %v1512, 7
        %v1514 = vsub.s32 0, %v1513
        %v1515 = vrot.slane %v1498, %v1514
        %v1516 = vlaneseq
        %v1517 = vshrl.u32 %v1516, 7
        %v1518 = vsub.s32 0, %v1517
        %v1519 = vrot.slane %v1481, %v1518
        %v1520 = vlaneseq
        %v1521 = vshrl.u32 %v1520, 7
        %v1522 = vsub.s32 0, %v1521
        %v1523 = vrot.slane %v1495, %v1522
        %v1524 = vlaneseq
        %v1525 = vshrl.u32 %v1524, 7
        %v1526 = vsub.s32 0, %v1525
        %v1527 = vrot.slane %v1497, %v1526
        %v1528 = vlaneseq
        %v1529 = vshrl.u32 %v1528, 7
        %v1530 = vsub.s32 0, %v1529
        %v1531 = vrot.slane %v1499, %v1530
        %v1540 = vmul.f32 %v1361, %v1503
        %v1541 = vmul.f32 %v1365, %v1503
        %v1542 = vmul.f32 %v1373, %v1507
        %v1543 = vmul.f32 %v1377, %v1507
        %v1544 = vmul.f32 %v1385, %v1511
        %v1545 = vmul.f32 %v1389, %v1511
        %v1546 = vmul.f32 %v1397, %v1515
        %v1547 = vmul.f32 %v1401, %v1515
        %v1548 = vmul.f32 %v1409, %v1519
        %v1549 = vmul.f32 %v1413, %v1519
        %v1550 = vmul.f32 %v1421, %v1523
        %v1551 = vmul.f32 %v1425, %v1523
        %v1552 = vmul.f32 %v1433, %v1527
        %v1553 = vmul.f32 %v1437, %v1527
        %v1554 = vmul.f32 %v1445, %v1531
        %v1555 = vmul.f32 %v1449, %v1531
        %1572 = vrot.lane.b32.xlu0 %v1540, 96
        %v1573 = vpop.permute.xlu0 %1572
        %1574 = vrot.lane.b32.xlu0 %v1541, 96
        %v1575 = vpop.permute.xlu0 %1574
        %1576 = vrot.lane.b32.xlu0 %v1542, 96
        %v1577 = vpop.permute.xlu0 %1576
        %1578 = vrot.lane.b32.xlu0 %v1543, 96
        %v1579 = vpop.permute.xlu0 %1578
        %1580 = vrot.lane.b32.xlu0 %v1544, 96
        %v1581 = vpop.permute.xlu0 %1580
        %1582 = vrot.lane.b32.xlu0 %v1545, 96
        %v1583 = vpop.permute.xlu0 %1582
        %1584 = vrot.lane.b32.xlu0 %v1546, 96
        %v1585 = vpop.permute.xlu0 %1584
        %1586 = vrot.lane.b32.xlu0 %v1547, 96
        %v1587 = vpop.permute.xlu0 %1586
        %1588 = vrot.lane.b32.xlu0 %v1548, 96
        %v1589 = vpop.permute.xlu0 %1588
        %1590 = vrot.lane.b32.xlu0 %v1549, 96
        %v1591 = vpop.permute.xlu0 %1590
        %1592 = vrot.lane.b32.xlu0 %v1550, 96
        %v1593 = vpop.permute.xlu0 %1592
        %1594 = vrot.lane.b32.xlu0 %v1551, 96
        %v1595 = vpop.permute.xlu0 %1594
        %1596 = vrot.lane.b32.xlu0 %v1552, 96
        %v1597 = vpop.permute.xlu0 %1596
        %1598 = vrot.lane.b32.xlu0 %v1553, 96
        %v1599 = vpop.permute.xlu0 %1598
        %1600 = vrot.lane.b32.xlu0 %v1554, 96
        %v1601 = vpop.permute.xlu0 %1600
        %1602 = vrot.lane.b32.xlu0 %v1555, 96
        %v1603 = vpop.permute.xlu0 %1602
        %v1620 = vcombine.low %v1573, %v1581
        %v1621 = vcombine.high %v1573, %v1581
        %v1623 = vunpack.c.l.s4 1983009808
        %v1624 = vunpack.c.0.s8 %v1623
        %v1625 = vlaneseq
        %v1626 = vshrl.u32 %v1625, 7
        %v1627 = vsub.s32 %v1624, %v1626
        %v1628 = vrot.slane %v1620, %v1627
        %v1630 = vunpack.c.l.s4 1983009808
        %v1631 = vunpack.c.0.s8 %v1630
        %v1632 = vlaneseq
        %v1633 = vshrl.u32 %v1632, 7
        %v1634 = vsub.s32 %v1631, %v1633
        %v1635 = vrot.slane %v1621, %v1634
        %v1636 = vcombine.low %v1577, %v1585
        %v1637 = vcombine.high %v1577, %v1585
        %v1639 = vunpack.c.l.s4 1983009808
        %v1640 = vunpack.c.0.s8 %v1639
        %v1641 = vlaneseq
        %v1642 = vshrl.u32 %v1641, 7
        %v1643 = vsub.s32 %v1640, %v1642
        %v1644 = vrot.slane %v1636, %v1643
        %v1646 = vunpack.c.l.s4 1983009808
        %v1647 = vunpack.c.0.s8 %v1646
        %v1648 = vlaneseq
        %v1649 = vshrl.u32 %v1648, 7
        %v1650 = vsub.s32 %v1647, %v1649
        %v1651 = vrot.slane %v1637, %v1650
        %v1652 = vcombine.low %v1589, %v1597
        %v1653 = vcombine.high %v1589, %v1597
        %v1655 = vunpack.c.l.s4 1983009808
        %v1656 = vunpack.c.0.s8 %v1655
        %v1657 = vlaneseq
        %v1658 = vshrl.u32 %v1657, 7
        %v1659 = vsub.s32 %v1656, %v1658
        %v1660 = vrot.slane %v1652, %v1659
        %v1662 = vunpack.c.l.s4 1983009808
        %v1663 = vunpack.c.0.s8 %v1662
        %v1664 = vlaneseq
        %v1665 = vshrl.u32 %v1664, 7
        %v1666 = vsub.s32 %v1663, %v1665
        %v1667 = vrot.slane %v1653, %v1666
        %v1668 = vcombine.low %v1593, %v1601
        %v1669 = vcombine.high %v1593, %v1601
        %v1671 = vunpack.c.l.s4 1983009808
        %v1672 = vunpack.c.0.s8 %v1671
        %v1673 = vlaneseq
        %v1674 = vshrl.u32 %v1673, 7
        %v1675 = vsub.s32 %v1672, %v1674
        %v1676 = vrot.slane %v1668, %v1675
        %v1678 = vunpack.c.l.s4 1983009808
        %v1679 = vunpack.c.0.s8 %v1678
        %v1680 = vlaneseq
        %v1681 = vshrl.u32 %v1680, 7
        %v1682 = vsub.s32 %v1679, %v1681
        %v1683 = vrot.slane %v1669, %v1682
        %v1684 = vcombine.low %v1628, %v1644
        %v1685 = vcombine.high %v1628, %v1644
        %v1687 = vunpack.c.l.s4 1934713408
        %v1688 = vunpack.c.0.s8 %v1687
        %v1689 = vlaneseq
        %v1690 = vshrl.u32 %v1689, 7
        %v1691 = vsub.s32 %v1688, %v1690
        %v1692 = vrot.slane %v1684, %v1691
        %v1694 = vunpack.c.l.s4 1934713408
        %v1695 = vunpack.c.0.s8 %v1694
        %v1696 = vlaneseq
        %v1697 = vshrl.u32 %v1696, 7
        %v1698 = vsub.s32 %v1695, %v1697
        %v1699 = vrot.slane %v1685, %v1698
        %v1700 = vcombine.low %v1635, %v1651
        %v1701 = vcombine.high %v1635, %v1651
        %v1703 = vunpack.c.l.s4 1934713408
        %v1704 = vunpack.c.0.s8 %v1703
        %v1705 = vlaneseq
        %v1706 = vshrl.u32 %v1705, 7
        %v1707 = vsub.s32 %v1704, %v1706
        %v1708 = vrot.slane %v1700, %v1707
        %v1710 = vunpack.c.l.s4 1934713408
        %v1711 = vunpack.c.0.s8 %v1710
        %v1712 = vlaneseq
        %v1713 = vshrl.u32 %v1712, 7
        %v1714 = vsub.s32 %v1711, %v1713
        %v1715 = vrot.slane %v1701, %v1714
        %v1716 = vcombine.low %v1660, %v1676
        %v1717 = vcombine.high %v1660, %v1676
        %v1719 = vunpack.c.l.s4 1934713408
        %v1720 = vunpack.c.0.s8 %v1719
        %v1721 = vlaneseq
        %v1722 = vshrl.u32 %v1721, 7
        %v1723 = vsub.s32 %v1720, %v1722
        %v1724 = vrot.slane %v1716, %v1723
        %v1726 = vunpack.c.l.s4 1934713408
        %v1727 = vunpack.c.0.s8 %v1726
        %v1728 = vlaneseq
        %v1729 = vshrl.u32 %v1728, 7
        %v1730 = vsub.s32 %v1727, %v1729
        %v1731 = vrot.slane %v1717, %v1730
        %v1732 = vcombine.low %v1667, %v1683
        %v1733 = vcombine.high %v1667, %v1683
        %v1735 = vunpack.c.l.s4 1934713408
        %v1736 = vunpack.c.0.s8 %v1735
        %v1737 = vlaneseq
        %v1738 = vshrl.u32 %v1737, 7
        %v1739 = vsub.s32 %v1736, %v1738
        %v1740 = vrot.slane %v1732, %v1739
        %v1742 = vunpack.c.l.s4 1934713408
        %v1743 = vunpack.c.0.s8 %v1742
        %v1744 = vlaneseq
        %v1745 = vshrl.u32 %v1744, 7
        %v1746 = vsub.s32 %v1743, %v1745
        %v1747 = vrot.slane %v1733, %v1746
        %v1748 = vcombine.low %v1692, %v1724
        %v1749 = vcombine.high %v1692, %v1724
        %v1750 = vcombine.low %v1699, %v1731
        %v1751 = vcombine.high %v1699, %v1731
        %v1752 = vcombine.low %v1708, %v1740
        %v1753 = vcombine.high %v1708, %v1740
        %v1754 = vcombine.low %v1715, %v1747
        %v1755 = vcombine.high %v1715, %v1747
        %v1756 = vcombine.low %v1575, %v1583
        %v1757 = vcombine.high %v1575, %v1583
        %v1759 = vunpack.c.l.s4 1983009808
        %v1760 = vunpack.c.0.s8 %v1759
        %v1761 = vlaneseq
        %v1762 = vshrl.u32 %v1761, 7
        %v1763 = vsub.s32 %v1760, %v1762
        %v1764 = vrot.slane %v1756, %v1763
        %v1766 = vunpack.c.l.s4 1983009808
        %v1767 = vunpack.c.0.s8 %v1766
        %v1768 = vlaneseq
        %v1769 = vshrl.u32 %v1768, 7
        %v1770 = vsub.s32 %v1767, %v1769
        %v1771 = vrot.slane %v1757, %v1770
        %v1772 = vcombine.low %v1579, %v1587
        %v1773 = vcombine.high %v1579, %v1587
        %v1775 = vunpack.c.l.s4 1983009808
        %v1776 = vunpack.c.0.s8 %v1775
        %v1777 = vlaneseq
        %v1778 = vshrl.u32 %v1777, 7
        %v1779 = vsub.s32 %v1776, %v1778
        %v1780 = vrot.slane %v1772, %v1779
        %v1782 = vunpack.c.l.s4 1983009808
        %v1783 = vunpack.c.0.s8 %v1782
        %v1784 = vlaneseq
        %v1785 = vshrl.u32 %v1784, 7
        %v1786 = vsub.s32 %v1783, %v1785
        %v1787 = vrot.slane %v1773, %v1786
        %v1788 = vcombine.low %v1591, %v1599
        %v1789 = vcombine.high %v1591, %v1599
        %v1791 = vunpack.c.l.s4 1983009808
        %v1792 = vunpack.c.0.s8 %v1791
        %v1793 = vlaneseq
        %v1794 = vshrl.u32 %v1793, 7
        %v1795 = vsub.s32 %v1792, %v1794
        %v1796 = vrot.slane %v1788, %v1795
        %v1798 = vunpack.c.l.s4 1983009808
        %v1799 = vunpack.c.0.s8 %v1798
        %v1800 = vlaneseq
        %v1801 = vshrl.u32 %v1800, 7
        %v1802 = vsub.s32 %v1799, %v1801
        %v1803 = vrot.slane %v1789, %v1802
        %v1804 = vcombine.low %v1595, %v1603
        %v1805 = vcombine.high %v1595, %v1603
        %v1807 = vunpack.c.l.s4 1983009808
        %v1808 = vunpack.c.0.s8 %v1807
        %v1809 = vlaneseq
        %v1810 = vshrl.u32 %v1809, 7
        %v1811 = vsub.s32 %v1808, %v1810
        %v1812 = vrot.slane %v1804, %v1811
        %v1814 = vunpack.c.l.s4 1983009808
        %v1815 = vunpack.c.0.s8 %v1814
        %v1816 = vlaneseq
        %v1817 = vshrl.u32 %v1816, 7
        %v1818 = vsub.s32 %v1815, %v1817
        %v1819 = vrot.slane %v1805, %v1818
        %v1820 = vcombine.low %v1764, %v1780
        %v1821 = vcombine.high %v1764, %v1780
        %v1823 = vunpack.c.l.s4 1934713408
        %v1824 = vunpack.c.0.s8 %v1823
        %v1825 = vlaneseq
        %v1826 = vshrl.u32 %v1825, 7
        %v1827 = vsub.s32 %v1824, %v1826
        %v1828 = vrot.slane %v1820, %v1827
        %v1830 = vunpack.c.l.s4 1934713408
        %v1831 = vunpack.c.0.s8 %v1830
        %v1832 = vlaneseq
        %v1833 = vshrl.u32 %v1832, 7
        %v1834 = vsub.s32 %v1831, %v1833
        %v1835 = vrot.slane %v1821, %v1834
        %v1836 = vcombine.low %v1771, %v1787
        %v1837 = vcombine.high %v1771, %v1787
        %v1839 = vunpack.c.l.s4 1934713408
        %v1840 = vunpack.c.0.s8 %v1839
        %v1841 = vlaneseq
        %v1842 = vshrl.u32 %v1841, 7
        %v1843 = vsub.s32 %v1840, %v1842
        %v1844 = vrot.slane %v1836, %v1843
        %v1846 = vunpack.c.l.s4 1934713408
        %v1847 = vunpack.c.0.s8 %v1846
        %v1848 = vlaneseq
        %v1849 = vshrl.u32 %v1848, 7
        %v1850 = vsub.s32 %v1847, %v1849
        %v1851 = vrot.slane %v1837, %v1850
        %v1852 = vcombine.low %v1796, %v1812
        %v1853 = vcombine.high %v1796, %v1812
        %v1855 = vunpack.c.l.s4 1934713408
        %v1856 = vunpack.c.0.s8 %v1855
        %v1857 = vlaneseq
        %v1858 = vshrl.u32 %v1857, 7
        %v1859 = vsub.s32 %v1856, %v1858
        %v1860 = vrot.slane %v1852, %v1859
        %v1862 = vunpack.c.l.s4 1934713408
        %v1863 = vunpack.c.0.s8 %v1862
        %v1864 = vlaneseq
        %v1865 = vshrl.u32 %v1864, 7
        %v1866 = vsub.s32 %v1863, %v1865
        %v1867 = vrot.slane %v1853, %v1866
        %v1868 = vcombine.low %v1803, %v1819
        %v1869 = vcombine.high %v1803, %v1819
        %v1871 = vunpack.c.l.s4 1934713408
        %v1872 = vunpack.c.0.s8 %v1871
        %v1873 = vlaneseq
        %v1874 = vshrl.u32 %v1873, 7
        %v1875 = vsub.s32 %v1872, %v1874
        %v1876 = vrot.slane %v1868, %v1875
        %v1878 = vunpack.c.l.s4 1934713408
        %v1879 = vunpack.c.0.s8 %v1878
        %v1880 = vlaneseq
        %v1881 = vshrl.u32 %v1880, 7
        %v1882 = vsub.s32 %v1879, %v1881
        %v1883 = vrot.slane %v1869, %v1882
        %v1884 = vcombine.low %v1828, %v1860
        %v1885 = vcombine.high %v1828, %v1860
        %v1886 = vcombine.low %v1835, %v1867
        %v1887 = vcombine.high %v1835, %v1867
        %v1888 = vcombine.low %v1844, %v1876
        %v1889 = vcombine.high %v1844, %v1876
        %v1890 = vcombine.low %v1851, %v1883
        %v1891 = vcombine.high %v1851, %v1883
        %1893 = vrot.lane.b32.xlu0 %v1749, 16
        %v1894 = vpop.permute.xlu0 %1893
        %1897 = vrot.lane.b32.xlu0 %v1750, 32
        %v1898 = vpop.permute.xlu0 %1897
        %1901 = vrot.lane.b32.xlu0 %v1751, 48
        %v1902 = vpop.permute.xlu0 %1901
        %1905 = vrot.lane.b32.xlu0 %v1752, 64
        %v1906 = vpop.permute.xlu0 %1905
        %1909 = vrot.lane.b32.xlu0 %v1753, 80
        %v1910 = vpop.permute.xlu0 %1909
        %1913 = vrot.lane.b32.xlu0 %v1754, 96
        %v1914 = vpop.permute.xlu0 %1913
        %1917 = vrot.lane.b32.xlu0 %v1755, 112
        %v1918 = vpop.permute.xlu0 %1917
        %1921 = vrot.lane.b32.xlu0 %v1885, 16
        %v1922 = vpop.permute.xlu0 %1921
        %1925 = vrot.lane.b32.xlu0 %v1886, 32
        %v1926 = vpop.permute.xlu0 %1925
        %1929 = vrot.lane.b32.xlu0 %v1887, 48
        %v1930 = vpop.permute.xlu0 %1929
        %1933 = vrot.lane.b32.xlu0 %v1888, 64
        %v1934 = vpop.permute.xlu0 %1933
        %1937 = vrot.lane.b32.xlu0 %v1889, 80
        %v1938 = vpop.permute.xlu0 %1937
        %1941 = vrot.lane.b32.xlu0 %v1890, 96
        %v1942 = vpop.permute.xlu0 %1941
        %1945 = vrot.lane.b32.xlu0 %v1891, 112
        %v1946 = vpop.permute.xlu0 %1945
        %v1948 = vsel %vm1334, %v1748, %v1894
        %v1949 = vsel %vm503, %v1948, %v1898
        %v1950 = vsel %vm1337, %v1949, %v1902
        %v1951 = vsel %vm1339, %v1950, %v1906
        %v1952 = vsel %vm1341, %v1951, %v1910
        %v1953 = vsel %vm1343, %v1952, %v1914
        %v1954 = vsel %vm1345, %v1953, %v1918
        %v1955 = vsel %vm1334, %v1884, %v1922
        %v1956 = vsel %vm503, %v1955, %v1926
        %v1957 = vsel %vm1337, %v1956, %v1930
        %v1958 = vsel %vm1339, %v1957, %v1934
        %v1959 = vsel %vm1341, %v1958, %v1938
        %v1960 = vsel %vm1343, %v1959, %v1942
        %v1961 = vsel %vm1345, %v1960, %v1946
        %v1962 = vld [vmem:[#allocation9] sm:$0xf]
        %v1963 = vpack.c.bf16 %v1346, %v1346
        %v1964 = vpack.c.bf16 %v1353, %v1353
        %v1965 = vpack.c.bf16 %v1954, %v1954
        %v1966 = vpack.c.bf16 %v1961, %v1961
        %v1968 = vlaneseq
        %v1969 = vshrl.u32 %v1968, 7
        %v1970 = vsub.s32 0, %v1969
        %v1971 = vrot.slane %v739, %v1970
        %1972 = vset.pattern.permute.xlu0 0
        %1973 = vperm.xlu0 %1972, %v1971
        %v1974 = vpop.permute.xlu0 %1973
        %v1976 = vmul.f32 %v1974, %v1346
        %v1977 = vmul.f32 %v1974, %v1353
        %v1978 = vmul.f32 %v1974, %v1954
        %v1979 = vmul.f32 %v1974, %v1961
        %vm1980 = vcmask 64512
        %v1982 = vsel %vm1980, %v1962, 0
        %vm1984 = vcmask 1043456
        %v1986 = vsel %vm1984, %v1963, 0
        %v1989 = vsel %vm1984, %v1964, 0
        %v1992 = vsel %vm1984, %v1965, 0
        %v1995 = vsel %vm1984, %v1966, 0
        %1997 = vmatprep.subr.bf16.mxu0 %v1989
        %1998 = vmatpush1.bf16.msra.mxu0 %v1986
        %1999 = vmatprep.subr.bf16.mxu0 0
        %2000 = vmatpush1.bf16.msra.mxu0 0
        %2001 = vmatprep.subr.bf16.mxu0 0
        %2002 = vmatpush1.bf16.msra.mxu0 0
        %2003 = vmatprep.subr.bf16.mxu0 0
        %2004 = vmatpush1.bf16.msra.mxu0 0
        %2005 = vmatprep.subr.bf16.mxu0 0
        %2006 = vmatpush1.bf16.msra.mxu0 0
        %2007 = vmatprep.subr.bf16.mxu0 0
        %2008 = vmatpush1.bf16.msra.mxu0 0
        %2009 = vmatprep.subr.bf16.mxu0 0
        %2010 = vmatpush1.bf16.msra.mxu0 0
        %2011 = vmatprep.subr.bf16.mxu0 0
        %2012 = vmatpush1.bf16.msra.mxu0 0
        %2013 = vmatprep.subr.bf16.mxu0 0
        %2014 = vmatpush1.bf16.msra.mxu0 0
        %2015 = vmatprep.subr.bf16.mxu0 0
        %2016 = vmatpush1.bf16.msra.mxu0 0
        %2017 = vmatprep.subr.bf16.mxu0 0
        %2018 = vmatpush1.bf16.msra.mxu0 0
        %2019 = vmatprep.subr.bf16.mxu0 0
        %2020 = vmatpush1.bf16.msra.mxu0 0
        %2021 = vmatprep.subr.bf16.mxu0 0
        %2022 = vmatpush1.bf16.msra.mxu0 0
        %2023 = vmatprep.subr.bf16.mxu0 0
        %2024 = vmatpush1.bf16.msra.mxu0 0
        %2025 = vmatprep.subr.bf16.mxu0 0
        %2026 = vmatpush1.bf16.msra.mxu0 0
        %2027 = vmatprep.subr.bf16.mxu0 0
        %2028 = vmatpush1.bf16.msra.mxu0 0
        %2029 = vmatprep.mubr.bf16.mxu0 0
        %2030 = vmatmul.mubr.bf16.gmra.mrb[0].mxu0 %v1982
        %v2031 = vpop.f32.mrb[0].mxu0
        %v2032 = vadd.f32 %v1976, %v2031
        %v2033 = vpop.f32.mrb[0].mxu0
        %v2034 = vadd.f32 %v1977, %v2033
        %v2035 = vpop.f32.mrb[0].mxu0
        %v2036 = vpop.f32.mrb[0].mxu0
        %2037 = vdwg.mxu0
        %2038 = vmatprep.subr.bf16.mxu0 %v1995
        %2039 = vmatpush1.bf16.msra.mxu0 %v1992
        %2040 = vmatprep.subr.bf16.mxu0 0
        %2041 = vmatpush1.bf16.msra.mxu0 0
        %2042 = vmatprep.subr.bf16.mxu0 0
        %2043 = vmatpush1.bf16.msra.mxu0 0
        %2044 = vmatprep.subr.bf16.mxu0 0
        %2045 = vmatpush1.bf16.msra.mxu0 0
        %2046 = vmatprep.subr.bf16.mxu0 0
        %2047 = vmatpush1.bf16.msra.mxu0 0
        %2048 = vmatprep.subr.bf16.mxu0 0
        %2049 = vmatpush1.bf16.msra.mxu0 0
        %2050 = vmatprep.subr.bf16.mxu0 0
        %2051 = vmatpush1.bf16.msra.mxu0 0
        %2052 = vmatprep.subr.bf16.mxu0 0
        %2053 = vmatpush1.bf16.msra.mxu0 0
        %2054 = vmatprep.subr.bf16.mxu0 0
        %2055 = vmatpush1.bf16.msra.mxu0 0
        %2056 = vmatprep.subr.bf16.mxu0 0
        %2057 = vmatpush1.bf16.msra.mxu0 0
        %2058 = vmatprep.subr.bf16.mxu0 0
        %2059 = vmatpush1.bf16.msra.mxu0 0
        %2060 = vmatprep.subr.bf16.mxu0 0
        %2061 = vmatpush1.bf16.msra.mxu0 0
        %2062 = vmatprep.subr.bf16.mxu0 0
        %2063 = vmatpush1.bf16.msra.mxu0 0
        %2064 = vmatprep.subr.bf16.mxu0 0
        %2065 = vmatpush1.bf16.msra.mxu0 0
        %2066 = vmatprep.subr.bf16.mxu0 0
        %2067 = vmatpush1.bf16.msra.mxu0 0
        %2068 = vmatprep.subr.bf16.mxu0 0
        %2069 = vmatpush1.bf16.msra.mxu0 0
        %2070 = vmatprep.mubr.bf16.mxu0 0
        %2071 = vmatmul.mubr.bf16.gmra.mrb[0].mxu0 %v1982
        %v2072 = vpop.f32.mrb[0].mxu0
        %v2073 = vadd.f32 %v1978, %v2072
        %v2074 = vpop.f32.mrb[0].mxu0
        %v2075 = vadd.f32 %v1979, %v2074
        %v2076 = vpop.f32.mrb[0].mxu0
        %v2077 = vpop.f32.mrb[0].mxu0
        %2078 = vdwg.mxu0
        %2080 = vrot.lane.b32.xlu0 %v2032, 112
        %v2081 = vpop.permute.xlu0 %2080
        %2083 = vrot.lane.b32.xlu0 %v2032, 96
        %v2084 = vpop.permute.xlu0 %2083
        %2086 = vrot.lane.b32.xlu0 %v2032, 80
        %v2087 = vpop.permute.xlu0 %2086
        %2089 = vrot.lane.b32.xlu0 %v2032, 64
        %v2090 = vpop.permute.xlu0 %2089
        %2092 = vrot.lane.b32.xlu0 %v2032, 48
        %v2093 = vpop.permute.xlu0 %2092
        %2095 = vrot.lane.b32.xlu0 %v2032, 32
        %v2096 = vpop.permute.xlu0 %2095
        %2098 = vrot.lane.b32.xlu0 %v2032, 16
        %v2099 = vpop.permute.xlu0 %2098
        %2102 = vrot.lane.b32.xlu0 %v2034, 112
        %v2103 = vpop.permute.xlu0 %2102
        %2105 = vrot.lane.b32.xlu0 %v2034, 96
        %v2106 = vpop.permute.xlu0 %2105
        %2108 = vrot.lane.b32.xlu0 %v2034, 80
        %v2109 = vpop.permute.xlu0 %2108
        %2111 = vrot.lane.b32.xlu0 %v2034, 64
        %v2112 = vpop.permute.xlu0 %2111
        %2114 = vrot.lane.b32.xlu0 %v2034, 48
        %v2115 = vpop.permute.xlu0 %2114
        %2117 = vrot.lane.b32.xlu0 %v2034, 32
        %v2118 = vpop.permute.xlu0 %2117
        %2120 = vrot.lane.b32.xlu0 %v2034, 16
        %v2121 = vpop.permute.xlu0 %2120
        %v2123 = vcombine.low %v2032, %v2084
        %v2124 = vcombine.high %v2032, %v2084
        %v2126 = vunpack.c.l.s4 1983009808
        %v2127 = vunpack.c.0.s8 %v2126
        %v2128 = vlaneseq
        %v2129 = vshrl.u32 %v2128, 7
        %v2130 = vsub.s32 %v2127, %v2129
        %v2131 = vrot.slane %v2123, %v2130
        %v2133 = vunpack.c.l.s4 1983009808
        %v2134 = vunpack.c.0.s8 %v2133
        %v2135 = vlaneseq
        %v2136 = vshrl.u32 %v2135, 7
        %v2137 = vsub.s32 %v2134, %v2136
        %v2138 = vrot.slane %v2124, %v2137
        %v2139 = vcombine.low %v2081, %v2087
        %v2140 = vcombine.high %v2081, %v2087
        %v2142 = vunpack.c.l.s4 1983009808
        %v2143 = vunpack.c.0.s8 %v2142
        %v2144 = vlaneseq
        %v2145 = vshrl.u32 %v2144, 7
        %v2146 = vsub.s32 %v2143, %v2145
        %v2147 = vrot.slane %v2139, %v2146
        %v2149 = vunpack.c.l.s4 1983009808
        %v2150 = vunpack.c.0.s8 %v2149
        %v2151 = vlaneseq
        %v2152 = vshrl.u32 %v2151, 7
        %v2153 = vsub.s32 %v2150, %v2152
        %v2154 = vrot.slane %v2140, %v2153
        %v2155 = vcombine.low %v2090, %v2096
        %v2156 = vcombine.high %v2090, %v2096
        %v2158 = vunpack.c.l.s4 1983009808
        %v2159 = vunpack.c.0.s8 %v2158
        %v2160 = vlaneseq
        %v2161 = vshrl.u32 %v2160, 7
        %v2162 = vsub.s32 %v2159, %v2161
        %v2163 = vrot.slane %v2155, %v2162
        %v2165 = vunpack.c.l.s4 1983009808
        %v2166 = vunpack.c.0.s8 %v2165
        %v2167 = vlaneseq
        %v2168 = vshrl.u32 %v2167, 7
        %v2169 = vsub.s32 %v2166, %v2168
        %v2170 = vrot.slane %v2156, %v2169
        %v2171 = vcombine.low %v2093, %v2099
        %v2172 = vcombine.high %v2093, %v2099
        %v2174 = vunpack.c.l.s4 1983009808
        %v2175 = vunpack.c.0.s8 %v2174
        %v2176 = vlaneseq
        %v2177 = vshrl.u32 %v2176, 7
        %v2178 = vsub.s32 %v2175, %v2177
        %v2179 = vrot.slane %v2171, %v2178
        %v2181 = vunpack.c.l.s4 1983009808
        %v2182 = vunpack.c.0.s8 %v2181
        %v2183 = vlaneseq
        %v2184 = vshrl.u32 %v2183, 7
        %v2185 = vsub.s32 %v2182, %v2184
        %v2186 = vrot.slane %v2172, %v2185
        %v2187 = vcombine.low %v2131, %v2147
        %v2188 = vcombine.high %v2131, %v2147
        %v2190 = vunpack.c.l.s4 1934713408
        %v2191 = vunpack.c.0.s8 %v2190
        %v2192 = vlaneseq
        %v2193 = vshrl.u32 %v2192, 7
        %v2194 = vsub.s32 %v2191, %v2193
        %v2195 = vrot.slane %v2187, %v2194
        %v2197 = vunpack.c.l.s4 1934713408
        %v2198 = vunpack.c.0.s8 %v2197
        %v2199 = vlaneseq
        %v2200 = vshrl.u32 %v2199, 7
        %v2201 = vsub.s32 %v2198, %v2200
        %v2202 = vrot.slane %v2188, %v2201
        %v2203 = vcombine.low %v2138, %v2154
        %v2204 = vcombine.high %v2138, %v2154
        %v2206 = vunpack.c.l.s4 1934713408
        %v2207 = vunpack.c.0.s8 %v2206
        %v2208 = vlaneseq
        %v2209 = vshrl.u32 %v2208, 7
        %v2210 = vsub.s32 %v2207, %v2209
        %v2211 = vrot.slane %v2203, %v2210
        %v2213 = vunpack.c.l.s4 1934713408
        %v2214 = vunpack.c.0.s8 %v2213
        %v2215 = vlaneseq
        %v2216 = vshrl.u32 %v2215, 7
        %v2217 = vsub.s32 %v2214, %v2216
        %v2218 = vrot.slane %v2204, %v2217
        %v2219 = vcombine.low %v2163, %v2179
        %v2220 = vcombine.high %v2163, %v2179
        %v2222 = vunpack.c.l.s4 1934713408
        %v2223 = vunpack.c.0.s8 %v2222
        %v2224 = vlaneseq
        %v2225 = vshrl.u32 %v2224, 7
        %v2226 = vsub.s32 %v2223, %v2225
        %v2227 = vrot.slane %v2219, %v2226
        %v2229 = vunpack.c.l.s4 1934713408
        %v2230 = vunpack.c.0.s8 %v2229
        %v2231 = vlaneseq
        %v2232 = vshrl.u32 %v2231, 7
        %v2233 = vsub.s32 %v2230, %v2232
        %v2234 = vrot.slane %v2220, %v2233
        %v2235 = vcombine.low %v2170, %v2186
        %v2236 = vcombine.high %v2170, %v2186
        %v2238 = vunpack.c.l.s4 1934713408
        %v2239 = vunpack.c.0.s8 %v2238
        %v2240 = vlaneseq
        %v2241 = vshrl.u32 %v2240, 7
        %v2242 = vsub.s32 %v2239, %v2241
        %v2243 = vrot.slane %v2235, %v2242
        %v2245 = vunpack.c.l.s4 1934713408
        %v2246 = vunpack.c.0.s8 %v2245
        %v2247 = vlaneseq
        %v2248 = vshrl.u32 %v2247, 7
        %v2249 = vsub.s32 %v2246, %v2248
        %v2250 = vrot.slane %v2236, %v2249
        %v2251 = vcombine.low %v2195, %v2227
        %v2252 = vcombine.high %v2195, %v2227
        %v2253 = vcombine.low %v2202, %v2234
        %v2254 = vcombine.high %v2202, %v2234
        %v2255 = vcombine.low %v2211, %v2243
        %v2256 = vcombine.high %v2211, %v2243
        %v2257 = vcombine.low %v2218, %v2250
        %v2258 = vcombine.high %v2218, %v2250
        %v2259 = vcombine.low %v2034, %v2106
        %v2260 = vcombine.high %v2034, %v2106
        %v2262 = vunpack.c.l.s4 1983009808
        %v2263 = vunpack.c.0.s8 %v2262
        %v2264 = vlaneseq
        %v2265 = vshrl.u32 %v2264, 7
        %v2266 = vsub.s32 %v2263, %v2265
        %v2267 = vrot.slane %v2259, %v2266
        %v2269 = vunpack.c.l.s4 1983009808
        %v2270 = vunpack.c.0.s8 %v2269
        %v2271 = vlaneseq
        %v2272 = vshrl.u32 %v2271, 7
        %v2273 = vsub.s32 %v2270, %v2272
        %v2274 = vrot.slane %v2260, %v2273
        %v2275 = vcombine.low %v2103, %v2109
        %v2276 = vcombine.high %v2103, %v2109
        %v2278 = vunpack.c.l.s4 1983009808
        %v2279 = vunpack.c.0.s8 %v2278
        %v2280 = vlaneseq
        %v2281 = vshrl.u32 %v2280, 7
        %v2282 = vsub.s32 %v2279, %v2281
        %v2283 = vrot.slane %v2275, %v2282
        %v2285 = vunpack.c.l.s4 1983009808
        %v2286 = vunpack.c.0.s8 %v2285
        %v2287 = vlaneseq
        %v2288 = vshrl.u32 %v2287, 7
        %v2289 = vsub.s32 %v2286, %v2288
        %v2290 = vrot.slane %v2276, %v2289
        %v2291 = vcombine.low %v2112, %v2118
        %v2292 = vcombine.high %v2112, %v2118
        %v2294 = vunpack.c.l.s4 1983009808
        %v2295 = vunpack.c.0.s8 %v2294
        %v2296 = vlaneseq
        %v2297 = vshrl.u32 %v2296, 7
        %v2298 = vsub.s32 %v2295, %v2297
        %v2299 = vrot.slane %v2291, %v2298
        %v2301 = vunpack.c.l.s4 1983009808
        %v2302 = vunpack.c.0.s8 %v2301
        %v2303 = vlaneseq
        %v2304 = vshrl.u32 %v2303, 7
        %v2305 = vsub.s32 %v2302, %v2304
        %v2306 = vrot.slane %v2292, %v2305
        %v2307 = vcombine.low %v2115, %v2121
        %v2308 = vcombine.high %v2115, %v2121
        %v2310 = vunpack.c.l.s4 1983009808
        %v2311 = vunpack.c.0.s8 %v2310
        %v2312 = vlaneseq
        %v2313 = vshrl.u32 %v2312, 7
        %v2314 = vsub.s32 %v2311, %v2313
        %v2315 = vrot.slane %v2307, %v2314
        %v2317 = vunpack.c.l.s4 1983009808
        %v2318 = vunpack.c.0.s8 %v2317
        %v2319 = vlaneseq
        %v2320 = vshrl.u32 %v2319, 7
        %v2321 = vsub.s32 %v2318, %v2320
        %v2322 = vrot.slane %v2308, %v2321
        %v2323 = vcombine.low %v2267, %v2283
        %v2324 = vcombine.high %v2267, %v2283
        %v2326 = vunpack.c.l.s4 1934713408
        %v2327 = vunpack.c.0.s8 %v2326
        %v2328 = vlaneseq
        %v2329 = vshrl.u32 %v2328, 7
        %v2330 = vsub.s32 %v2327, %v2329
        %v2331 = vrot.slane %v2323, %v2330
        %v2333 = vunpack.c.l.s4 1934713408
        %v2334 = vunpack.c.0.s8 %v2333
        %v2335 = vlaneseq
        %v2336 = vshrl.u32 %v2335, 7
        %v2337 = vsub.s32 %v2334, %v2336
        %v2338 = vrot.slane %v2324, %v2337
        %v2339 = vcombine.low %v2274, %v2290
        %v2340 = vcombine.high %v2274, %v2290
        %v2342 = vunpack.c.l.s4 1934713408
        %v2343 = vunpack.c.0.s8 %v2342
        %v2344 = vlaneseq
        %v2345 = vshrl.u32 %v2344, 7
        %v2346 = vsub.s32 %v2343, %v2345
        %v2347 = vrot.slane %v2339, %v2346
        %v2349 = vunpack.c.l.s4 1934713408
        %v2350 = vunpack.c.0.s8 %v2349
        %v2351 = vlaneseq
        %v2352 = vshrl.u32 %v2351, 7
        %v2353 = vsub.s32 %v2350, %v2352
        %v2354 = vrot.slane %v2340, %v2353
        %v2355 = vcombine.low %v2299, %v2315
        %v2356 = vcombine.high %v2299, %v2315
        %v2358 = vunpack.c.l.s4 1934713408
        %v2359 = vunpack.c.0.s8 %v2358
        %v2360 = vlaneseq
        %v2361 = vshrl.u32 %v2360, 7
        %v2362 = vsub.s32 %v2359, %v2361
        %v2363 = vrot.slane %v2355, %v2362
        %v2365 = vunpack.c.l.s4 1934713408
        %v2366 = vunpack.c.0.s8 %v2365
        %v2367 = vlaneseq
        %v2368 = vshrl.u32 %v2367, 7
        %v2369 = vsub.s32 %v2366, %v2368
        %v2370 = vrot.slane %v2356, %v2369
        %v2371 = vcombine.low %v2306, %v2322
        %v2372 = vcombine.high %v2306, %v2322
        %v2374 = vunpack.c.l.s4 1934713408
        %v2375 = vunpack.c.0.s8 %v2374
        %v2376 = vlaneseq
        %v2377 = vshrl.u32 %v2376, 7
        %v2378 = vsub.s32 %v2375, %v2377
        %v2379 = vrot.slane %v2371, %v2378
        %v2381 = vunpack.c.l.s4 1934713408
        %v2382 = vunpack.c.0.s8 %v2381
        %v2383 = vlaneseq
        %v2384 = vshrl.u32 %v2383, 7
        %v2385 = vsub.s32 %v2382, %v2384
        %v2386 = vrot.slane %v2372, %v2385
        %v2387 = vcombine.low %v2331, %v2363
        %v2388 = vcombine.high %v2331, %v2363
        %v2389 = vcombine.low %v2338, %v2370
        %v2390 = vcombine.high %v2338, %v2370
        %v2391 = vcombine.low %v2347, %v2379
        %v2392 = vcombine.high %v2347, %v2379
        %v2393 = vcombine.low %v2354, %v2386
        %v2394 = vcombine.high %v2354, %v2386
        %v2395 = vcombine.high %v542, %v542
        %v2397 = vunpack.c.l.s4 1966171168
        %v2398 = vunpack.c.0.s8 %v2397
        %v2399 = vlaneseq
        %v2400 = vshrl.u32 %v2399, 7
        %v2401 = vsub.s32 %v2398, %v2400
        %v2402 = vrot.slane %v542, %v2401
        %v2404 = vunpack.c.l.s4 1966171168
        %v2405 = vunpack.c.0.s8 %v2404
        %v2406 = vlaneseq
        %v2407 = vshrl.u32 %v2406, 7
        %v2408 = vsub.s32 %v2405, %v2407
        %v2409 = vrot.slane %v2395, %v2408
        %v2410 = vcombine.high %v2402, %v2402
        %v2411 = vcombine.high %v2409, %v2409
        %v2413 = vunpack.c.l.s4 1966171168
        %v2414 = vunpack.c.0.s8 %v2413
        %v2415 = vlaneseq
        %v2416 = vshrl.u32 %v2415, 7
        %v2417 = vsub.s32 %v2414, %v2416
        %v2418 = vrot.slane %v2402, %v2417
        %v2420 = vunpack.c.l.s4 1966171168
        %v2421 = vunpack.c.0.s8 %v2420
        %v2422 = vlaneseq
        %v2423 = vshrl.u32 %v2422, 7
        %v2424 = vsub.s32 %v2421, %v2423
        %v2425 = vrot.slane %v2409, %v2424
        %v2427 = vunpack.c.l.s4 1966171168
        %v2428 = vunpack.c.0.s8 %v2427
        %v2429 = vlaneseq
        %v2430 = vshrl.u32 %v2429, 7
        %v2431 = vsub.s32 %v2428, %v2430
        %v2432 = vrot.slane %v2410, %v2431
        %v2434 = vunpack.c.l.s4 1966171168
        %v2435 = vunpack.c.0.s8 %v2434
        %v2436 = vlaneseq
        %v2437 = vshrl.u32 %v2436, 7
        %v2438 = vsub.s32 %v2435, %v2437
        %v2439 = vrot.slane %v2411, %v2438
        %v2440 = vcombine.high %v2418, %v2418
        %v2441 = vcombine.high %v2425, %v2425
        %v2442 = vcombine.high %v2432, %v2432
        %v2443 = vcombine.high %v2439, %v2439
        %v2444 = vlaneseq
        %v2445 = vshrl.u32 %v2444, 7
        %v2446 = vsub.s32 0, %v2445
        %v2447 = vrot.slane %v2418, %v2446
        %v2448 = vlaneseq
        %v2449 = vshrl.u32 %v2448, 7
        %v2450 = vsub.s32 0, %v2449
        %v2451 = vrot.slane %v2432, %v2450
        %v2452 = vlaneseq
        %v2453 = vshrl.u32 %v2452, 7
        %v2454 = vsub.s32 0, %v2453
        %v2455 = vrot.slane %v2440, %v2454
        %v2456 = vlaneseq
        %v2457 = vshrl.u32 %v2456, 7
        %v2458 = vsub.s32 0, %v2457
        %v2459 = vrot.slane %v2442, %v2458
        %v2460 = vlaneseq
        %v2461 = vshrl.u32 %v2460, 7
        %v2462 = vsub.s32 0, %v2461
        %v2463 = vrot.slane %v2425, %v2462
        %v2464 = vlaneseq
        %v2465 = vshrl.u32 %v2464, 7
        %v2466 = vsub.s32 0, %v2465
        %v2467 = vrot.slane %v2439, %v2466
        %v2468 = vlaneseq
        %v2469 = vshrl.u32 %v2468, 7
        %v2470 = vsub.s32 0, %v2469
        %v2471 = vrot.slane %v2441, %v2470
        %v2472 = vlaneseq
        %v2473 = vshrl.u32 %v2472, 7
        %v2474 = vsub.s32 0, %v2473
        %v2475 = vrot.slane %v2443, %v2474
        %v2484 = vmul.f32 %v2251, %v2447
        %v2485 = vmul.f32 %v2387, %v2447
        %v2486 = vmul.f32 %v2252, %v2451
        %v2487 = vmul.f32 %v2388, %v2451
        %v2488 = vmul.f32 %v2253, %v2455
        %v2489 = vmul.f32 %v2389, %v2455
        %v2490 = vmul.f32 %v2254, %v2459
        %v2491 = vmul.f32 %v2390, %v2459
        %v2492 = vmul.f32 %v2255, %v2463
        %v2493 = vmul.f32 %v2391, %v2463
        %v2494 = vmul.f32 %v2256, %v2467
        %v2495 = vmul.f32 %v2392, %v2467
        %v2496 = vmul.f32 %v2257, %v2471
        %v2497 = vmul.f32 %v2393, %v2471
        %v2498 = vmul.f32 %v2258, %v2475
        %v2499 = vmul.f32 %v2394, %v2475
        %v2500 = vsel %vm1334, %v2484, 0.0
        %2501 = vadd.xlane.f32.xlu0 %v2500
        %v2502 = vpop.xlane.xlu0 %2501
        %v2503 = vsel %vm1334, %v2485, 0.0
        %2504 = vadd.xlane.f32.xlu0 %v2503
        %v2505 = vpop.xlane.xlu0 %2504
        %v2506 = vsel %vm1334, %v2486, 0.0
        %2507 = vadd.xlane.f32.xlu0 %v2506
        %v2508 = vpop.xlane.xlu0 %2507
        %v2509 = vsel %vm1334, %v2487, 0.0
        %2510 = vadd.xlane.f32.xlu0 %v2509
        %v2511 = vpop.xlane.xlu0 %2510
        %v2512 = vsel %vm1334, %v2488, 0.0
        %2513 = vadd.xlane.f32.xlu0 %v2512
        %v2514 = vpop.xlane.xlu0 %2513
        %v2515 = vsel %vm1334, %v2489, 0.0
        %2516 = vadd.xlane.f32.xlu0 %v2515
        %v2517 = vpop.xlane.xlu0 %2516
        %v2518 = vsel %vm1334, %v2490, 0.0
        %2519 = vadd.xlane.f32.xlu0 %v2518
        %v2520 = vpop.xlane.xlu0 %2519
        %v2521 = vsel %vm1334, %v2491, 0.0
        %2522 = vadd.xlane.f32.xlu0 %v2521
        %v2523 = vpop.xlane.xlu0 %2522
        %v2524 = vsel %vm1334, %v2492, 0.0
        %2525 = vadd.xlane.f32.xlu0 %v2524
        %v2526 = vpop.xlane.xlu0 %2525
        %v2527 = vsel %vm1334, %v2493, 0.0
        %2528 = vadd.xlane.f32.xlu0 %v2527
        %v2529 = vpop.xlane.xlu0 %2528
        %v2530 = vsel %vm1334, %v2494, 0.0
        %2531 = vadd.xlane.f32.xlu0 %v2530
        %v2532 = vpop.xlane.xlu0 %2531
        %v2533 = vsel %vm1334, %v2495, 0.0
        %2534 = vadd.xlane.f32.xlu0 %v2533
        %v2535 = vpop.xlane.xlu0 %2534
        %v2536 = vsel %vm1334, %v2496, 0.0
        %2537 = vadd.xlane.f32.xlu0 %v2536
        %v2538 = vpop.xlane.xlu0 %2537
        %v2539 = vsel %vm1334, %v2497, 0.0
        %2540 = vadd.xlane.f32.xlu0 %v2539
        %v2541 = vpop.xlane.xlu0 %2540
        %v2542 = vsel %vm1334, %v2498, 0.0
        %2543 = vadd.xlane.f32.xlu0 %v2542
        %v2544 = vpop.xlane.xlu0 %2543
        %v2545 = vsel %vm1334, %v2499, 0.0
        %2546 = vadd.xlane.f32.xlu0 %v2545
        %v2547 = vpop.xlane.xlu0 %2546
        %v2564 = vlaneseq
        %v2565 = vand.u32 %v2564, 127
        %v2566 = vlaneseq
        %v2567 = vshrl.u32 %v2566, 7
        %v2568 = vsub.s32 %v2565, %v2567
        %v2569 = vrot.slane %v2502, %v2568
        %v2570 = vadd.s32 %v2565, 4294967288
        %v2571 = vlaneseq
        %v2572 = vshrl.u32 %v2571, 7
        %v2573 = vsub.s32 %v2570, %v2572
        %v2574 = vrot.slane %v2505, %v2573
        %vm2575 = vcmask 130112
        %v2576 = vsel %vm2575, %v2574, %v2569
        %v2577 = vlaneseq
        %v2578 = vshrl.u32 %v2577, 7
        %v2579 = vsub.s32 %v2565, %v2578
        %v2580 = vrot.slane %v2508, %v2579
        %v2581 = vlaneseq
        %v2582 = vshrl.u32 %v2581, 7
        %v2583 = vsub.s32 %v2570, %v2582
        %v2584 = vrot.slane %v2511, %v2583
        %v2585 = vsel %vm2575, %v2584, %v2580
        %v2586 = vlaneseq
        %v2587 = vshrl.u32 %v2586, 7
        %v2588 = vsub.s32 %v2565, %v2587
        %v2589 = vrot.slane %v2514, %v2588
        %v2590 = vlaneseq
        %v2591 = vshrl.u32 %v2590, 7
        %v2592 = vsub.s32 %v2570, %v2591
        %v2593 = vrot.slane %v2517, %v2592
        %v2594 = vsel %vm2575, %v2593, %v2589
        %v2595 = vlaneseq
        %v2596 = vshrl.u32 %v2595, 7
        %v2597 = vsub.s32 %v2565, %v2596
        %v2598 = vrot.slane %v2520, %v2597
        %v2599 = vlaneseq
        %v2600 = vshrl.u32 %v2599, 7
        %v2601 = vsub.s32 %v2570, %v2600
        %v2602 = vrot.slane %v2523, %v2601
        %v2603 = vsel %vm2575, %v2602, %v2598
        %v2604 = vlaneseq
        %v2605 = vshrl.u32 %v2604, 7
        %v2606 = vsub.s32 %v2565, %v2605
        %v2607 = vrot.slane %v2526, %v2606
        %v2608 = vlaneseq
        %v2609 = vshrl.u32 %v2608, 7
        %v2610 = vsub.s32 %v2570, %v2609
        %v2611 = vrot.slane %v2529, %v2610
        %v2612 = vsel %vm2575, %v2611, %v2607
        %v2613 = vlaneseq
        %v2614 = vshrl.u32 %v2613, 7
        %v2615 = vsub.s32 %v2565, %v2614
        %v2616 = vrot.slane %v2532, %v2615
        %v2617 = vlaneseq
        %v2618 = vshrl.u32 %v2617, 7
        %v2619 = vsub.s32 %v2570, %v2618
        %v2620 = vrot.slane %v2535, %v2619
        %v2621 = vsel %vm2575, %v2620, %v2616
        %v2622 = vlaneseq
        %v2623 = vshrl.u32 %v2622, 7
        %v2624 = vsub.s32 %v2565, %v2623
        %v2625 = vrot.slane %v2538, %v2624
        %v2626 = vlaneseq
        %v2627 = vshrl.u32 %v2626, 7
        %v2628 = vsub.s32 %v2570, %v2627
        %v2629 = vrot.slane %v2541, %v2628
        %v2630 = vsel %vm2575, %v2629, %v2625
        %v2631 = vlaneseq
        %v2632 = vshrl.u32 %v2631, 7
        %v2633 = vsub.s32 %v2565, %v2632
        %v2634 = vrot.slane %v2544, %v2633
        %v2635 = vlaneseq
        %v2636 = vshrl.u32 %v2635, 7
        %v2637 = vsub.s32 %v2570, %v2636
        %v2638 = vrot.slane %v2547, %v2637
        %v2639 = vsel %vm2575, %v2638, %v2634
        %vm2640 = vcmask 1041409
        %v2641 = vsel %vm2640, %v2585, %v2576
        %vm2642 = vcmask 1042434
        %v2643 = vsel %vm2642, %v2594, %v2641
        %vm2644 = vcmask 1043459
        %v2645 = vsel %vm2644, %v2603, %v2643
        %vm2646 = vcmask 1044484
        %v2647 = vsel %vm2646, %v2612, %v2645
        %vm2648 = vcmask 1045509
        %v2649 = vsel %vm2648, %v2621, %v2647
        %vm2650 = vcmask 1046534
        %v2651 = vsel %vm2650, %v2630, %v2649
        %vm2652 = vcmask 1047559
        %v2653 = vsel %vm2652, %v2639, %v2651
        %2655 = vst.msk [vmem:[#allocation2] sm:$0xff] %vm1334, %v2653
        %2657 = vrot.lane.b32.xlu0 %v2073, 112
        %v2658 = vpop.permute.xlu0 %2657
        %2660 = vrot.lane.b32.xlu0 %v2073, 96
        %v2661 = vpop.permute.xlu0 %2660
        %2663 = vrot.lane.b32.xlu0 %v2073, 80
        %v2664 = vpop.permute.xlu0 %2663
        %2666 = vrot.lane.b32.xlu0 %v2073, 64
        %v2667 = vpop.permute.xlu0 %2666
        %2669 = vrot.lane.b32.xlu0 %v2073, 48
        %v2670 = vpop.permute.xlu0 %2669
        %2672 = vrot.lane.b32.xlu0 %v2073, 32
        %v2673 = vpop.permute.xlu0 %2672
        %2675 = vrot.lane.b32.xlu0 %v2073, 16
        %v2676 = vpop.permute.xlu0 %2675
        %2679 = vrot.lane.b32.xlu0 %v2075, 112
        %v2680 = vpop.permute.xlu0 %2679
        %2682 = vrot.lane.b32.xlu0 %v2075, 96
        %v2683 = vpop.permute.xlu0 %2682
        %2685 = vrot.lane.b32.xlu0 %v2075, 80
        %v2686 = vpop.permute.xlu0 %2685
        %2688 = vrot.lane.b32.xlu0 %v2075, 64
        %v2689 = vpop.permute.xlu0 %2688
        %2691 = vrot.lane.b32.xlu0 %v2075, 48
        %v2692 = vpop.permute.xlu0 %2691
        %2694 = vrot.lane.b32.xlu0 %v2075, 32
        %v2695 = vpop.permute.xlu0 %2694
        %2697 = vrot.lane.b32.xlu0 %v2075, 16
        %v2698 = vpop.permute.xlu0 %2697
        %v2700 = vcombine.low %v2073, %v2661
        %v2701 = vcombine.high %v2073, %v2661
        %v2703 = vunpack.c.l.s4 1983009808
        %v2704 = vunpack.c.0.s8 %v2703
        %v2705 = vlaneseq
        %v2706 = vshrl.u32 %v2705, 7
        %v2707 = vsub.s32 %v2704, %v2706
        %v2708 = vrot.slane %v2700, %v2707
        %v2710 = vunpack.c.l.s4 1983009808
        %v2711 = vunpack.c.0.s8 %v2710
        %v2712 = vlaneseq
        %v2713 = vshrl.u32 %v2712, 7
        %v2714 = vsub.s32 %v2711, %v2713
        %v2715 = vrot.slane %v2701, %v2714
        %v2716 = vcombine.low %v2658, %v2664
        %v2717 = vcombine.high %v2658, %v2664
        %v2719 = vunpack.c.l.s4 1983009808
        %v2720 = vunpack.c.0.s8 %v2719
        %v2721 = vlaneseq
        %v2722 = vshrl.u32 %v2721, 7
        %v2723 = vsub.s32 %v2720, %v2722
        %v2724 = vrot.slane %v2716, %v2723
        %v2726 = vunpack.c.l.s4 1983009808
        %v2727 = vunpack.c.0.s8 %v2726
        %v2728 = vlaneseq
        %v2729 = vshrl.u32 %v2728, 7
        %v2730 = vsub.s32 %v2727, %v2729
        %v2731 = vrot.slane %v2717, %v2730
        %v2732 = vcombine.low %v2667, %v2673
        %v2733 = vcombine.high %v2667, %v2673
        %v2735 = vunpack.c.l.s4 1983009808
        %v2736 = vunpack.c.0.s8 %v2735
        %v2737 = vlaneseq
        %v2738 = vshrl.u32 %v2737, 7
        %v2739 = vsub.s32 %v2736, %v2738
        %v2740 = vrot.slane %v2732, %v2739
        %v2742 = vunpack.c.l.s4 1983009808
        %v2743 = vunpack.c.0.s8 %v2742
        %v2744 = vlaneseq
        %v2745 = vshrl.u32 %v2744, 7
        %v2746 = vsub.s32 %v2743, %v2745
        %v2747 = vrot.slane %v2733, %v2746
        %v2748 = vcombine.low %v2670, %v2676
        %v2749 = vcombine.high %v2670, %v2676
        %v2751 = vunpack.c.l.s4 1983009808
        %v2752 = vunpack.c.0.s8 %v2751
        %v2753 = vlaneseq
        %v2754 = vshrl.u32 %v2753, 7
        %v2755 = vsub.s32 %v2752, %v2754
        %v2756 = vrot.slane %v2748, %v2755
        %v2758 = vunpack.c.l.s4 1983009808
        %v2759 = vunpack.c.0.s8 %v2758
        %v2760 = vlaneseq
        %v2761 = vshrl.u32 %v2760, 7
        %v2762 = vsub.s32 %v2759, %v2761
        %v2763 = vrot.slane %v2749, %v2762
        %v2764 = vcombine.low %v2708, %v2724
        %v2765 = vcombine.high %v2708, %v2724
        %v2767 = vunpack.c.l.s4 1934713408
        %v2768 = vunpack.c.0.s8 %v2767
        %v2769 = vlaneseq
        %v2770 = vshrl.u32 %v2769, 7
        %v2771 = vsub.s32 %v2768, %v2770
        %v2772 = vrot.slane %v2764, %v2771
        %v2774 = vunpack.c.l.s4 1934713408
        %v2775 = vunpack.c.0.s8 %v2774
        %v2776 = vlaneseq
        %v2777 = vshrl.u32 %v2776, 7
        %v2778 = vsub.s32 %v2775, %v2777
        %v2779 = vrot.slane %v2765, %v2778
        %v2780 = vcombine.low %v2715, %v2731
        %v2781 = vcombine.high %v2715, %v2731
        %v2783 = vunpack.c.l.s4 1934713408
        %v2784 = vunpack.c.0.s8 %v2783
        %v2785 = vlaneseq
        %v2786 = vshrl.u32 %v2785, 7
        %v2787 = vsub.s32 %v2784, %v2786
        %v2788 = vrot.slane %v2780, %v2787
        %v2790 = vunpack.c.l.s4 1934713408
        %v2791 = vunpack.c.0.s8 %v2790
        %v2792 = vlaneseq
        %v2793 = vshrl.u32 %v2792, 7
        %v2794 = vsub.s32 %v2791, %v2793
        %v2795 = vrot.slane %v2781, %v2794
        %v2796 = vcombine.low %v2740, %v2756
        %v2797 = vcombine.high %v2740, %v2756
        %v2799 = vunpack.c.l.s4 1934713408
        %v2800 = vunpack.c.0.s8 %v2799
        %v2801 = vlaneseq
        %v2802 = vshrl.u32 %v2801, 7
        %v2803 = vsub.s32 %v2800, %v2802
        %v2804 = vrot.slane %v2796, %v2803
        %v2806 = vunpack.c.l.s4 1934713408
        %v2807 = vunpack.c.0.s8 %v2806
        %v2808 = vlaneseq
        %v2809 = vshrl.u32 %v2808, 7
        %v2810 = vsub.s32 %v2807, %v2809
        %v2811 = vrot.slane %v2797, %v2810
        %v2812 = vcombine.low %v2747, %v2763
        %v2813 = vcombine.high %v2747, %v2763
        %v2815 = vunpack.c.l.s4 1934713408
        %v2816 = vunpack.c.0.s8 %v2815
        %v2817 = vlaneseq
        %v2818 = vshrl.u32 %v2817, 7
        %v2819 = vsub.s32 %v2816, %v2818
        %v2820 = vrot.slane %v2812, %v2819
        %v2822 = vunpack.c.l.s4 1934713408
        %v2823 = vunpack.c.0.s8 %v2822
        %v2824 = vlaneseq
        %v2825 = vshrl.u32 %v2824, 7
        %v2826 = vsub.s32 %v2823, %v2825
        %v2827 = vrot.slane %v2813, %v2826
        %v2828 = vcombine.low %v2772, %v2804
        %v2829 = vcombine.high %v2772, %v2804
        %v2830 = vcombine.low %v2779, %v2811
        %v2831 = vcombine.high %v2779, %v2811
        %v2832 = vcombine.low %v2788, %v2820
        %v2833 = vcombine.high %v2788, %v2820
        %v2834 = vcombine.low %v2795, %v2827
        %v2835 = vcombine.high %v2795, %v2827
        %v2836 = vcombine.low %v2075, %v2683
        %v2837 = vcombine.high %v2075, %v2683
        %v2839 = vunpack.c.l.s4 1983009808
        %v2840 = vunpack.c.0.s8 %v2839
        %v2841 = vlaneseq
        %v2842 = vshrl.u32 %v2841, 7
        %v2843 = vsub.s32 %v2840, %v2842
        %v2844 = vrot.slane %v2836, %v2843
        %v2846 = vunpack.c.l.s4 1983009808
        %v2847 = vunpack.c.0.s8 %v2846
        %v2848 = vlaneseq
        %v2849 = vshrl.u32 %v2848, 7
        %v2850 = vsub.s32 %v2847, %v2849
        %v2851 = vrot.slane %v2837, %v2850
        %v2852 = vcombine.low %v2680, %v2686
        %v2853 = vcombine.high %v2680, %v2686
        %v2855 = vunpack.c.l.s4 1983009808
        %v2856 = vunpack.c.0.s8 %v2855
        %v2857 = vlaneseq
        %v2858 = vshrl.u32 %v2857, 7
        %v2859 = vsub.s32 %v2856, %v2858
        %v2860 = vrot.slane %v2852, %v2859
        %v2862 = vunpack.c.l.s4 1983009808
        %v2863 = vunpack.c.0.s8 %v2862
        %v2864 = vlaneseq
        %v2865 = vshrl.u32 %v2864, 7
        %v2866 = vsub.s32 %v2863, %v2865
        %v2867 = vrot.slane %v2853, %v2866
        %v2868 = vcombine.low %v2689, %v2695
        %v2869 = vcombine.high %v2689, %v2695
        %v2871 = vunpack.c.l.s4 1983009808
        %v2872 = vunpack.c.0.s8 %v2871
        %v2873 = vlaneseq
        %v2874 = vshrl.u32 %v2873, 7
        %v2875 = vsub.s32 %v2872, %v2874
        %v2876 = vrot.slane %v2868, %v2875
        %v2878 = vunpack.c.l.s4 1983009808
        %v2879 = vunpack.c.0.s8 %v2878
        %v2880 = vlaneseq
        %v2881 = vshrl.u32 %v2880, 7
        %v2882 = vsub.s32 %v2879, %v2881
        %v2883 = vrot.slane %v2869, %v2882
        %v2884 = vcombine.low %v2692, %v2698
        %v2885 = vcombine.high %v2692, %v2698
        %v2887 = vunpack.c.l.s4 1983009808
        %v2888 = vunpack.c.0.s8 %v2887
        %v2889 = vlaneseq
        %v2890 = vshrl.u32 %v2889, 7
        %v2891 = vsub.s32 %v2888, %v2890
        %v2892 = vrot.slane %v2884, %v2891
        %v2894 = vunpack.c.l.s4 1983009808
        %v2895 = vunpack.c.0.s8 %v2894
        %v2896 = vlaneseq
        %v2897 = vshrl.u32 %v2896, 7
        %v2898 = vsub.s32 %v2895, %v2897
        %v2899 = vrot.slane %v2885, %v2898
        %v2900 = vcombine.low %v2844, %v2860
        %v2901 = vcombine.high %v2844, %v2860
        %v2903 = vunpack.c.l.s4 1934713408
        %v2904 = vunpack.c.0.s8 %v2903
        %v2905 = vlaneseq
        %v2906 = vshrl.u32 %v2905, 7
        %v2907 = vsub.s32 %v2904, %v2906
        %v2908 = vrot.slane %v2900, %v2907
        %v2910 = vunpack.c.l.s4 1934713408
        %v2911 = vunpack.c.0.s8 %v2910
        %v2912 = vlaneseq
        %v2913 = vshrl.u32 %v2912, 7
        %v2914 = vsub.s32 %v2911, %v2913
        %v2915 = vrot.slane %v2901, %v2914
        %v2916 = vcombine.low %v2851, %v2867
        %v2917 = vcombine.high %v2851, %v2867
        %v2919 = vunpack.c.l.s4 1934713408
        %v2920 = vunpack.c.0.s8 %v2919
        %v2921 = vlaneseq
        %v2922 = vshrl.u32 %v2921, 7
        %v2923 = vsub.s32 %v2920, %v2922
        %v2924 = vrot.slane %v2916, %v2923
        %v2926 = vunpack.c.l.s4 1934713408
        %v2927 = vunpack.c.0.s8 %v2926
        %v2928 = vlaneseq
        %v2929 = vshrl.u32 %v2928, 7
        %v2930 = vsub.s32 %v2927, %v2929
        %v2931 = vrot.slane %v2917, %v2930
        %v2932 = vcombine.low %v2876, %v2892
        %v2933 = vcombine.high %v2876, %v2892
        %v2935 = vunpack.c.l.s4 1934713408
        %v2936 = vunpack.c.0.s8 %v2935
        %v2937 = vlaneseq
        %v2938 = vshrl.u32 %v2937, 7
        %v2939 = vsub.s32 %v2936, %v2938
        %v2940 = vrot.slane %v2932, %v2939
        %v2942 = vunpack.c.l.s4 1934713408
        %v2943 = vunpack.c.0.s8 %v2942
        %v2944 = vlaneseq
        %v2945 = vshrl.u32 %v2944, 7
        %v2946 = vsub.s32 %v2943, %v2945
        %v2947 = vrot.slane %v2933, %v2946
        %v2948 = vcombine.low %v2883, %v2899
        %v2949 = vcombine.high %v2883, %v2899
        %v2951 = vunpack.c.l.s4 1934713408
        %v2952 = vunpack.c.0.s8 %v2951
        %v2953 = vlaneseq
        %v2954 = vshrl.u32 %v2953, 7
        %v2955 = vsub.s32 %v2952, %v2954
        %v2956 = vrot.slane %v2948, %v2955
        %v2958 = vunpack.c.l.s4 1934713408
        %v2959 = vunpack.c.0.s8 %v2958
        %v2960 = vlaneseq
        %v2961 = vshrl.u32 %v2960, 7
        %v2962 = vsub.s32 %v2959, %v2961
        %v2963 = vrot.slane %v2949, %v2962
        %v2964 = vcombine.low %v2908, %v2940
        %v2965 = vcombine.high %v2908, %v2940
        %v2966 = vcombine.low %v2915, %v2947
        %v2967 = vcombine.high %v2915, %v2947
        %v2968 = vcombine.low %v2924, %v2956
        %v2969 = vcombine.high %v2924, %v2956
        %v2970 = vcombine.low %v2931, %v2963
        %v2971 = vcombine.high %v2931, %v2963
        %v2972 = vcombine.high %v545, %v545
        %v2974 = vunpack.c.l.s4 1966171168
        %v2975 = vunpack.c.0.s8 %v2974
        %v2976 = vlaneseq
        %v2977 = vshrl.u32 %v2976, 7
        %v2978 = vsub.s32 %v2975, %v2977
        %v2979 = vrot.slane %v545, %v2978
        %v2981 = vunpack.c.l.s4 1966171168
        %v2982 = vunpack.c.0.s8 %v2981
        %v2983 = vlaneseq
        %v2984 = vshrl.u32 %v2983, 7
        %v2985 = vsub.s32 %v2982, %v2984
        %v2986 = vrot.slane %v2972, %v2985
        %v2987 = vcombine.high %v2979, %v2979
        %v2988 = vcombine.high %v2986, %v2986
        %v2990 = vunpack.c.l.s4 1966171168
        %v2991 = vunpack.c.0.s8 %v2990
        %v2992 = vlaneseq
        %v2993 = vshrl.u32 %v2992, 7
        %v2994 = vsub.s32 %v2991, %v2993
        %v2995 = vrot.slane %v2979, %v2994
        %v2997 = vunpack.c.l.s4 1966171168
        %v2998 = vunpack.c.0.s8 %v2997
        %v2999 = vlaneseq
        %v3000 = vshrl.u32 %v2999, 7
        %v3001 = vsub.s32 %v2998, %v3000
        %v3002 = vrot.slane %v2986, %v3001
        %v3004 = vunpack.c.l.s4 1966171168
        %v3005 = vunpack.c.0.s8 %v3004
        %v3006 = vlaneseq
        %v3007 = vshrl.u32 %v3006, 7
        %v3008 = vsub.s32 %v3005, %v3007
        %v3009 = vrot.slane %v2987, %v3008
        %v3011 = vunpack.c.l.s4 1966171168
        %v3012 = vunpack.c.0.s8 %v3011
        %v3013 = vlaneseq
        %v3014 = vshrl.u32 %v3013, 7
        %v3015 = vsub.s32 %v3012, %v3014
        %v3016 = vrot.slane %v2988, %v3015
        %v3017 = vcombine.high %v2995, %v2995
        %v3018 = vcombine.high %v3002, %v3002
        %v3019 = vcombine.high %v3009, %v3009
        %v3020 = vcombine.high %v3016, %v3016
        %v3021 = vlaneseq
        %v3022 = vshrl.u32 %v3021, 7
        %v3023 = vsub.s32 0, %v3022
        %v3024 = vrot.slane %v2995, %v3023
        %v3025 = vlaneseq
        %v3026 = vshrl.u32 %v3025, 7
        %v3027 = vsub.s32 0, %v3026
        %v3028 = vrot.slane %v3009, %v3027
        %v3029 = vlaneseq
        %v3030 = vshrl.u32 %v3029, 7
        %v3031 = vsub.s32 0, %v3030
        %v3032 = vrot.slane %v3017, %v3031
        %v3033 = vlaneseq
        %v3034 = vshrl.u32 %v3033, 7
        %v3035 = vsub.s32 0, %v3034
        %v3036 = vrot.slane %v3019, %v3035
        %v3037 = vlaneseq
        %v3038 = vshrl.u32 %v3037, 7
        %v3039 = vsub.s32 0, %v3038
        %v3040 = vrot.slane %v3002, %v3039
        %v3041 = vlaneseq
        %v3042 = vshrl.u32 %v3041, 7
        %v3043 = vsub.s32 0, %v3042
        %v3044 = vrot.slane %v3016, %v3043
        %v3045 = vlaneseq
        %v3046 = vshrl.u32 %v3045, 7
        %v3047 = vsub.s32 0, %v3046
        %v3048 = vrot.slane %v3018, %v3047
        %v3049 = vlaneseq
        %v3050 = vshrl.u32 %v3049, 7
        %v3051 = vsub.s32 0, %v3050
        %v3052 = vrot.slane %v3020, %v3051
        %v3061 = vmul.f32 %v2828, %v3024
        %v3062 = vmul.f32 %v2964, %v3024
        %v3063 = vmul.f32 %v2829, %v3028
        %v3064 = vmul.f32 %v2965, %v3028
        %v3065 = vmul.f32 %v2830, %v3032
        %v3066 = vmul.f32 %v2966, %v3032
        %v3067 = vmul.f32 %v2831, %v3036
        %v3068 = vmul.f32 %v2967, %v3036
        %v3069 = vmul.f32 %v2832, %v3040
        %v3070 = vmul.f32 %v2968, %v3040
        %v3071 = vmul.f32 %v2833, %v3044
        %v3072 = vmul.f32 %v2969, %v3044
        %v3073 = vmul.f32 %v2834, %v3048
        %v3074 = vmul.f32 %v2970, %v3048
        %v3075 = vmul.f32 %v2835, %v3052
        %v3076 = vmul.f32 %v2971, %v3052
        %v3077 = vsel %vm1334, %v3061, 0.0
        %3078 = vadd.xlane.f32.xlu0 %v3077
        %v3079 = vpop.xlane.xlu0 %3078
        %v3080 = vsel %vm1334, %v3062, 0.0
        %3081 = vadd.xlane.f32.xlu0 %v3080
        %v3082 = vpop.xlane.xlu0 %3081
        %v3083 = vsel %vm1334, %v3063, 0.0
        %3084 = vadd.xlane.f32.xlu0 %v3083
        %v3085 = vpop.xlane.xlu0 %3084
        %v3086 = vsel %vm1334, %v3064, 0.0
        %3087 = vadd.xlane.f32.xlu0 %v3086
        %v3088 = vpop.xlane.xlu0 %3087
        %v3089 = vsel %vm1334, %v3065, 0.0
        %3090 = vadd.xlane.f32.xlu0 %v3089
        %v3091 = vpop.xlane.xlu0 %3090
        %v3092 = vsel %vm1334, %v3066, 0.0
        %3093 = vadd.xlane.f32.xlu0 %v3092
        %v3094 = vpop.xlane.xlu0 %3093
        %v3095 = vsel %vm1334, %v3067, 0.0
        %3096 = vadd.xlane.f32.xlu0 %v3095
        %v3097 = vpop.xlane.xlu0 %3096
        %v3098 = vsel %vm1334, %v3068, 0.0
        %3099 = vadd.xlane.f32.xlu0 %v3098
        %v3100 = vpop.xlane.xlu0 %3099
        %v3101 = vsel %vm1334, %v3069, 0.0
        %3102 = vadd.xlane.f32.xlu0 %v3101
        %v3103 = vpop.xlane.xlu0 %3102
        %v3104 = vsel %vm1334, %v3070, 0.0
        %3105 = vadd.xlane.f32.xlu0 %v3104
        %v3106 = vpop.xlane.xlu0 %3105
        %v3107 = vsel %vm1334, %v3071, 0.0
        %3108 = vadd.xlane.f32.xlu0 %v3107
        %v3109 = vpop.xlane.xlu0 %3108
        %v3110 = vsel %vm1334, %v3072, 0.0
        %3111 = vadd.xlane.f32.xlu0 %v3110
        %v3112 = vpop.xlane.xlu0 %3111
        %v3113 = vsel %vm1334, %v3073, 0.0
        %3114 = vadd.xlane.f32.xlu0 %v3113
        %v3115 = vpop.xlane.xlu0 %3114
        %v3116 = vsel %vm1334, %v3074, 0.0
        %3117 = vadd.xlane.f32.xlu0 %v3116
        %v3118 = vpop.xlane.xlu0 %3117
        %v3119 = vsel %vm1334, %v3075, 0.0
        %3120 = vadd.xlane.f32.xlu0 %v3119
        %v3121 = vpop.xlane.xlu0 %3120
        %v3122 = vsel %vm1334, %v3076, 0.0
        %3123 = vadd.xlane.f32.xlu0 %v3122
        %v3124 = vpop.xlane.xlu0 %3123
        %v3141 = vlaneseq
        %v3142 = vshrl.u32 %v3141, 7
        %v3143 = vsub.s32 %v2565, %v3142
        %v3144 = vrot.slane %v3079, %v3143
        %v3145 = vlaneseq
        %v3146 = vshrl.u32 %v3145, 7
        %v3147 = vsub.s32 %v2570, %v3146
        %v3148 = vrot.slane %v3082, %v3147
        %v3149 = vsel %vm2575, %v3148, %v3144
        %v3150 = vlaneseq
        %v3151 = vshrl.u32 %v3150, 7
        %v3152 = vsub.s32 %v2565, %v3151
        %v3153 = vrot.slane %v3085, %v3152
        %v3154 = vlaneseq
        %v3155 = vshrl.u32 %v3154, 7
        %v3156 = vsub.s32 %v2570, %v3155
        %v3157 = vrot.slane %v3088, %v3156
        %v3158 = vsel %vm2575, %v3157, %v3153
        %v3159 = vlaneseq
        %v3160 = vshrl.u32 %v3159, 7
        %v3161 = vsub.s32 %v2565, %v3160
        %v3162 = vrot.slane %v3091, %v3161
        %v3163 = vlaneseq
        %v3164 = vshrl.u32 %v3163, 7
        %v3165 = vsub.s32 %v2570, %v3164
        %v3166 = vrot.slane %v3094, %v3165
        %v3167 = vsel %vm2575, %v3166, %v3162
        %v3168 = vlaneseq
        %v3169 = vshrl.u32 %v3168, 7
        %v3170 = vsub.s32 %v2565, %v3169
        %v3171 = vrot.slane %v3097, %v3170
        %v3172 = vlaneseq
        %v3173 = vshrl.u32 %v3172, 7
        %v3174 = vsub.s32 %v2570, %v3173
        %v3175 = vrot.slane %v3100, %v3174
        %v3176 = vsel %vm2575, %v3175, %v3171
        %v3177 = vlaneseq
        %v3178 = vshrl.u32 %v3177, 7
        %v3179 = vsub.s32 %v2565, %v3178
        %v3180 = vrot.slane %v3103, %v3179
        %v3181 = vlaneseq
        %v3182 = vshrl.u32 %v3181, 7
        %v3183 = vsub.s32 %v2570, %v3182
        %v3184 = vrot.slane %v3106, %v3183
        %v3185 = vsel %vm2575, %v3184, %v3180
        %v3186 = vlaneseq
        %v3187 = vshrl.u32 %v3186, 7
        %v3188 = vsub.s32 %v2565, %v3187
        %v3189 = vrot.slane %v3109, %v3188
        %v3190 = vlaneseq
        %v3191 = vshrl.u32 %v3190, 7
        %v3192 = vsub.s32 %v2570, %v3191
        %v3193 = vrot.slane %v3112, %v3192
        %v3194 = vsel %vm2575, %v3193, %v3189
        %v3195 = vlaneseq
        %v3196 = vshrl.u32 %v3195, 7
        %v3197 = vsub.s32 %v2565, %v3196
        %v3198 = vrot.slane %v3115, %v3197
        %v3199 = vlaneseq
        %v3200 = vshrl.u32 %v3199, 7
        %v3201 = vsub.s32 %v2570, %v3200
        %v3202 = vrot.slane %v3118, %v3201
        %v3203 = vsel %vm2575, %v3202, %v3198
        %v3204 = vlaneseq
        %v3205 = vshrl.u32 %v3204, 7
        %v3206 = vsub.s32 %v2565, %v3205
        %v3207 = vrot.slane %v3121, %v3206
        %v3208 = vlaneseq
        %v3209 = vshrl.u32 %v3208, 7
        %v3210 = vsub.s32 %v2570, %v3209
        %v3211 = vrot.slane %v3124, %v3210
        %v3212 = vsel %vm2575, %v3211, %v3207
        %v3213 = vsel %vm2640, %v3158, %v3149
        %v3214 = vsel %vm2642, %v3167, %v3213
        %v3215 = vsel %vm2644, %v3176, %v3214
        %v3216 = vsel %vm2646, %v3185, %v3215
        %v3217 = vsel %vm2648, %v3194, %v3216
        %v3218 = vsel %vm2650, %v3203, %v3217
        %v3219 = vsel %vm2652, %v3212, %v3218
        %3221 = vst.msk [vmem:[#allocation2 + $0x8] sm:$0xff] %vm1334, %v3219
        %s3223 = sor.u32 256, 80
        %3224 = vbcast.lane.b32.xlu0 %v743, %s3223
        %v3225 = vpop.permute.xlu0 %3224
        %s3227 = sor.u32 256, 88
        %3228 = vbcast.lane.b32.xlu0 %v743, %s3227
        %v3229 = vpop.permute.xlu0 %3228
        %s3231 = sor.u32 256, 80
        %3232 = vbcast.lane.b32.xlu0 %v755, %s3231
        %v3233 = vpop.permute.xlu0 %3232
        %s3235 = sor.u32 256, 88
        %3236 = vbcast.lane.b32.xlu0 %v755, %s3235
        %v3237 = vpop.permute.xlu0 %3236
        %s3239 = sor.u32 256, 80
        %3240 = vbcast.lane.b32.xlu0 %v767, %s3239
        %v3241 = vpop.permute.xlu0 %3240
        %s3243 = sor.u32 256, 88
        %3244 = vbcast.lane.b32.xlu0 %v767, %s3243
        %v3245 = vpop.permute.xlu0 %3244
        %s3247 = sor.u32 256, 80
        %3248 = vbcast.lane.b32.xlu0 %v779, %s3247
        %v3249 = vpop.permute.xlu0 %3248
        %s3251 = sor.u32 256, 88
        %3252 = vbcast.lane.b32.xlu0 %v779, %s3251
        %v3253 = vpop.permute.xlu0 %3252
        %s3255 = sor.u32 256, 80
        %3256 = vbcast.lane.b32.xlu0 %v791, %s3255
        %v3257 = vpop.permute.xlu0 %3256
        %s3259 = sor.u32 256, 88
        %3260 = vbcast.lane.b32.xlu0 %v791, %s3259
        %v3261 = vpop.permute.xlu0 %3260
        %s3263 = sor.u32 256, 80
        %3264 = vbcast.lane.b32.xlu0 %v803, %s3263
        %v3265 = vpop.permute.xlu0 %3264
        %s3267 = sor.u32 256, 88
        %3268 = vbcast.lane.b32.xlu0 %v803, %s3267
        %v3269 = vpop.permute.xlu0 %3268
        %s3271 = sor.u32 256, 80
        %3272 = vbcast.lane.b32.xlu0 %v815, %s3271
        %v3273 = vpop.permute.xlu0 %3272
        %s3275 = sor.u32 256, 88
        %3276 = vbcast.lane.b32.xlu0 %v815, %s3275
        %v3277 = vpop.permute.xlu0 %3276
        %s3279 = sor.u32 256, 80
        %3280 = vbcast.lane.b32.xlu0 %v827, %s3279
        %v3281 = vpop.permute.xlu0 %3280
        %s3283 = sor.u32 256, 88
        %3284 = vbcast.lane.b32.xlu0 %v827, %s3283
        %v3285 = vpop.permute.xlu0 %3284
        %v3286 = vmul.f32 %v3225, %v889
        %v3287 = vmul.f32 %v3229, %v889
        %v3288 = vmul.f32 %v3233, %v893
        %v3289 = vmul.f32 %v3237, %v893
        %v3290 = vmul.f32 %v3241, %v897
        %v3291 = vmul.f32 %v3245, %v897
        %v3292 = vmul.f32 %v3249, %v901
        %v3293 = vmul.f32 %v3253, %v901
        %v3294 = vmul.f32 %v3257, %v905
        %v3295 = vmul.f32 %v3261, %v905
        %v3296 = vmul.f32 %v3265, %v909
        %v3297 = vmul.f32 %v3269, %v909
        %v3298 = vmul.f32 %v3273, %v913
        %v3299 = vmul.f32 %v3277, %v913
        %v3300 = vmul.f32 %v3281, %v917
        %v3301 = vmul.f32 %v3285, %v917
        %3318 = vrot.lane.b32.xlu0 %v3286, 80
        %v3319 = vpop.permute.xlu0 %3318
        %3320 = vrot.lane.b32.xlu0 %v3287, 80
        %v3321 = vpop.permute.xlu0 %3320
        %3322 = vrot.lane.b32.xlu0 %v3288, 80
        %v3323 = vpop.permute.xlu0 %3322
        %3324 = vrot.lane.b32.xlu0 %v3289, 80
        %v3325 = vpop.permute.xlu0 %3324
        %3326 = vrot.lane.b32.xlu0 %v3290, 80
        %v3327 = vpop.permute.xlu0 %3326
        %3328 = vrot.lane.b32.xlu0 %v3291, 80
        %v3329 = vpop.permute.xlu0 %3328
        %3330 = vrot.lane.b32.xlu0 %v3292, 80
        %v3331 = vpop.permute.xlu0 %3330
        %3332 = vrot.lane.b32.xlu0 %v3293, 80
        %v3333 = vpop.permute.xlu0 %3332
        %3334 = vrot.lane.b32.xlu0 %v3294, 80
        %v3335 = vpop.permute.xlu0 %3334
        %3336 = vrot.lane.b32.xlu0 %v3295, 80
        %v3337 = vpop.permute.xlu0 %3336
        %3338 = vrot.lane.b32.xlu0 %v3296, 80
        %v3339 = vpop.permute.xlu0 %3338
        %3340 = vrot.lane.b32.xlu0 %v3297, 80
        %v3341 = vpop.permute.xlu0 %3340
        %3342 = vrot.lane.b32.xlu0 %v3298, 80
        %v3343 = vpop.permute.xlu0 %3342
        %3344 = vrot.lane.b32.xlu0 %v3299, 80
        %v3345 = vpop.permute.xlu0 %3344
        %3346 = vrot.lane.b32.xlu0 %v3300, 80
        %v3347 = vpop.permute.xlu0 %3346
        %3348 = vrot.lane.b32.xlu0 %v3301, 80
        %v3349 = vpop.permute.xlu0 %3348
        %v3366 = vcombine.low %v3319, %v3327
        %v3367 = vcombine.high %v3319, %v3327
        %v3369 = vunpack.c.l.s4 1983009808
        %v3370 = vunpack.c.0.s8 %v3369
        %v3371 = vlaneseq
        %v3372 = vshrl.u32 %v3371, 7
        %v3373 = vsub.s32 %v3370, %v3372
        %v3374 = vrot.slane %v3366, %v3373
        %v3376 = vunpack.c.l.s4 1983009808
        %v3377 = vunpack.c.0.s8 %v3376
        %v3378 = vlaneseq
        %v3379 = vshrl.u32 %v3378, 7
        %v3380 = vsub.s32 %v3377, %v3379
        %v3381 = vrot.slane %v3367, %v3380
        %v3382 = vcombine.low %v3323, %v3331
        %v3383 = vcombine.high %v3323, %v3331
        %v3385 = vunpack.c.l.s4 1983009808
        %v3386 = vunpack.c.0.s8 %v3385
        %v3387 = vlaneseq
        %v3388 = vshrl.u32 %v3387, 7
        %v3389 = vsub.s32 %v3386, %v3388
        %v3390 = vrot.slane %v3382, %v3389
        %v3392 = vunpack.c.l.s4 1983009808
        %v3393 = vunpack.c.0.s8 %v3392
        %v3394 = vlaneseq
        %v3395 = vshrl.u32 %v3394, 7
        %v3396 = vsub.s32 %v3393, %v3395
        %v3397 = vrot.slane %v3383, %v3396
        %v3398 = vcombine.low %v3335, %v3343
        %v3399 = vcombine.high %v3335, %v3343
        %v3401 = vunpack.c.l.s4 1983009808
        %v3402 = vunpack.c.0.s8 %v3401
        %v3403 = vlaneseq
        %v3404 = vshrl.u32 %v3403, 7
        %v3405 = vsub.s32 %v3402, %v3404
        %v3406 = vrot.slane %v3398, %v3405
        %v3408 = vunpack.c.l.s4 1983009808
        %v3409 = vunpack.c.0.s8 %v3408
        %v3410 = vlaneseq
        %v3411 = vshrl.u32 %v3410, 7
        %v3412 = vsub.s32 %v3409, %v3411
        %v3413 = vrot.slane %v3399, %v3412
        %v3414 = vcombine.low %v3339, %v3347
        %v3415 = vcombine.high %v3339, %v3347
        %v3417 = vunpack.c.l.s4 1983009808
        %v3418 = vunpack.c.0.s8 %v3417
        %v3419 = vlaneseq
        %v3420 = vshrl.u32 %v3419, 7
        %v3421 = vsub.s32 %v3418, %v3420
        %v3422 = vrot.slane %v3414, %v3421
        %v3424 = vunpack.c.l.s4 1983009808
        %v3425 = vunpack.c.0.s8 %v3424
        %v3426 = vlaneseq
        %v3427 = vshrl.u32 %v3426, 7
        %v3428 = vsub.s32 %v3425, %v3427
        %v3429 = vrot.slane %v3415, %v3428
        %v3430 = vcombine.low %v3374, %v3390
        %v3431 = vcombine.high %v3374, %v3390
        %v3433 = vunpack.c.l.s4 1934713408
        %v3434 = vunpack.c.0.s8 %v3433
        %v3435 = vlaneseq
        %v3436 = vshrl.u32 %v3435, 7
        %v3437 = vsub.s32 %v3434, %v3436
        %v3438 = vrot.slane %v3430, %v3437
        %v3440 = vunpack.c.l.s4 1934713408
        %v3441 = vunpack.c.0.s8 %v3440
        %v3442 = vlaneseq
        %v3443 = vshrl.u32 %v3442, 7
        %v3444 = vsub.s32 %v3441, %v3443
        %v3445 = vrot.slane %v3431, %v3444
        %v3446 = vcombine.low %v3381, %v3397
        %v3447 = vcombine.high %v3381, %v3397
        %v3449 = vunpack.c.l.s4 1934713408
        %v3450 = vunpack.c.0.s8 %v3449
        %v3451 = vlaneseq
        %v3452 = vshrl.u32 %v3451, 7
        %v3453 = vsub.s32 %v3450, %v3452
        %v3454 = vrot.slane %v3446, %v3453
        %v3456 = vunpack.c.l.s4 1934713408
        %v3457 = vunpack.c.0.s8 %v3456
        %v3458 = vlaneseq
        %v3459 = vshrl.u32 %v3458, 7
        %v3460 = vsub.s32 %v3457, %v3459
        %v3461 = vrot.slane %v3447, %v3460
        %v3462 = vcombine.low %v3406, %v3422
        %v3463 = vcombine.high %v3406, %v3422
        %v3465 = vunpack.c.l.s4 1934713408
        %v3466 = vunpack.c.0.s8 %v3465
        %v3467 = vlaneseq
        %v3468 = vshrl.u32 %v3467, 7
        %v3469 = vsub.s32 %v3466, %v3468
        %v3470 = vrot.slane %v3462, %v3469
        %v3472 = vunpack.c.l.s4 1934713408
        %v3473 = vunpack.c.0.s8 %v3472
        %v3474 = vlaneseq
        %v3475 = vshrl.u32 %v3474, 7
        %v3476 = vsub.s32 %v3473, %v3475
        %v3477 = vrot.slane %v3463, %v3476
        %v3478 = vcombine.low %v3413, %v3429
        %v3479 = vcombine.high %v3413, %v3429
        %v3481 = vunpack.c.l.s4 1934713408
        %v3482 = vunpack.c.0.s8 %v3481
        %v3483 = vlaneseq
        %v3484 = vshrl.u32 %v3483, 7
        %v3485 = vsub.s32 %v3482, %v3484
        %v3486 = vrot.slane %v3478, %v3485
        %v3488 = vunpack.c.l.s4 1934713408
        %v3489 = vunpack.c.0.s8 %v3488
        %v3490 = vlaneseq
        %v3491 = vshrl.u32 %v3490, 7
        %v3492 = vsub.s32 %v3489, %v3491
        %v3493 = vrot.slane %v3479, %v3492
        %v3494 = vcombine.low %v3438, %v3470
        %v3495 = vcombine.high %v3438, %v3470
        %v3496 = vcombine.low %v3445, %v3477
        %v3497 = vcombine.high %v3445, %v3477
        %v3498 = vcombine.low %v3454, %v3486
        %v3499 = vcombine.high %v3454, %v3486
        %v3500 = vcombine.low %v3461, %v3493
        %v3501 = vcombine.high %v3461, %v3493
        %v3502 = vcombine.low %v3321, %v3329
        %v3503 = vcombine.high %v3321, %v3329
        %v3505 = vunpack.c.l.s4 1983009808
        %v3506 = vunpack.c.0.s8 %v3505
        %v3507 = vlaneseq
        %v3508 = vshrl.u32 %v3507, 7
        %v3509 = vsub.s32 %v3506, %v3508
        %v3510 = vrot.slane %v3502, %v3509
        %v3512 = vunpack.c.l.s4 1983009808
        %v3513 = vunpack.c.0.s8 %v3512
        %v3514 = vlaneseq
        %v3515 = vshrl.u32 %v3514, 7
        %v3516 = vsub.s32 %v3513, %v3515
        %v3517 = vrot.slane %v3503, %v3516
        %v3518 = vcombine.low %v3325, %v3333
        %v3519 = vcombine.high %v3325, %v3333
        %v3521 = vunpack.c.l.s4 1983009808
        %v3522 = vunpack.c.0.s8 %v3521
        %v3523 = vlaneseq
        %v3524 = vshrl.u32 %v3523, 7
        %v3525 = vsub.s32 %v3522, %v3524
        %v3526 = vrot.slane %v3518, %v3525
        %v3528 = vunpack.c.l.s4 1983009808
        %v3529 = vunpack.c.0.s8 %v3528
        %v3530 = vlaneseq
        %v3531 = vshrl.u32 %v3530, 7
        %v3532 = vsub.s32 %v3529, %v3531
        %v3533 = vrot.slane %v3519, %v3532
        %v3534 = vcombine.low %v3337, %v3345
        %v3535 = vcombine.high %v3337, %v3345
        %v3537 = vunpack.c.l.s4 1983009808
        %v3538 = vunpack.c.0.s8 %v3537
        %v3539 = vlaneseq
        %v3540 = vshrl.u32 %v3539, 7
        %v3541 = vsub.s32 %v3538, %v3540
        %v3542 = vrot.slane %v3534, %v3541
        %v3544 = vunpack.c.l.s4 1983009808
        %v3545 = vunpack.c.0.s8 %v3544
        %v3546 = vlaneseq
        %v3547 = vshrl.u32 %v3546, 7
        %v3548 = vsub.s32 %v3545, %v3547
        %v3549 = vrot.slane %v3535, %v3548
        %v3550 = vcombine.low %v3341, %v3349
        %v3551 = vcombine.high %v3341, %v3349
        %v3553 = vunpack.c.l.s4 1983009808
        %v3554 = vunpack.c.0.s8 %v3553
        %v3555 = vlaneseq
        %v3556 = vshrl.u32 %v3555, 7
        %v3557 = vsub.s32 %v3554, %v3556
        %v3558 = vrot.slane %v3550, %v3557
        %v3560 = vunpack.c.l.s4 1983009808
        %v3561 = vunpack.c.0.s8 %v3560
        %v3562 = vlaneseq
        %v3563 = vshrl.u32 %v3562, 7
        %v3564 = vsub.s32 %v3561, %v3563
        %v3565 = vrot.slane %v3551, %v3564
        %v3566 = vcombine.low %v3510, %v3526
        %v3567 = vcombine.high %v3510, %v3526
        %v3569 = vunpack.c.l.s4 1934713408
        %v3570 = vunpack.c.0.s8 %v3569
        %v3571 = vlaneseq
        %v3572 = vshrl.u32 %v3571, 7
        %v3573 = vsub.s32 %v3570, %v3572
        %v3574 = vrot.slane %v3566, %v3573
        %v3576 = vunpack.c.l.s4 1934713408
        %v3577 = vunpack.c.0.s8 %v3576
        %v3578 = vlaneseq
        %v3579 = vshrl.u32 %v3578, 7
        %v3580 = vsub.s32 %v3577, %v3579
        %v3581 = vrot.slane %v3567, %v3580
        %v3582 = vcombine.low %v3517, %v3533
        %v3583 = vcombine.high %v3517, %v3533
        %v3585 = vunpack.c.l.s4 1934713408
        %v3586 = vunpack.c.0.s8 %v3585
        %v3587 = vlaneseq
        %v3588 = vshrl.u32 %v3587, 7
        %v3589 = vsub.s32 %v3586, %v3588
        %v3590 = vrot.slane %v3582, %v3589
        %v3592 = vunpack.c.l.s4 1934713408
        %v3593 = vunpack.c.0.s8 %v3592
        %v3594 = vlaneseq
        %v3595 = vshrl.u32 %v3594, 7
        %v3596 = vsub.s32 %v3593, %v3595
        %v3597 = vrot.slane %v3583, %v3596
        %v3598 = vcombine.low %v3542, %v3558
        %v3599 = vcombine.high %v3542, %v3558
        %v3601 = vunpack.c.l.s4 1934713408
        %v3602 = vunpack.c.0.s8 %v3601
        %v3603 = vlaneseq
        %v3604 = vshrl.u32 %v3603, 7
        %v3605 = vsub.s32 %v3602, %v3604
        %v3606 = vrot.slane %v3598, %v3605
        %v3608 = vunpack.c.l.s4 1934713408
        %v3609 = vunpack.c.0.s8 %v3608
        %v3610 = vlaneseq
        %v3611 = vshrl.u32 %v3610, 7
        %v3612 = vsub.s32 %v3609, %v3611
        %v3613 = vrot.slane %v3599, %v3612
        %v3614 = vcombine.low %v3549, %v3565
        %v3615 = vcombine.high %v3549, %v3565
        %v3617 = vunpack.c.l.s4 1934713408
        %v3618 = vunpack.c.0.s8 %v3617
        %v3619 = vlaneseq
        %v3620 = vshrl.u32 %v3619, 7
        %v3621 = vsub.s32 %v3618, %v3620
        %v3622 = vrot.slane %v3614, %v3621
        %v3624 = vunpack.c.l.s4 1934713408
        %v3625 = vunpack.c.0.s8 %v3624
        %v3626 = vlaneseq
        %v3627 = vshrl.u32 %v3626, 7
        %v3628 = vsub.s32 %v3625, %v3627
        %v3629 = vrot.slane %v3615, %v3628
        %v3630 = vcombine.low %v3574, %v3606
        %v3631 = vcombine.high %v3574, %v3606
        %v3632 = vcombine.low %v3581, %v3613
        %v3633 = vcombine.high %v3581, %v3613
        %v3634 = vcombine.low %v3590, %v3622
        %v3635 = vcombine.high %v3590, %v3622
        %v3636 = vcombine.low %v3597, %v3629
        %v3637 = vcombine.high %v3597, %v3629
        %3639 = vrot.lane.b32.xlu0 %v3495, 16
        %v3640 = vpop.permute.xlu0 %3639
        %3643 = vrot.lane.b32.xlu0 %v3496, 32
        %v3644 = vpop.permute.xlu0 %3643
        %3647 = vrot.lane.b32.xlu0 %v3497, 48
        %v3648 = vpop.permute.xlu0 %3647
        %3651 = vrot.lane.b32.xlu0 %v3498, 64
        %v3652 = vpop.permute.xlu0 %3651
        %3655 = vrot.lane.b32.xlu0 %v3499, 80
        %v3656 = vpop.permute.xlu0 %3655
        %3659 = vrot.lane.b32.xlu0 %v3500, 96
        %v3660 = vpop.permute.xlu0 %3659
        %3663 = vrot.lane.b32.xlu0 %v3501, 112
        %v3664 = vpop.permute.xlu0 %3663
        %3667 = vrot.lane.b32.xlu0 %v3631, 16
        %v3668 = vpop.permute.xlu0 %3667
        %3671 = vrot.lane.b32.xlu0 %v3632, 32
        %v3672 = vpop.permute.xlu0 %3671
        %3675 = vrot.lane.b32.xlu0 %v3633, 48
        %v3676 = vpop.permute.xlu0 %3675
        %3679 = vrot.lane.b32.xlu0 %v3634, 64
        %v3680 = vpop.permute.xlu0 %3679
        %3683 = vrot.lane.b32.xlu0 %v3635, 80
        %v3684 = vpop.permute.xlu0 %3683
        %3687 = vrot.lane.b32.xlu0 %v3636, 96
        %v3688 = vpop.permute.xlu0 %3687
        %3691 = vrot.lane.b32.xlu0 %v3637, 112
        %v3692 = vpop.permute.xlu0 %3691
        %v3694 = vsel %vm1334, %v3494, %v3640
        %v3695 = vsel %vm503, %v3694, %v3644
        %v3696 = vsel %vm1337, %v3695, %v3648
        %v3697 = vsel %vm1339, %v3696, %v3652
        %v3698 = vsel %vm1341, %v3697, %v3656
        %v3699 = vsel %vm1343, %v3698, %v3660
        %v3700 = vsel %vm1345, %v3699, %v3664
        %v3701 = vsel %vm1334, %v3630, %v3668
        %v3702 = vsel %vm503, %v3701, %v3672
        %v3703 = vsel %vm1337, %v3702, %v3676
        %v3704 = vsel %vm1339, %v3703, %v3680
        %v3705 = vsel %vm1341, %v3704, %v3684
        %v3706 = vsel %vm1343, %v3705, %v3688
        %v3707 = vsel %vm1345, %v3706, %v3692
        %s3709 = sor.u32 256, 80
        %3710 = vbcast.lane.b32.xlu0 %v1357, %s3709
        %v3711 = vpop.permute.xlu0 %3710
        %s3713 = sor.u32 256, 88
        %3714 = vbcast.lane.b32.xlu0 %v1357, %s3713
        %v3715 = vpop.permute.xlu0 %3714
        %s3717 = sor.u32 256, 80
        %3718 = vbcast.lane.b32.xlu0 %v1369, %s3717
        %v3719 = vpop.permute.xlu0 %3718
        %s3721 = sor.u32 256, 88
        %3722 = vbcast.lane.b32.xlu0 %v1369, %s3721
        %v3723 = vpop.permute.xlu0 %3722
        %s3725 = sor.u32 256, 80
        %3726 = vbcast.lane.b32.xlu0 %v1381, %s3725
        %v3727 = vpop.permute.xlu0 %3726
        %s3729 = sor.u32 256, 88
        %3730 = vbcast.lane.b32.xlu0 %v1381, %s3729
        %v3731 = vpop.permute.xlu0 %3730
        %s3733 = sor.u32 256, 80
        %3734 = vbcast.lane.b32.xlu0 %v1393, %s3733
        %v3735 = vpop.permute.xlu0 %3734
        %s3737 = sor.u32 256, 88
        %3738 = vbcast.lane.b32.xlu0 %v1393, %s3737
        %v3739 = vpop.permute.xlu0 %3738
        %s3741 = sor.u32 256, 80
        %3742 = vbcast.lane.b32.xlu0 %v1405, %s3741
        %v3743 = vpop.permute.xlu0 %3742
        %s3745 = sor.u32 256, 88
        %3746 = vbcast.lane.b32.xlu0 %v1405, %s3745
        %v3747 = vpop.permute.xlu0 %3746
        %s3749 = sor.u32 256, 80
        %3750 = vbcast.lane.b32.xlu0 %v1417, %s3749
        %v3751 = vpop.permute.xlu0 %3750
        %s3753 = sor.u32 256, 88
        %3754 = vbcast.lane.b32.xlu0 %v1417, %s3753
        %v3755 = vpop.permute.xlu0 %3754
        %s3757 = sor.u32 256, 80
        %3758 = vbcast.lane.b32.xlu0 %v1429, %s3757
        %v3759 = vpop.permute.xlu0 %3758
        %s3761 = sor.u32 256, 88
        %3762 = vbcast.lane.b32.xlu0 %v1429, %s3761
        %v3763 = vpop.permute.xlu0 %3762
        %s3765 = sor.u32 256, 80
        %3766 = vbcast.lane.b32.xlu0 %v1441, %s3765
        %v3767 = vpop.permute.xlu0 %3766
        %s3769 = sor.u32 256, 88
        %3770 = vbcast.lane.b32.xlu0 %v1441, %s3769
        %v3771 = vpop.permute.xlu0 %3770
        %v3772 = vmul.f32 %v3711, %v1503
        %v3773 = vmul.f32 %v3715, %v1503
        %v3774 = vmul.f32 %v3719, %v1507
        %v3775 = vmul.f32 %v3723, %v1507
        %v3776 = vmul.f32 %v3727, %v1511
        %v3777 = vmul.f32 %v3731, %v1511
        %v3778 = vmul.f32 %v3735, %v1515
        %v3779 = vmul.f32 %v3739, %v1515
        %v3780 = vmul.f32 %v3743, %v1519
        %v3781 = vmul.f32 %v3747, %v1519
        %v3782 = vmul.f32 %v3751, %v1523
        %v3783 = vmul.f32 %v3755, %v1523
        %v3784 = vmul.f32 %v3759, %v1527
        %v3785 = vmul.f32 %v3763, %v1527
        %v3786 = vmul.f32 %v3767, %v1531
        %v3787 = vmul.f32 %v3771, %v1531
        %3804 = vrot.lane.b32.xlu0 %v3772, 80
        %v3805 = vpop.permute.xlu0 %3804
        %3806 = vrot.lane.b32.xlu0 %v3773, 80
        %v3807 = vpop.permute.xlu0 %3806
        %3808 = vrot.lane.b32.xlu0 %v3774, 80
        %v3809 = vpop.permute.xlu0 %3808
        %3810 = vrot.lane.b32.xlu0 %v3775, 80
        %v3811 = vpop.permute.xlu0 %3810
        %3812 = vrot.lane.b32.xlu0 %v3776, 80
        %v3813 = vpop.permute.xlu0 %3812
        %3814 = vrot.lane.b32.xlu0 %v3777, 80
        %v3815 = vpop.permute.xlu0 %3814
        %3816 = vrot.lane.b32.xlu0 %v3778, 80
        %v3817 = vpop.permute.xlu0 %3816
        %3818 = vrot.lane.b32.xlu0 %v3779, 80
        %v3819 = vpop.permute.xlu0 %3818
        %3820 = vrot.lane.b32.xlu0 %v3780, 80
        %v3821 = vpop.permute.xlu0 %3820
        %3822 = vrot.lane.b32.xlu0 %v3781, 80
        %v3823 = vpop.permute.xlu0 %3822
        %3824 = vrot.lane.b32.xlu0 %v3782, 80
        %v3825 = vpop.permute.xlu0 %3824
        %3826 = vrot.lane.b32.xlu0 %v3783, 80
        %v3827 = vpop.permute.xlu0 %3826
        %3828 = vrot.lane.b32.xlu0 %v3784, 80
        %v3829 = vpop.permute.xlu0 %3828
        %3830 = vrot.lane.b32.xlu0 %v3785, 80
        %v3831 = vpop.permute.xlu0 %3830
        %3832 = vrot.lane.b32.xlu0 %v3786, 80
        %v3833 = vpop.permute.xlu0 %3832
        %3834 = vrot.lane.b32.xlu0 %v3787, 80
        %v3835 = vpop.permute.xlu0 %3834
        %v3852 = vcombine.low %v3805, %v3813
        %v3853 = vcombine.high %v3805, %v3813
        %v3855 = vunpack.c.l.s4 1983009808
        %v3856 = vunpack.c.0.s8 %v3855
        %v3857 = vlaneseq
        %v3858 = vshrl.u32 %v3857, 7
        %v3859 = vsub.s32 %v3856, %v3858
        %v3860 = vrot.slane %v3852, %v3859
        %v3862 = vunpack.c.l.s4 1983009808
        %v3863 = vunpack.c.0.s8 %v3862
        %v3864 = vlaneseq
        %v3865 = vshrl.u32 %v3864, 7
        %v3866 = vsub.s32 %v3863, %v3865
        %v3867 = vrot.slane %v3853, %v3866
        %v3868 = vcombine.low %v3809, %v3817
        %v3869 = vcombine.high %v3809, %v3817
        %v3871 = vunpack.c.l.s4 1983009808
        %v3872 = vunpack.c.0.s8 %v3871
        %v3873 = vlaneseq
        %v3874 = vshrl.u32 %v3873, 7
        %v3875 = vsub.s32 %v3872, %v3874
        %v3876 = vrot.slane %v3868, %v3875
        %v3878 = vunpack.c.l.s4 1983009808
        %v3879 = vunpack.c.0.s8 %v3878
        %v3880 = vlaneseq
        %v3881 = vshrl.u32 %v3880, 7
        %v3882 = vsub.s32 %v3879, %v3881
        %v3883 = vrot.slane %v3869, %v3882
        %v3884 = vcombine.low %v3821, %v3829
        %v3885 = vcombine.high %v3821, %v3829
        %v3887 = vunpack.c.l.s4 1983009808
        %v3888 = vunpack.c.0.s8 %v3887
        %v3889 = vlaneseq
        %v3890 = vshrl.u32 %v3889, 7
        %v3891 = vsub.s32 %v3888, %v3890
        %v3892 = vrot.slane %v3884, %v3891
        %v3894 = vunpack.c.l.s4 1983009808
        %v3895 = vunpack.c.0.s8 %v3894
        %v3896 = vlaneseq
        %v3897 = vshrl.u32 %v3896, 7
        %v3898 = vsub.s32 %v3895, %v3897
        %v3899 = vrot.slane %v3885, %v3898
        %v3900 = vcombine.low %v3825, %v3833
        %v3901 = vcombine.high %v3825, %v3833
        %v3903 = vunpack.c.l.s4 1983009808
        %v3904 = vunpack.c.0.s8 %v3903
        %v3905 = vlaneseq
        %v3906 = vshrl.u32 %v3905, 7
        %v3907 = vsub.s32 %v3904, %v3906
        %v3908 = vrot.slane %v3900, %v3907
        %v3910 = vunpack.c.l.s4 1983009808
        %v3911 = vunpack.c.0.s8 %v3910
        %v3912 = vlaneseq
        %v3913 = vshrl.u32 %v3912, 7
        %v3914 = vsub.s32 %v3911, %v3913
        %v3915 = vrot.slane %v3901, %v3914
        %v3916 = vcombine.low %v3860, %v3876
        %v3917 = vcombine.high %v3860, %v3876
        %v3919 = vunpack.c.l.s4 1934713408
        %v3920 = vunpack.c.0.s8 %v3919
        %v3921 = vlaneseq
        %v3922 = vshrl.u32 %v3921, 7
        %v3923 = vsub.s32 %v3920, %v3922
        %v3924 = vrot.slane %v3916, %v3923
        %v3926 = vunpack.c.l.s4 1934713408
        %v3927 = vunpack.c.0.s8 %v3926
        %v3928 = vlaneseq
        %v3929 = vshrl.u32 %v3928, 7
        %v3930 = vsub.s32 %v3927, %v3929
        %v3931 = vrot.slane %v3917, %v3930
        %v3932 = vcombine.low %v3867, %v3883
        %v3933 = vcombine.high %v3867, %v3883
        %v3935 = vunpack.c.l.s4 1934713408
        %v3936 = vunpack.c.0.s8 %v3935
        %v3937 = vlaneseq
        %v3938 = vshrl.u32 %v3937, 7
        %v3939 = vsub.s32 %v3936, %v3938
        %v3940 = vrot.slane %v3932, %v3939
        %v3942 = vunpack.c.l.s4 1934713408
        %v3943 = vunpack.c.0.s8 %v3942
        %v3944 = vlaneseq
        %v3945 = vshrl.u32 %v3944, 7
        %v3946 = vsub.s32 %v3943, %v3945
        %v3947 = vrot.slane %v3933, %v3946
        %v3948 = vcombine.low %v3892, %v3908
        %v3949 = vcombine.high %v3892, %v3908
        %v3951 = vunpack.c.l.s4 1934713408
        %v3952 = vunpack.c.0.s8 %v3951
        %v3953 = vlaneseq
        %v3954 = vshrl.u32 %v3953, 7
        %v3955 = vsub.s32 %v3952, %v3954
        %v3956 = vrot.slane %v3948, %v3955
        %v3958 = vunpack.c.l.s4 1934713408
        %v3959 = vunpack.c.0.s8 %v3958
        %v3960 = vlaneseq
        %v3961 = vshrl.u32 %v3960, 7
        %v3962 = vsub.s32 %v3959, %v3961
        %v3963 = vrot.slane %v3949, %v3962
        %v3964 = vcombine.low %v3899, %v3915
        %v3965 = vcombine.high %v3899, %v3915
        %v3967 = vunpack.c.l.s4 1934713408
        %v3968 = vunpack.c.0.s8 %v3967
        %v3969 = vlaneseq
        %v3970 = vshrl.u32 %v3969, 7
        %v3971 = vsub.s32 %v3968, %v3970
        %v3972 = vrot.slane %v3964, %v3971
        %v3974 = vunpack.c.l.s4 1934713408
        %v3975 = vunpack.c.0.s8 %v3974
        %v3976 = vlaneseq
        %v3977 = vshrl.u32 %v3976, 7
        %v3978 = vsub.s32 %v3975, %v3977
        %v3979 = vrot.slane %v3965, %v3978
        %v3980 = vcombine.low %v3924, %v3956
        %v3981 = vcombine.high %v3924, %v3956
        %v3982 = vcombine.low %v3931, %v3963
        %v3983 = vcombine.high %v3931, %v3963
        %v3984 = vcombine.low %v3940, %v3972
        %v3985 = vcombine.high %v3940, %v3972
        %v3986 = vcombine.low %v3947, %v3979
        %v3987 = vcombine.high %v3947, %v3979
        %v3988 = vcombine.low %v3807, %v3815
        %v3989 = vcombine.high %v3807, %v3815
        %v3991 = vunpack.c.l.s4 1983009808
        %v3992 = vunpack.c.0.s8 %v3991
        %v3993 = vlaneseq
        %v3994 = vshrl.u32 %v3993, 7
        %v3995 = vsub.s32 %v3992, %v3994
        %v3996 = vrot.slane %v3988, %v3995
        %v3998 = vunpack.c.l.s4 1983009808
        %v3999 = vunpack.c.0.s8 %v3998
        %v4000 = vlaneseq
        %v4001 = vshrl.u32 %v4000, 7
        %v4002 = vsub.s32 %v3999, %v4001
        %v4003 = vrot.slane %v3989, %v4002
        %v4004 = vcombine.low %v3811, %v3819
        %v4005 = vcombine.high %v3811, %v3819
        %v4007 = vunpack.c.l.s4 1983009808
        %v4008 = vunpack.c.0.s8 %v4007
        %v4009 = vlaneseq
        %v4010 = vshrl.u32 %v4009, 7
        %v4011 = vsub.s32 %v4008, %v4010
        %v4012 = vrot.slane %v4004, %v4011
        %v4014 = vunpack.c.l.s4 1983009808
        %v4015 = vunpack.c.0.s8 %v4014
        %v4016 = vlaneseq
        %v4017 = vshrl.u32 %v4016, 7
        %v4018 = vsub.s32 %v4015, %v4017
        %v4019 = vrot.slane %v4005, %v4018
        %v4020 = vcombine.low %v3823, %v3831
        %v4021 = vcombine.high %v3823, %v3831
        %v4023 = vunpack.c.l.s4 1983009808
        %v4024 = vunpack.c.0.s8 %v4023
        %v4025 = vlaneseq
        %v4026 = vshrl.u32 %v4025, 7
        %v4027 = vsub.s32 %v4024, %v4026
        %v4028 = vrot.slane %v4020, %v4027
        %v4030 = vunpack.c.l.s4 1983009808
        %v4031 = vunpack.c.0.s8 %v4030
        %v4032 = vlaneseq
        %v4033 = vshrl.u32 %v4032, 7
        %v4034 = vsub.s32 %v4031, %v4033
        %v4035 = vrot.slane %v4021, %v4034
        %v4036 = vcombine.low %v3827, %v3835
        %v4037 = vcombine.high %v3827, %v3835
        %v4039 = vunpack.c.l.s4 1983009808
        %v4040 = vunpack.c.0.s8 %v4039
        %v4041 = vlaneseq
        %v4042 = vshrl.u32 %v4041, 7
        %v4043 = vsub.s32 %v4040, %v4042
        %v4044 = vrot.slane %v4036, %v4043
        %v4046 = vunpack.c.l.s4 1983009808
        %v4047 = vunpack.c.0.s8 %v4046
        %v4048 = vlaneseq
        %v4049 = vshrl.u32 %v4048, 7
        %v4050 = vsub.s32 %v4047, %v4049
        %v4051 = vrot.slane %v4037, %v4050
        %v4052 = vcombine.low %v3996, %v4012
        %v4053 = vcombine.high %v3996, %v4012
        %v4055 = vunpack.c.l.s4 1934713408
        %v4056 = vunpack.c.0.s8 %v4055
        %v4057 = vlaneseq
        %v4058 = vshrl.u32 %v4057, 7
        %v4059 = vsub.s32 %v4056, %v4058
        %v4060 = vrot.slane %v4052, %v4059
        %v4062 = vunpack.c.l.s4 1934713408
        %v4063 = vunpack.c.0.s8 %v4062
        %v4064 = vlaneseq
        %v4065 = vshrl.u32 %v4064, 7
        %v4066 = vsub.s32 %v4063, %v4065
        %v4067 = vrot.slane %v4053, %v4066
        %v4068 = vcombine.low %v4003, %v4019
        %v4069 = vcombine.high %v4003, %v4019
        %v4071 = vunpack.c.l.s4 1934713408
        %v4072 = vunpack.c.0.s8 %v4071
        %v4073 = vlaneseq
        %v4074 = vshrl.u32 %v4073, 7
        %v4075 = vsub.s32 %v4072, %v4074
        %v4076 = vrot.slane %v4068, %v4075
        %v4078 = vunpack.c.l.s4 1934713408
        %v4079 = vunpack.c.0.s8 %v4078
        %v4080 = vlaneseq
        %v4081 = vshrl.u32 %v4080, 7
        %v4082 = vsub.s32 %v4079, %v4081
        %v4083 = vrot.slane %v4069, %v4082
        %v4084 = vcombine.low %v4028, %v4044
        %v4085 = vcombine.high %v4028, %v4044
        %v4087 = vunpack.c.l.s4 1934713408
        %v4088 = vunpack.c.0.s8 %v4087
        %v4089 = vlaneseq
        %v4090 = vshrl.u32 %v4089, 7
        %v4091 = vsub.s32 %v4088, %v4090
        %v4092 = vrot.slane %v4084, %v4091
        %v4094 = vunpack.c.l.s4 1934713408
        %v4095 = vunpack.c.0.s8 %v4094
        %v4096 = vlaneseq
        %v4097 = vshrl.u32 %v4096, 7
        %v4098 = vsub.s32 %v4095, %v4097
        %v4099 = vrot.slane %v4085, %v4098
        %v4100 = vcombine.low %v4035, %v4051
        %v4101 = vcombine.high %v4035, %v4051
        %v4103 = vunpack.c.l.s4 1934713408
        %v4104 = vunpack.c.0.s8 %v4103
        %v4105 = vlaneseq
        %v4106 = vshrl.u32 %v4105, 7
        %v4107 = vsub.s32 %v4104, %v4106
        %v4108 = vrot.slane %v4100, %v4107
        %v4110 = vunpack.c.l.s4 1934713408
        %v4111 = vunpack.c.0.s8 %v4110
        %v4112 = vlaneseq
        %v4113 = vshrl.u32 %v4112, 7
        %v4114 = vsub.s32 %v4111, %v4113
        %v4115 = vrot.slane %v4101, %v4114
        %v4116 = vcombine.low %v4060, %v4092
        %v4117 = vcombine.high %v4060, %v4092
        %v4118 = vcombine.low %v4067, %v4099
        %v4119 = vcombine.high %v4067, %v4099
        %v4120 = vcombine.low %v4076, %v4108
        %v4121 = vcombine.high %v4076, %v4108
        %v4122 = vcombine.low %v4083, %v4115
        %v4123 = vcombine.high %v4083, %v4115
        %4125 = vrot.lane.b32.xlu0 %v3981, 16
        %v4126 = vpop.permute.xlu0 %4125
        %4129 = vrot.lane.b32.xlu0 %v3982, 32
        %v4130 = vpop.permute.xlu0 %4129
        %4133 = vrot.lane.b32.xlu0 %v3983, 48
        %v4134 = vpop.permute.xlu0 %4133
        %4137 = vrot.lane.b32.xlu0 %v3984, 64
        %v4138 = vpop.permute.xlu0 %4137
        %4141 = vrot.lane.b32.xlu0 %v3985, 80
        %v4142 = vpop.permute.xlu0 %4141
        %4145 = vrot.lane.b32.xlu0 %v3986, 96
        %v4146 = vpop.permute.xlu0 %4145
        %4149 = vrot.lane.b32.xlu0 %v3987, 112
        %v4150 = vpop.permute.xlu0 %4149
        %4153 = vrot.lane.b32.xlu0 %v4117, 16
        %v4154 = vpop.permute.xlu0 %4153
        %4157 = vrot.lane.b32.xlu0 %v4118, 32
        %v4158 = vpop.permute.xlu0 %4157
        %4161 = vrot.lane.b32.xlu0 %v4119, 48
        %v4162 = vpop.permute.xlu0 %4161
        %4165 = vrot.lane.b32.xlu0 %v4120, 64
        %v4166 = vpop.permute.xlu0 %4165
        %4169 = vrot.lane.b32.xlu0 %v4121, 80
        %v4170 = vpop.permute.xlu0 %4169
        %4173 = vrot.lane.b32.xlu0 %v4122, 96
        %v4174 = vpop.permute.xlu0 %4173
        %4177 = vrot.lane.b32.xlu0 %v4123, 112
        %v4178 = vpop.permute.xlu0 %4177
        %v4180 = vsel %vm1334, %v3980, %v4126
        %v4181 = vsel %vm503, %v4180, %v4130
        %v4182 = vsel %vm1337, %v4181, %v4134
        %v4183 = vsel %vm1339, %v4182, %v4138
        %v4184 = vsel %vm1341, %v4183, %v4142
        %v4185 = vsel %vm1343, %v4184, %v4146
        %v4186 = vsel %vm1345, %v4185, %v4150
        %v4187 = vsel %vm1334, %v4116, %v4154
        %v4188 = vsel %vm503, %v4187, %v4158
        %v4189 = vsel %vm1337, %v4188, %v4162
        %v4190 = vsel %vm1339, %v4189, %v4166
        %v4191 = vsel %vm1341, %v4190, %v4170
        %v4192 = vsel %vm1343, %v4191, %v4174
        %v4193 = vsel %vm1345, %v4192, %v4178
        %s4194 = scalar_lea.vmem [#allocation9], 4
        %v4195 = vld [vmem:[%s4194] sm:$0xf]
        %v4196 = vpack.c.bf16 %v3700, %v3700
        %v4197 = vpack.c.bf16 %v3707, %v3707
        %v4198 = vpack.c.bf16 %v4186, %v4186
        %v4199 = vpack.c.bf16 %v4193, %v4193
        %4200 = vset.pattern.permute.xlu0 1
        %4201 = vperm.xlu0 %4200, %v1971
        %v4202 = vpop.permute.xlu0 %4201
        %v4204 = vmul.f32 %v4202, %v3700
        %v4205 = vmul.f32 %v4202, %v3707
        %v4206 = vmul.f32 %v4202, %v4186
        %v4207 = vmul.f32 %v4202, %v4193
        %v4209 = vsel %vm1980, %v4195, 0
        %v4212 = vsel %vm1984, %v4196, 0
        %v4215 = vsel %vm1984, %v4197, 0
        %v4218 = vsel %vm1984, %v4198, 0
        %v4221 = vsel %vm1984, %v4199, 0
        %4223 = vmatprep.subr.bf16.mxu0 %v4215
        %4224 = vmatpush1.bf16.msra.mxu0 %v4212
        %4225 = vmatprep.subr.bf16.mxu0 0
        %4226 = vmatpush1.bf16.msra.mxu0 0
        %4227 = vmatprep.subr.bf16.mxu0 0
        %4228 = vmatpush1.bf16.msra.mxu0 0
        %4229 = vmatprep.subr.bf16.mxu0 0
        %4230 = vmatpush1.bf16.msra.mxu0 0
        %4231 = vmatprep.subr.bf16.mxu0 0
        %4232 = vmatpush1.bf16.msra.mxu0 0
        %4233 = vmatprep.subr.bf16.mxu0 0
        %4234 = vmatpush1.bf16.msra.mxu0 0
        %4235 = vmatprep.subr.bf16.mxu0 0
        %4236 = vmatpush1.bf16.msra.mxu0 0
        %4237 = vmatprep.subr.bf16.mxu0 0
        %4238 = vmatpush1.bf16.msra.mxu0 0
        %4239 = vmatprep.subr.bf16.mxu0 0
        %4240 = vmatpush1.bf16.msra.mxu0 0
        %4241 = vmatprep.subr.bf16.mxu0 0
        %4242 = vmatpush1.bf16.msra.mxu0 0
        %4243 = vmatprep.subr.bf16.mxu0 0
        %4244 = vmatpush1.bf16.msra.mxu0 0
        %4245 = vmatprep.subr.bf16.mxu0 0
        %4246 = vmatpush1.bf16.msra.mxu0 0
        %4247 = vmatprep.subr.bf16.mxu0 0
        %4248 = vmatpush1.bf16.msra.mxu0 0
        %4249 = vmatprep.subr.bf16.mxu0 0
        %4250 = vmatpush1.bf16.msra.mxu0 0
        %4251 = vmatprep.subr.bf16.mxu0 0
        %4252 = vmatpush1.bf16.msra.mxu0 0
        %4253 = vmatprep.subr.bf16.mxu0 0
        %4254 = vmatpush1.bf16.msra.mxu0 0
        %4255 = vmatprep.mubr.bf16.mxu0 0
        %4256 = vmatmul.mubr.bf16.gmra.mrb[0].mxu0 %v4209
        %v4257 = vpop.f32.mrb[0].mxu0
        %v4258 = vadd.f32 %v4204, %v4257
        %v4259 = vpop.f32.mrb[0].mxu0
        %v4260 = vadd.f32 %v4205, %v4259
        %v4261 = vpop.f32.mrb[0].mxu0
        %v4262 = vpop.f32.mrb[0].mxu0
        %4263 = vdwg.mxu0
        %4264 = vmatprep.subr.bf16.mxu0 %v4221
        %4265 = vmatpush1.bf16.msra.mxu0 %v4218
        %4266 = vmatprep.subr.bf16.mxu0 0
        %4267 = vmatpush1.bf16.msra.mxu0 0
        %4268 = vmatprep.subr.bf16.mxu0 0
        %4269 = vmatpush1.bf16.msra.mxu0 0
        %4270 = vmatprep.subr.bf16.mxu0 0
        %4271 = vmatpush1.bf16.msra.mxu0 0
        %4272 = vmatprep.subr.bf16.mxu0 0
        %4273 = vmatpush1.bf16.msra.mxu0 0
        %4274 = vmatprep.subr.bf16.mxu0 0
        %4275 = vmatpush1.bf16.msra.mxu0 0
        %4276 = vmatprep.subr.bf16.mxu0 0
        %4277 = vmatpush1.bf16.msra.mxu0 0
        %4278 = vmatprep.subr.bf16.mxu0 0
        %4279 = vmatpush1.bf16.msra.mxu0 0
        %4280 = vmatprep.subr.bf16.mxu0 0
        %4281 = vmatpush1.bf16.msra.mxu0 0
        %4282 = vmatprep.subr.bf16.mxu0 0
        %4283 = vmatpush1.bf16.msra.mxu0 0
        %4284 = vmatprep.subr.bf16.mxu0 0
        %4285 = vmatpush1.bf16.msra.mxu0 0
        %4286 = vmatprep.subr.bf16.mxu0 0
        %4287 = vmatpush1.bf16.msra.mxu0 0
        %4288 = vmatprep.subr.bf16.mxu0 0
        %4289 = vmatpush1.bf16.msra.mxu0 0
        %4290 = vmatprep.subr.bf16.mxu0 0
        %4291 = vmatpush1.bf16.msra.mxu0 0
        %4292 = vmatprep.subr.bf16.mxu0 0
        %4293 = vmatpush1.bf16.msra.mxu0 0
        %4294 = vmatprep.subr.bf16.mxu0 0
        %4295 = vmatpush1.bf16.msra.mxu0 0
        %4296 = vmatprep.mubr.bf16.mxu0 0
        %4297 = vmatmul.mubr.bf16.gmra.mrb[0].mxu0 %v4209
        %v4298 = vpop.f32.mrb[0].mxu0
        %v4299 = vadd.f32 %v4206, %v4298
        %v4300 = vpop.f32.mrb[0].mxu0
        %v4301 = vadd.f32 %v4207, %v4300
        %v4302 = vpop.f32.mrb[0].mxu0
        %v4303 = vpop.f32.mrb[0].mxu0
        %4304 = vdwg.mxu0
        %4306 = vrot.lane.b32.xlu0 %v4258, 112
        %v4307 = vpop.permute.xlu0 %4306
        %4309 = vrot.lane.b32.xlu0 %v4258, 96
        %v4310 = vpop.permute.xlu0 %4309
        %4312 = vrot.lane.b32.xlu0 %v4258, 80
        %v4313 = vpop.permute.xlu0 %4312
        %4315 = vrot.lane.b32.xlu0 %v4258, 64
        %v4316 = vpop.permute.xlu0 %4315
        %4318 = vrot.lane.b32.xlu0 %v4258, 48
        %v4319 = vpop.permute.xlu0 %4318
        %4321 = vrot.lane.b32.xlu0 %v4258, 32
        %v4322 = vpop.permute.xlu0 %4321
        %4324 = vrot.lane.b32.xlu0 %v4258, 16
        %v4325 = vpop.permute.xlu0 %4324
        %4328 = vrot.lane.b32.xlu0 %v4260, 112
        %v4329 = vpop.permute.xlu0 %4328
        %4331 = vrot.lane.b32.xlu0 %v4260, 96
        %v4332 = vpop.permute.xlu0 %4331
        %4334 = vrot.lane.b32.xlu0 %v4260, 80
        %v4335 = vpop.permute.xlu0 %4334
        %4337 = vrot.lane.b32.xlu0 %v4260, 64
        %v4338 = vpop.permute.xlu0 %4337
        %4340 = vrot.lane.b32.xlu0 %v4260, 48
        %v4341 = vpop.permute.xlu0 %4340
        %4343 = vrot.lane.b32.xlu0 %v4260, 32
        %v4344 = vpop.permute.xlu0 %4343
        %4346 = vrot.lane.b32.xlu0 %v4260, 16
        %v4347 = vpop.permute.xlu0 %4346
        %v4349 = vcombine.low %v4258, %v4310
        %v4350 = vcombine.high %v4258, %v4310
        %v4352 = vunpack.c.l.s4 1983009808
        %v4353 = vunpack.c.0.s8 %v4352
        %v4354 = vlaneseq
        %v4355 = vshrl.u32 %v4354, 7
        %v4356 = vsub.s32 %v4353, %v4355
        %v4357 = vrot.slane %v4349, %v4356
        %v4359 = vunpack.c.l.s4 1983009808
        %v4360 = vunpack.c.0.s8 %v4359
        %v4361 = vlaneseq
        %v4362 = vshrl.u32 %v4361, 7
        %v4363 = vsub.s32 %v4360, %v4362
        %v4364 = vrot.slane %v4350, %v4363
        %v4365 = vcombine.low %v4307, %v4313
        %v4366 = vcombine.high %v4307, %v4313
        %v4368 = vunpack.c.l.s4 1983009808
        %v4369 = vunpack.c.0.s8 %v4368
        %v4370 = vlaneseq
        %v4371 = vshrl.u32 %v4370, 7
        %v4372 = vsub.s32 %v4369, %v4371
        %v4373 = vrot.slane %v4365, %v4372
        %v4375 = vunpack.c.l.s4 1983009808
        %v4376 = vunpack.c.0.s8 %v4375
        %v4377 = vlaneseq
        %v4378 = vshrl.u32 %v4377, 7
        %v4379 = vsub.s32 %v4376, %v4378
        %v4380 = vrot.slane %v4366, %v4379
        %v4381 = vcombine.low %v4316, %v4322
        %v4382 = vcombine.high %v4316, %v4322
        %v4384 = vunpack.c.l.s4 1983009808
        %v4385 = vunpack.c.0.s8 %v4384
        %v4386 = vlaneseq
        %v4387 = vshrl.u32 %v4386, 7
        %v4388 = vsub.s32 %v4385, %v4387
        %v4389 = vrot.slane %v4381, %v4388
        %v4391 = vunpack.c.l.s4 1983009808
        %v4392 = vunpack.c.0.s8 %v4391
        %v4393 = vlaneseq
        %v4394 = vshrl.u32 %v4393, 7
        %v4395 = vsub.s32 %v4392, %v4394
        %v4396 = vrot.slane %v4382, %v4395
        %v4397 = vcombine.low %v4319, %v4325
        %v4398 = vcombine.high %v4319, %v4325
        %v4400 = vunpack.c.l.s4 1983009808
        %v4401 = vunpack.c.0.s8 %v4400
        %v4402 = vlaneseq
        %v4403 = vshrl.u32 %v4402, 7
        %v4404 = vsub.s32 %v4401, %v4403
        %v4405 = vrot.slane %v4397, %v4404
        %v4407 = vunpack.c.l.s4 1983009808
        %v4408 = vunpack.c.0.s8 %v4407
        %v4409 = vlaneseq
        %v4410 = vshrl.u32 %v4409, 7
        %v4411 = vsub.s32 %v4408, %v4410
        %v4412 = vrot.slane %v4398, %v4411
        %v4413 = vcombine.low %v4357, %v4373
        %v4414 = vcombine.high %v4357, %v4373
        %v4416 = vunpack.c.l.s4 1934713408
        %v4417 = vunpack.c.0.s8 %v4416
        %v4418 = vlaneseq
        %v4419 = vshrl.u32 %v4418, 7
        %v4420 = vsub.s32 %v4417, %v4419
        %v4421 = vrot.slane %v4413, %v4420
        %v4423 = vunpack.c.l.s4 1934713408
        %v4424 = vunpack.c.0.s8 %v4423
        %v4425 = vlaneseq
        %v4426 = vshrl.u32 %v4425, 7
        %v4427 = vsub.s32 %v4424, %v4426
        %v4428 = vrot.slane %v4414, %v4427
        %v4429 = vcombine.low %v4364, %v4380
        %v4430 = vcombine.high %v4364, %v4380
        %v4432 = vunpack.c.l.s4 1934713408
        %v4433 = vunpack.c.0.s8 %v4432
        %v4434 = vlaneseq
        %v4435 = vshrl.u32 %v4434, 7
        %v4436 = vsub.s32 %v4433, %v4435
        %v4437 = vrot.slane %v4429, %v4436
        %v4439 = vunpack.c.l.s4 1934713408
        %v4440 = vunpack.c.0.s8 %v4439
        %v4441 = vlaneseq
        %v4442 = vshrl.u32 %v4441, 7
        %v4443 = vsub.s32 %v4440, %v4442
        %v4444 = vrot.slane %v4430, %v4443
        %v4445 = vcombine.low %v4389, %v4405
        %v4446 = vcombine.high %v4389, %v4405
        %v4448 = vunpack.c.l.s4 1934713408
        %v4449 = vunpack.c.0.s8 %v4448
        %v4450 = vlaneseq
        %v4451 = vshrl.u32 %v4450, 7
        %v4452 = vsub.s32 %v4449, %v4451
        %v4453 = vrot.slane %v4445, %v4452
        %v4455 = vunpack.c.l.s4 1934713408
        %v4456 = vunpack.c.0.s8 %v4455
        %v4457 = vlaneseq
        %v4458 = vshrl.u32 %v4457, 7
        %v4459 = vsub.s32 %v4456, %v4458
        %v4460 = vrot.slane %v4446, %v4459
        %v4461 = vcombine.low %v4396, %v4412
        %v4462 = vcombine.high %v4396, %v4412
        %v4464 = vunpack.c.l.s4 1934713408
        %v4465 = vunpack.c.0.s8 %v4464
        %v4466 = vlaneseq
        %v4467 = vshrl.u32 %v4466, 7
        %v4468 = vsub.s32 %v4465, %v4467
        %v4469 = vrot.slane %v4461, %v4468
        %v4471 = vunpack.c.l.s4 1934713408
        %v4472 = vunpack.c.0.s8 %v4471
        %v4473 = vlaneseq
        %v4474 = vshrl.u32 %v4473, 7
        %v4475 = vsub.s32 %v4472, %v4474
        %v4476 = vrot.slane %v4462, %v4475
        %v4477 = vcombine.low %v4421, %v4453
        %v4478 = vcombine.high %v4421, %v4453
        %v4479 = vcombine.low %v4428, %v4460
        %v4480 = vcombine.high %v4428, %v4460
        %v4481 = vcombine.low %v4437, %v4469
        %v4482 = vcombine.high %v4437, %v4469
        %v4483 = vcombine.low %v4444, %v4476
        %v4484 = vcombine.high %v4444, %v4476
        %v4485 = vcombine.low %v4260, %v4332
        %v4486 = vcombine.high %v4260, %v4332
        %v4488 = vunpack.c.l.s4 1983009808
        %v4489 = vunpack.c.0.s8 %v4488
        %v4490 = vlaneseq
        %v4491 = vshrl.u32 %v4490, 7
        %v4492 = vsub.s32 %v4489, %v4491
        %v4493 = vrot.slane %v4485, %v4492
        %v4495 = vunpack.c.l.s4 1983009808
        %v4496 = vunpack.c.0.s8 %v4495
        %v4497 = vlaneseq
        %v4498 = vshrl.u32 %v4497, 7
        %v4499 = vsub.s32 %v4496, %v4498
        %v4500 = vrot.slane %v4486, %v4499
        %v4501 = vcombine.low %v4329, %v4335
        %v4502 = vcombine.high %v4329, %v4335
        %v4504 = vunpack.c.l.s4 1983009808
        %v4505 = vunpack.c.0.s8 %v4504
        %v4506 = vlaneseq
        %v4507 = vshrl.u32 %v4506, 7
        %v4508 = vsub.s32 %v4505, %v4507
        %v4509 = vrot.slane %v4501, %v4508
        %v4511 = vunpack.c.l.s4 1983009808
        %v4512 = vunpack.c.0.s8 %v4511
        %v4513 = vlaneseq
        %v4514 = vshrl.u32 %v4513, 7
        %v4515 = vsub.s32 %v4512, %v4514
        %v4516 = vrot.slane %v4502, %v4515
        %v4517 = vcombine.low %v4338, %v4344
        %v4518 = vcombine.high %v4338, %v4344
        %v4520 = vunpack.c.l.s4 1983009808
        %v4521 = vunpack.c.0.s8 %v4520
        %v4522 = vlaneseq
        %v4523 = vshrl.u32 %v4522, 7
        %v4524 = vsub.s32 %v4521, %v4523
        %v4525 = vrot.slane %v4517, %v4524
        %v4527 = vunpack.c.l.s4 1983009808
        %v4528 = vunpack.c.0.s8 %v4527
        %v4529 = vlaneseq
        %v4530 = vshrl.u32 %v4529, 7
        %v4531 = vsub.s32 %v4528, %v4530
        %v4532 = vrot.slane %v4518, %v4531
        %v4533 = vcombine.low %v4341, %v4347
        %v4534 = vcombine.high %v4341, %v4347
        %v4536 = vunpack.c.l.s4 1983009808
        %v4537 = vunpack.c.0.s8 %v4536
        %v4538 = vlaneseq
        %v4539 = vshrl.u32 %v4538, 7
        %v4540 = vsub.s32 %v4537, %v4539
        %v4541 = vrot.slane %v4533, %v4540
        %v4543 = vunpack.c.l.s4 1983009808
        %v4544 = vunpack.c.0.s8 %v4543
        %v4545 = vlaneseq
        %v4546 = vshrl.u32 %v4545, 7
        %v4547 = vsub.s32 %v4544, %v4546
        %v4548 = vrot.slane %v4534, %v4547
        %v4549 = vcombine.low %v4493, %v4509
        %v4550 = vcombine.high %v4493, %v4509
        %v4552 = vunpack.c.l.s4 1934713408
        %v4553 = vunpack.c.0.s8 %v4552
        %v4554 = vlaneseq
        %v4555 = vshrl.u32 %v4554, 7
        %v4556 = vsub.s32 %v4553, %v4555
        %v4557 = vrot.slane %v4549, %v4556
        %v4559 = vunpack.c.l.s4 1934713408
        %v4560 = vunpack.c.0.s8 %v4559
        %v4561 = vlaneseq
        %v4562 = vshrl.u32 %v4561, 7
        %v4563 = vsub.s32 %v4560, %v4562
        %v4564 = vrot.slane %v4550, %v4563
        %v4565 = vcombine.low %v4500, %v4516
        %v4566 = vcombine.high %v4500, %v4516
        %v4568 = vunpack.c.l.s4 1934713408
        %v4569 = vunpack.c.0.s8 %v4568
        %v4570 = vlaneseq
        %v4571 = vshrl.u32 %v4570, 7
        %v4572 = vsub.s32 %v4569, %v4571
        %v4573 = vrot.slane %v4565, %v4572
        %v4575 = vunpack.c.l.s4 1934713408
        %v4576 = vunpack.c.0.s8 %v4575
        %v4577 = vlaneseq
        %v4578 = vshrl.u32 %v4577, 7
        %v4579 = vsub.s32 %v4576, %v4578
        %v4580 = vrot.slane %v4566, %v4579
        %v4581 = vcombine.low %v4525, %v4541
        %v4582 = vcombine.high %v4525, %v4541
        %v4584 = vunpack.c.l.s4 1934713408
        %v4585 = vunpack.c.0.s8 %v4584
        %v4586 = vlaneseq
        %v4587 = vshrl.u32 %v4586, 7
        %v4588 = vsub.s32 %v4585, %v4587
        %v4589 = vrot.slane %v4581, %v4588
        %v4591 = vunpack.c.l.s4 1934713408
        %v4592 = vunpack.c.0.s8 %v4591
        %v4593 = vlaneseq
        %v4594 = vshrl.u32 %v4593, 7
        %v4595 = vsub.s32 %v4592, %v4594
        %v4596 = vrot.slane %v4582, %v4595
        %v4597 = vcombine.low %v4532, %v4548
        %v4598 = vcombine.high %v4532, %v4548
        %v4600 = vunpack.c.l.s4 1934713408
        %v4601 = vunpack.c.0.s8 %v4600
        %v4602 = vlaneseq
        %v4603 = vshrl.u32 %v4602, 7
        %v4604 = vsub.s32 %v4601, %v4603
        %v4605 = vrot.slane %v4597, %v4604
        %v4607 = vunpack.c.l.s4 1934713408
        %v4608 = vunpack.c.0.s8 %v4607
        %v4609 = vlaneseq
        %v4610 = vshrl.u32 %v4609, 7
        %v4611 = vsub.s32 %v4608, %v4610
        %v4612 = vrot.slane %v4598, %v4611
        %v4613 = vcombine.low %v4557, %v4589
        %v4614 = vcombine.high %v4557, %v4589
        %v4615 = vcombine.low %v4564, %v4596
        %v4616 = vcombine.high %v4564, %v4596
        %v4617 = vcombine.low %v4573, %v4605
        %v4618 = vcombine.high %v4573, %v4605
        %v4619 = vcombine.low %v4580, %v4612
        %v4620 = vcombine.high %v4580, %v4612
        %4621 = vrot.lane.b32.xlu0 %v2447, 112
        %v4622 = vpop.permute.xlu0 %4621
        %4623 = vrot.lane.b32.xlu0 %v2451, 112
        %v4624 = vpop.permute.xlu0 %4623
        %4625 = vrot.lane.b32.xlu0 %v2455, 112
        %v4626 = vpop.permute.xlu0 %4625
        %4627 = vrot.lane.b32.xlu0 %v2459, 112
        %v4628 = vpop.permute.xlu0 %4627
        %4629 = vrot.lane.b32.xlu0 %v2463, 112
        %v4630 = vpop.permute.xlu0 %4629
        %4631 = vrot.lane.b32.xlu0 %v2467, 112
        %v4632 = vpop.permute.xlu0 %4631
        %4633 = vrot.lane.b32.xlu0 %v2471, 112
        %v4634 = vpop.permute.xlu0 %4633
        %4635 = vrot.lane.b32.xlu0 %v2475, 112
        %v4636 = vpop.permute.xlu0 %4635
        %v4645 = vmul.f32 %v4477, %v4622
        %v4646 = vmul.f32 %v4613, %v4622
        %v4647 = vmul.f32 %v4478, %v4624
        %v4648 = vmul.f32 %v4614, %v4624
        %v4649 = vmul.f32 %v4479, %v4626
        %v4650 = vmul.f32 %v4615, %v4626
        %v4651 = vmul.f32 %v4480, %v4628
        %v4652 = vmul.f32 %v4616, %v4628
        %v4653 = vmul.f32 %v4481, %v4630
        %v4654 = vmul.f32 %v4617, %v4630
        %v4655 = vmul.f32 %v4482, %v4632
        %v4656 = vmul.f32 %v4618, %v4632
        %v4657 = vmul.f32 %v4483, %v4634
        %v4658 = vmul.f32 %v4619, %v4634
        %v4659 = vmul.f32 %v4484, %v4636
        %v4660 = vmul.f32 %v4620, %v4636
        %v4661 = vsel %vm1334, %v4645, 0.0
        %4662 = vadd.xlane.f32.xlu0 %v4661
        %v4663 = vpop.xlane.xlu0 %4662
        %v4664 = vsel %vm1334, %v4646, 0.0
        %4665 = vadd.xlane.f32.xlu0 %v4664
        %v4666 = vpop.xlane.xlu0 %4665
        %v4667 = vsel %vm1334, %v4647, 0.0
        %4668 = vadd.xlane.f32.xlu0 %v4667
        %v4669 = vpop.xlane.xlu0 %4668
        %v4670 = vsel %vm1334, %v4648, 0.0
        %4671 = vadd.xlane.f32.xlu0 %v4670
        %v4672 = vpop.xlane.xlu0 %4671
        %v4673 = vsel %vm1334, %v4649, 0.0
        %4674 = vadd.xlane.f32.xlu0 %v4673
        %v4675 = vpop.xlane.xlu0 %4674
        %v4676 = vsel %vm1334, %v4650, 0.0
        %4677 = vadd.xlane.f32.xlu0 %v4676
        %v4678 = vpop.xlane.xlu0 %4677
        %v4679 = vsel %vm1334, %v4651, 0.0
        %4680 = vadd.xlane.f32.xlu0 %v4679
        %v4681 = vpop.xlane.xlu0 %4680
        %v4682 = vsel %vm1334, %v4652, 0.0
        %4683 = vadd.xlane.f32.xlu0 %v4682
        %v4684 = vpop.xlane.xlu0 %4683
        %v4685 = vsel %vm1334, %v4653, 0.0
        %4686 = vadd.xlane.f32.xlu0 %v4685
        %v4687 = vpop.xlane.xlu0 %4686
        %v4688 = vsel %vm1334, %v4654, 0.0
        %4689 = vadd.xlane.f32.xlu0 %v4688
        %v4690 = vpop.xlane.xlu0 %4689
        %v4691 = vsel %vm1334, %v4655, 0.0
        %4692 = vadd.xlane.f32.xlu0 %v4691
        %v4693 = vpop.xlane.xlu0 %4692
        %v4694 = vsel %vm1334, %v4656, 0.0
        %4695 = vadd.xlane.f32.xlu0 %v4694
        %v4696 = vpop.xlane.xlu0 %4695
        %v4697 = vsel %vm1334, %v4657, 0.0
        %4698 = vadd.xlane.f32.xlu0 %v4697
        %v4699 = vpop.xlane.xlu0 %4698
        %v4700 = vsel %vm1334, %v4658, 0.0
        %4701 = vadd.xlane.f32.xlu0 %v4700
        %v4702 = vpop.xlane.xlu0 %4701
        %v4703 = vsel %vm1334, %v4659, 0.0
        %4704 = vadd.xlane.f32.xlu0 %v4703
        %v4705 = vpop.xlane.xlu0 %4704
        %v4706 = vsel %vm1334, %v4660, 0.0
        %4707 = vadd.xlane.f32.xlu0 %v4706
        %v4708 = vpop.xlane.xlu0 %4707
        %v4725 = vadd.s32 %v2565, 4294967280
        %v4726 = vlaneseq
        %v4727 = vshrl.u32 %v4726, 7
        %v4728 = vsub.s32 %v4725, %v4727
        %v4729 = vrot.slane %v4663, %v4728
        %v4730 = vadd.s32 %v2565, 4294967272
        %v4731 = vlaneseq
        %v4732 = vshrl.u32 %v4731, 7
        %v4733 = vsub.s32 %v4730, %v4732
        %v4734 = vrot.slane %v4666, %v4733
        %vm4735 = vcmask 261312
        %v4736 = vsel %vm4735, %v4734, %v4729
        %v4737 = vlaneseq
        %v4738 = vshrl.u32 %v4737, 7
        %v4739 = vsub.s32 %v4725, %v4738
        %v4740 = vrot.slane %v4669, %v4739
        %v4741 = vlaneseq
        %v4742 = vshrl.u32 %v4741, 7
        %v4743 = vsub.s32 %v4730, %v4742
        %v4744 = vrot.slane %v4672, %v4743
        %v4745 = vsel %vm4735, %v4744, %v4740
        %v4746 = vlaneseq
        %v4747 = vshrl.u32 %v4746, 7
        %v4748 = vsub.s32 %v4725, %v4747
        %v4749 = vrot.slane %v4675, %v4748
        %v4750 = vlaneseq
        %v4751 = vshrl.u32 %v4750, 7
        %v4752 = vsub.s32 %v4730, %v4751
        %v4753 = vrot.slane %v4678, %v4752
        %v4754 = vsel %vm4735, %v4753, %v4749
        %v4755 = vlaneseq
        %v4756 = vshrl.u32 %v4755, 7
        %v4757 = vsub.s32 %v4725, %v4756
        %v4758 = vrot.slane %v4681, %v4757
        %v4759 = vlaneseq
        %v4760 = vshrl.u32 %v4759, 7
        %v4761 = vsub.s32 %v4730, %v4760
        %v4762 = vrot.slane %v4684, %v4761
        %v4763 = vsel %vm4735, %v4762, %v4758
        %v4764 = vlaneseq
        %v4765 = vshrl.u32 %v4764, 7
        %v4766 = vsub.s32 %v4725, %v4765
        %v4767 = vrot.slane %v4687, %v4766
        %v4768 = vlaneseq
        %v4769 = vshrl.u32 %v4768, 7
        %v4770 = vsub.s32 %v4730, %v4769
        %v4771 = vrot.slane %v4690, %v4770
        %v4772 = vsel %vm4735, %v4771, %v4767
        %v4773 = vlaneseq
        %v4774 = vshrl.u32 %v4773, 7
        %v4775 = vsub.s32 %v4725, %v4774
        %v4776 = vrot.slane %v4693, %v4775
        %v4777 = vlaneseq
        %v4778 = vshrl.u32 %v4777, 7
        %v4779 = vsub.s32 %v4730, %v4778
        %v4780 = vrot.slane %v4696, %v4779
        %v4781 = vsel %vm4735, %v4780, %v4776
        %v4782 = vlaneseq
        %v4783 = vshrl.u32 %v4782, 7
        %v4784 = vsub.s32 %v4725, %v4783
        %v4785 = vrot.slane %v4699, %v4784
        %v4786 = vlaneseq
        %v4787 = vshrl.u32 %v4786, 7
        %v4788 = vsub.s32 %v4730, %v4787
        %v4789 = vrot.slane %v4702, %v4788
        %v4790 = vsel %vm4735, %v4789, %v4785
        %v4791 = vlaneseq
        %v4792 = vshrl.u32 %v4791, 7
        %v4793 = vsub.s32 %v4725, %v4792
        %v4794 = vrot.slane %v4705, %v4793
        %v4795 = vlaneseq
        %v4796 = vshrl.u32 %v4795, 7
        %v4797 = vsub.s32 %v4730, %v4796
        %v4798 = vrot.slane %v4708, %v4797
        %v4799 = vsel %vm4735, %v4798, %v4794
        %v4800 = vsel %vm2640, %v4745, %v4736
        %v4801 = vsel %vm2642, %v4754, %v4800
        %v4802 = vsel %vm2644, %v4763, %v4801
        %v4803 = vsel %vm2646, %v4772, %v4802
        %v4804 = vsel %vm2648, %v4781, %v4803
        %v4805 = vsel %vm2650, %v4790, %v4804
        %v4806 = vsel %vm2652, %v4799, %v4805
        %vm4808 = vcmask 261248
        %4809 = vst.msk [vmem:[#allocation2] sm:$0xff] %vm4808, %v4806
        %4811 = vrot.lane.b32.xlu0 %v4299, 112
        %v4812 = vpop.permute.xlu0 %4811
        %4814 = vrot.lane.b32.xlu0 %v4299, 96
        %v4815 = vpop.permute.xlu0 %4814
        %4817 = vrot.lane.b32.xlu0 %v4299, 80
        %v4818 = vpop.permute.xlu0 %4817
        %4820 = vrot.lane.b32.xlu0 %v4299, 64
        %v4821 = vpop.permute.xlu0 %4820
        %4823 = vrot.lane.b32.xlu0 %v4299, 48
        %v4824 = vpop.permute.xlu0 %4823
        %4826 = vrot.lane.b32.xlu0 %v4299, 32
        %v4827 = vpop.permute.xlu0 %4826
        %4829 = vrot.lane.b32.xlu0 %v4299, 16
        %v4830 = vpop.permute.xlu0 %4829
        %4833 = vrot.lane.b32.xlu0 %v4301, 112
        %v4834 = vpop.permute.xlu0 %4833
        %4836 = vrot.lane.b32.xlu0 %v4301, 96
        %v4837 = vpop.permute.xlu0 %4836
        %4839 = vrot.lane.b32.xlu0 %v4301, 80
        %v4840 = vpop.permute.xlu0 %4839
        %4842 = vrot.lane.b32.xlu0 %v4301, 64
        %v4843 = vpop.permute.xlu0 %4842
        %4845 = vrot.lane.b32.xlu0 %v4301, 48
        %v4846 = vpop.permute.xlu0 %4845
        %4848 = vrot.lane.b32.xlu0 %v4301, 32
        %v4849 = vpop.permute.xlu0 %4848
        %4851 = vrot.lane.b32.xlu0 %v4301, 16
        %v4852 = vpop.permute.xlu0 %4851
        %v4854 = vcombine.low %v4299, %v4815
        %v4855 = vcombine.high %v4299, %v4815
        %v4857 = vunpack.c.l.s4 1983009808
        %v4858 = vunpack.c.0.s8 %v4857
        %v4859 = vlaneseq
        %v4860 = vshrl.u32 %v4859, 7
        %v4861 = vsub.s32 %v4858, %v4860
        %v4862 = vrot.slane %v4854, %v4861
        %v4864 = vunpack.c.l.s4 1983009808
        %v4865 = vunpack.c.0.s8 %v4864
        %v4866 = vlaneseq
        %v4867 = vshrl.u32 %v4866, 7
        %v4868 = vsub.s32 %v4865, %v4867
        %v4869 = vrot.slane %v4855, %v4868
        %v4870 = vcombine.low %v4812, %v4818
        %v4871 = vcombine.high %v4812, %v4818
        %v4873 = vunpack.c.l.s4 1983009808
        %v4874 = vunpack.c.0.s8 %v4873
        %v4875 = vlaneseq
        %v4876 = vshrl.u32 %v4875, 7
        %v4877 = vsub.s32 %v4874, %v4876
        %v4878 = vrot.slane %v4870, %v4877
        %v4880 = vunpack.c.l.s4 1983009808
        %v4881 = vunpack.c.0.s8 %v4880
        %v4882 = vlaneseq
        %v4883 = vshrl.u32 %v4882, 7
        %v4884 = vsub.s32 %v4881, %v4883
        %v4885 = vrot.slane %v4871, %v4884
        %v4886 = vcombine.low %v4821, %v4827
        %v4887 = vcombine.high %v4821, %v4827
        %v4889 = vunpack.c.l.s4 1983009808
        %v4890 = vunpack.c.0.s8 %v4889
        %v4891 = vlaneseq
        %v4892 = vshrl.u32 %v4891, 7
        %v4893 = vsub.s32 %v4890, %v4892
        %v4894 = vrot.slane %v4886, %v4893
        %v4896 = vunpack.c.l.s4 1983009808
        %v4897 = vunpack.c.0.s8 %v4896
        %v4898 = vlaneseq
        %v4899 = vshrl.u32 %v4898, 7
        %v4900 = vsub.s32 %v4897, %v4899
        %v4901 = vrot.slane %v4887, %v4900
        %v4902 = vcombine.low %v4824, %v4830
        %v4903 = vcombine.high %v4824, %v4830
        %v4905 = vunpack.c.l.s4 1983009808
        %v4906 = vunpack.c.0.s8 %v4905
        %v4907 = vlaneseq
        %v4908 = vshrl.u32 %v4907, 7
        %v4909 = vsub.s32 %v4906, %v4908
        %v4910 = vrot.slane %v4902, %v4909
        %v4912 = vunpack.c.l.s4 1983009808
        %v4913 = vunpack.c.0.s8 %v4912
        %v4914 = vlaneseq
        %v4915 = vshrl.u32 %v4914, 7
        %v4916 = vsub.s32 %v4913, %v4915
        %v4917 = vrot.slane %v4903, %v4916
        %v4918 = vcombine.low %v4862, %v4878
        %v4919 = vcombine.high %v4862, %v4878
        %v4921 = vunpack.c.l.s4 1934713408
        %v4922 = vunpack.c.0.s8 %v4921
        %v4923 = vlaneseq
        %v4924 = vshrl.u32 %v4923, 7
        %v4925 = vsub.s32 %v4922, %v4924
        %v4926 = vrot.slane %v4918, %v4925
        %v4928 = vunpack.c.l.s4 1934713408
        %v4929 = vunpack.c.0.s8 %v4928
        %v4930 = vlaneseq
        %v4931 = vshrl.u32 %v4930, 7
        %v4932 = vsub.s32 %v4929, %v4931
        %v4933 = vrot.slane %v4919, %v4932
        %v4934 = vcombine.low %v4869, %v4885
        %v4935 = vcombine.high %v4869, %v4885
        %v4937 = vunpack.c.l.s4 1934713408
        %v4938 = vunpack.c.0.s8 %v4937
        %v4939 = vlaneseq
        %v4940 = vshrl.u32 %v4939, 7
        %v4941 = vsub.s32 %v4938, %v4940
        %v4942 = vrot.slane %v4934, %v4941
        %v4944 = vunpack.c.l.s4 1934713408
        %v4945 = vunpack.c.0.s8 %v4944
        %v4946 = vlaneseq
        %v4947 = vshrl.u32 %v4946, 7
        %v4948 = vsub.s32 %v4945, %v4947
        %v4949 = vrot.slane %v4935, %v4948
        %v4950 = vcombine.low %v4894, %v4910
        %v4951 = vcombine.high %v4894, %v4910
        %v4953 = vunpack.c.l.s4 1934713408
        %v4954 = vunpack.c.0.s8 %v4953
        %v4955 = vlaneseq
        %v4956 = vshrl.u32 %v4955, 7
        %v4957 = vsub.s32 %v4954, %v4956
        %v4958 = vrot.slane %v4950, %v4957
        %v4960 = vunpack.c.l.s4 1934713408
        %v4961 = vunpack.c.0.s8 %v4960
        %v4962 = vlaneseq
        %v4963 = vshrl.u32 %v4962, 7
        %v4964 = vsub.s32 %v4961, %v4963
        %v4965 = vrot.slane %v4951, %v4964
        %v4966 = vcombine.low %v4901, %v4917
        %v4967 = vcombine.high %v4901, %v4917
        %v4969 = vunpack.c.l.s4 1934713408
        %v4970 = vunpack.c.0.s8 %v4969
        %v4971 = vlaneseq
        %v4972 = vshrl.u32 %v4971, 7
        %v4973 = vsub.s32 %v4970, %v4972
        %v4974 = vrot.slane %v4966, %v4973
        %v4976 = vunpack.c.l.s4 1934713408
        %v4977 = vunpack.c.0.s8 %v4976
        %v4978 = vlaneseq
        %v4979 = vshrl.u32 %v4978, 7
        %v4980 = vsub.s32 %v4977, %v4979
        %v4981 = vrot.slane %v4967, %v4980
        %v4982 = vcombine.low %v4926, %v4958
        %v4983 = vcombine.high %v4926, %v4958
        %v4984 = vcombine.low %v4933, %v4965
        %v4985 = vcombine.high %v4933, %v4965
        %v4986 = vcombine.low %v4942, %v4974
        %v4987 = vcombine.high %v4942, %v4974
        %v4988 = vcombine.low %v4949, %v4981
        %v4989 = vcombine.high %v4949, %v4981
        %v4990 = vcombine.low %v4301, %v4837
        %v4991 = vcombine.high %v4301, %v4837
        %v4993 = vunpack.c.l.s4 1983009808
        %v4994 = vunpack.c.0.s8 %v4993
        %v4995 = vlaneseq
        %v4996 = vshrl.u32 %v4995, 7
        %v4997 = vsub.s32 %v4994, %v4996
        %v4998 = vrot.slane %v4990, %v4997
        %v5000 = vunpack.c.l.s4 1983009808
        %v5001 = vunpack.c.0.s8 %v5000
        %v5002 = vlaneseq
        %v5003 = vshrl.u32 %v5002, 7
        %v5004 = vsub.s32 %v5001, %v5003
        %v5005 = vrot.slane %v4991, %v5004
        %v5006 = vcombine.low %v4834, %v4840
        %v5007 = vcombine.high %v4834, %v4840
        %v5009 = vunpack.c.l.s4 1983009808
        %v5010 = vunpack.c.0.s8 %v5009
        %v5011 = vlaneseq
        %v5012 = vshrl.u32 %v5011, 7
        %v5013 = vsub.s32 %v5010, %v5012
        %v5014 = vrot.slane %v5006, %v5013
        %v5016 = vunpack.c.l.s4 1983009808
        %v5017 = vunpack.c.0.s8 %v5016
        %v5018 = vlaneseq
        %v5019 = vshrl.u32 %v5018, 7
        %v5020 = vsub.s32 %v5017, %v5019
        %v5021 = vrot.slane %v5007, %v5020
        %v5022 = vcombine.low %v4843, %v4849
        %v5023 = vcombine.high %v4843, %v4849
        %v5025 = vunpack.c.l.s4 1983009808
        %v5026 = vunpack.c.0.s8 %v5025
        %v5027 = vlaneseq
        %v5028 = vshrl.u32 %v5027, 7
        %v5029 = vsub.s32 %v5026, %v5028
        %v5030 = vrot.slane %v5022, %v5029
        %v5032 = vunpack.c.l.s4 1983009808
        %v5033 = vunpack.c.0.s8 %v5032
        %v5034 = vlaneseq
        %v5035 = vshrl.u32 %v5034, 7
        %v5036 = vsub.s32 %v5033, %v5035
        %v5037 = vrot.slane %v5023, %v5036
        %v5038 = vcombine.low %v4846, %v4852
        %v5039 = vcombine.high %v4846, %v4852
        %v5041 = vunpack.c.l.s4 1983009808
        %v5042 = vunpack.c.0.s8 %v5041
        %v5043 = vlaneseq
        %v5044 = vshrl.u32 %v5043, 7
        %v5045 = vsub.s32 %v5042, %v5044
        %v5046 = vrot.slane %v5038, %v5045
        %v5048 = vunpack.c.l.s4 1983009808
        %v5049 = vunpack.c.0.s8 %v5048
        %v5050 = vlaneseq
        %v5051 = vshrl.u32 %v5050, 7
        %v5052 = vsub.s32 %v5049, %v5051
        %v5053 = vrot.slane %v5039, %v5052
        %v5054 = vcombine.low %v4998, %v5014
        %v5055 = vcombine.high %v4998, %v5014
        %v5057 = vunpack.c.l.s4 1934713408
        %v5058 = vunpack.c.0.s8 %v5057
        %v5059 = vlaneseq
        %v5060 = vshrl.u32 %v5059, 7
        %v5061 = vsub.s32 %v5058, %v5060
        %v5062 = vrot.slane %v5054, %v5061
        %v5064 = vunpack.c.l.s4 1934713408
        %v5065 = vunpack.c.0.s8 %v5064
        %v5066 = vlaneseq
        %v5067 = vshrl.u32 %v5066, 7
        %v5068 = vsub.s32 %v5065, %v5067
        %v5069 = vrot.slane %v5055, %v5068
        %v5070 = vcombine.low %v5005, %v5021
        %v5071 = vcombine.high %v5005, %v5021
        %v5073 = vunpack.c.l.s4 1934713408
        %v5074 = vunpack.c.0.s8 %v5073
        %v5075 = vlaneseq
        %v5076 = vshrl.u32 %v5075, 7
        %v5077 = vsub.s32 %v5074, %v5076
        %v5078 = vrot.slane %v5070, %v5077
        %v5080 = vunpack.c.l.s4 1934713408
        %v5081 = vunpack.c.0.s8 %v5080
        %v5082 = vlaneseq
        %v5083 = vshrl.u32 %v5082, 7
        %v5084 = vsub.s32 %v5081, %v5083
        %v5085 = vrot.slane %v5071, %v5084
        %v5086 = vcombine.low %v5030, %v5046
        %v5087 = vcombine.high %v5030, %v5046
        %v5089 = vunpack.c.l.s4 1934713408
        %v5090 = vunpack.c.0.s8 %v5089
        %v5091 = vlaneseq
        %v5092 = vshrl.u32 %v5091, 7
        %v5093 = vsub.s32 %v5090, %v5092
        %v5094 = vrot.slane %v5086, %v5093
        %v5096 = vunpack.c.l.s4 1934713408
        %v5097 = vunpack.c.0.s8 %v5096
        %v5098 = vlaneseq
        %v5099 = vshrl.u32 %v5098, 7
        %v5100 = vsub.s32 %v5097, %v5099
        %v5101 = vrot.slane %v5087, %v5100
        %v5102 = vcombine.low %v5037, %v5053
        %v5103 = vcombine.high %v5037, %v5053
        %v5105 = vunpack.c.l.s4 1934713408
        %v5106 = vunpack.c.0.s8 %v5105
        %v5107 = vlaneseq
        %v5108 = vshrl.u32 %v5107, 7
        %v5109 = vsub.s32 %v5106, %v5108
        %v5110 = vrot.slane %v5102, %v5109
        %v5112 = vunpack.c.l.s4 1934713408
        %v5113 = vunpack.c.0.s8 %v5112
        %v5114 = vlaneseq
        %v5115 = vshrl.u32 %v5114, 7
        %v5116 = vsub.s32 %v5113, %v5115
        %v5117 = vrot.slane %v5103, %v5116
        %v5118 = vcombine.low %v5062, %v5094
        %v5119 = vcombine.high %v5062, %v5094
        %v5120 = vcombine.low %v5069, %v5101
        %v5121 = vcombine.high %v5069, %v5101
        %v5122 = vcombine.low %v5078, %v5110
        %v5123 = vcombine.high %v5078, %v5110
        %v5124 = vcombine.low %v5085, %v5117
        %v5125 = vcombine.high %v5085, %v5117
        %5126 = vrot.lane.b32.xlu0 %v3024, 112
        %v5127 = vpop.permute.xlu0 %5126
        %5128 = vrot.lane.b32.xlu0 %v3028, 112
        %v5129 = vpop.permute.xlu0 %5128
        %5130 = vrot.lane.b32.xlu0 %v3032, 112
        %v5131 = vpop.permute.xlu0 %5130
        %5132 = vrot.lane.b32.xlu0 %v3036, 112
        %v5133 = vpop.permute.xlu0 %5132
        %5134 = vrot.lane.b32.xlu0 %v3040, 112
        %v5135 = vpop.permute.xlu0 %5134
        %5136 = vrot.lane.b32.xlu0 %v3044, 112
        %v5137 = vpop.permute.xlu0 %5136
        %5138 = vrot.lane.b32.xlu0 %v3048, 112
        %v5139 = vpop.permute.xlu0 %5138
        %5140 = vrot.lane.b32.xlu0 %v3052, 112
        %v5141 = vpop.permute.xlu0 %5140
        %v5150 = vmul.f32 %v4982, %v5127
        %v5151 = vmul.f32 %v5118, %v5127
        %v5152 = vmul.f32 %v4983, %v5129
        %v5153 = vmul.f32 %v5119, %v5129
        %v5154 = vmul.f32 %v4984, %v5131
        %v5155 = vmul.f32 %v5120, %v5131
        %v5156 = vmul.f32 %v4985, %v5133
        %v5157 = vmul.f32 %v5121, %v5133
        %v5158 = vmul.f32 %v4986, %v5135
        %v5159 = vmul.f32 %v5122, %v5135
        %v5160 = vmul.f32 %v4987, %v5137
        %v5161 = vmul.f32 %v5123, %v5137
        %v5162 = vmul.f32 %v4988, %v5139
        %v5163 = vmul.f32 %v5124, %v5139
        %v5164 = vmul.f32 %v4989, %v5141
        %v5165 = vmul.f32 %v5125, %v5141
        %v5166 = vsel %vm1334, %v5150, 0.0
        %5167 = vadd.xlane.f32.xlu0 %v5166
        %v5168 = vpop.xlane.xlu0 %5167
        %v5169 = vsel %vm1334, %v5151, 0.0
        %5170 = vadd.xlane.f32.xlu0 %v5169
        %v5171 = vpop.xlane.xlu0 %5170
        %v5172 = vsel %vm1334, %v5152, 0.0
        %5173 = vadd.xlane.f32.xlu0 %v5172
        %v5174 = vpop.xlane.xlu0 %5173
        %v5175 = vsel %vm1334, %v5153, 0.0
        %5176 = vadd.xlane.f32.xlu0 %v5175
        %v5177 = vpop.xlane.xlu0 %5176
        %v5178 = vsel %vm1334, %v5154, 0.0
        %5179 = vadd.xlane.f32.xlu0 %v5178
        %v5180 = vpop.xlane.xlu0 %5179
        %v5181 = vsel %vm1334, %v5155, 0.0
        %5182 = vadd.xlane.f32.xlu0 %v5181
        %v5183 = vpop.xlane.xlu0 %5182
        %v5184 = vsel %vm1334, %v5156, 0.0
        %5185 = vadd.xlane.f32.xlu0 %v5184
        %v5186 = vpop.xlane.xlu0 %5185
        %v5187 = vsel %vm1334, %v5157, 0.0
        %5188 = vadd.xlane.f32.xlu0 %v5187
        %v5189 = vpop.xlane.xlu0 %5188
        %v5190 = vsel %vm1334, %v5158, 0.0
        %5191 = vadd.xlane.f32.xlu0 %v5190
        %v5192 = vpop.xlane.xlu0 %5191
        %v5193 = vsel %vm1334, %v5159, 0.0
        %5194 = vadd.xlane.f32.xlu0 %v5193
        %v5195 = vpop.xlane.xlu0 %5194
        %v5196 = vsel %vm1334, %v5160, 0.0
        %5197 = vadd.xlane.f32.xlu0 %v5196
        %v5198 = vpop.xlane.xlu0 %5197
        %v5199 = vsel %vm1334, %v5161, 0.0
        %5200 = vadd.xlane.f32.xlu0 %v5199
        %v5201 = vpop.xlane.xlu0 %5200
        %v5202 = vsel %vm1334, %v5162, 0.0
        %5203 = vadd.xlane.f32.xlu0 %v5202
        %v5204 = vpop.xlane.xlu0 %5203
        %v5205 = vsel %vm1334, %v5163, 0.0
        %5206 = vadd.xlane.f32.xlu0 %v5205
        %v5207 = vpop.xlane.xlu0 %5206
        %v5208 = vsel %vm1334, %v5164, 0.0
        %5209 = vadd.xlane.f32.xlu0 %v5208
        %v5210 = vpop.xlane.xlu0 %5209
        %v5211 = vsel %vm1334, %v5165, 0.0
        %5212 = vadd.xlane.f32.xlu0 %v5211
        %v5213 = vpop.xlane.xlu0 %5212
        %v5230 = vlaneseq
        %v5231 = vshrl.u32 %v5230, 7
        %v5232 = vsub.s32 %v4725, %v5231
        %v5233 = vrot.slane %v5168, %v5232
        %v5234 = vlaneseq
        %v5235 = vshrl.u32 %v5234, 7
        %v5236 = vsub.s32 %v4730, %v5235
        %v5237 = vrot.slane %v5171, %v5236
        %v5238 = vsel %vm4735, %v5237, %v5233
        %v5239 = vlaneseq
        %v5240 = vshrl.u32 %v5239, 7
        %v5241 = vsub.s32 %v4725, %v5240
        %v5242 = vrot.slane %v5174, %v5241
        %v5243 = vlaneseq
        %v5244 = vshrl.u32 %v5243, 7
        %v5245 = vsub.s32 %v4730, %v5244
        %v5246 = vrot.slane %v5177, %v5245
        %v5247 = vsel %vm4735, %v5246, %v5242
        %v5248 = vlaneseq
        %v5249 = vshrl.u32 %v5248, 7
        %v5250 = vsub.s32 %v4725, %v5249
        %v5251 = vrot.slane %v5180, %v5250
        %v5252 = vlaneseq
        %v5253 = vshrl.u32 %v5252, 7
        %v5254 = vsub.s32 %v4730, %v5253
        %v5255 = vrot.slane %v5183, %v5254
        %v5256 = vsel %vm4735, %v5255, %v5251
        %v5257 = vlaneseq
        %v5258 = vshrl.u32 %v5257, 7
        %v5259 = vsub.s32 %v4725, %v5258
        %v5260 = vrot.slane %v5186, %v5259
        %v5261 = vlaneseq
        %v5262 = vshrl.u32 %v5261, 7
        %v5263 = vsub.s32 %v4730, %v5262
        %v5264 = vrot.slane %v5189, %v5263
        %v5265 = vsel %vm4735, %v5264, %v5260
        %v5266 = vlaneseq
        %v5267 = vshrl.u32 %v5266, 7
        %v5268 = vsub.s32 %v4725, %v5267
        %v5269 = vrot.slane %v5192, %v5268
        %v5270 = vlaneseq
        %v5271 = vshrl.u32 %v5270, 7
        %v5272 = vsub.s32 %v4730, %v5271
        %v5273 = vrot.slane %v5195, %v5272
        %v5274 = vsel %vm4735, %v5273, %v5269
        %v5275 = vlaneseq
        %v5276 = vshrl.u32 %v5275, 7
        %v5277 = vsub.s32 %v4725, %v5276
        %v5278 = vrot.slane %v5198, %v5277
        %v5279 = vlaneseq
        %v5280 = vshrl.u32 %v5279, 7
        %v5281 = vsub.s32 %v4730, %v5280
        %v5282 = vrot.slane %v5201, %v5281
        %v5283 = vsel %vm4735, %v5282, %v5278
        %v5284 = vlaneseq
        %v5285 = vshrl.u32 %v5284, 7
        %v5286 = vsub.s32 %v4725, %v5285
        %v5287 = vrot.slane %v5204, %v5286
        %v5288 = vlaneseq
        %v5289 = vshrl.u32 %v5288, 7
        %v5290 = vsub.s32 %v4730, %v5289
        %v5291 = vrot.slane %v5207, %v5290
        %v5292 = vsel %vm4735, %v5291, %v5287
        %v5293 = vlaneseq
        %v5294 = vshrl.u32 %v5293, 7
        %v5295 = vsub.s32 %v4725, %v5294
        %v5296 = vrot.slane %v5210, %v5295
        %v5297 = vlaneseq
        %v5298 = vshrl.u32 %v5297, 7
        %v5299 = vsub.s32 %v4730, %v5298
        %v5300 = vrot.slane %v5213, %v5299
        %v5301 = vsel %vm4735, %v5300, %v5296
        %v5302 = vsel %vm2640, %v5247, %v5238
        %v5303 = vsel %vm2642, %v5256, %v5302
        %v5304 = vsel %vm2644, %v5265, %v5303
        %v5305 = vsel %vm2646, %v5274, %v5304
        %v5306 = vsel %vm2648, %v5283, %v5305
        %v5307 = vsel %vm2650, %v5292, %v5306
        %v5308 = vsel %vm2652, %v5301, %v5307
        %5310 = vst.msk [vmem:[#allocation2 + $0x8] sm:$0xff] %vm4808, %v5308
        %v5311 = vld [vmem:[#allocation2] sm:$0xff]
        %v5312 = vld [vmem:[#allocation2 + $0x8] sm:$0xff]
        %v5313 = vpack.c.bf16 %v5312, %v5311
        %v5314 = vld [vmem:[%s7] sm:$0xf]
        %v5315 = vld [vmem:[%s7 + $0x4] sm:$0xf]
        %v5316 = vld [vmem:[%s7 + $0x8] sm:$0xf]
        %v5317 = vld [vmem:[%s7 + $0xc] sm:$0xf]
        %v5318 = vld [vmem:[#allocation12] sm:$0x1]
        %v5320 = vlaneseq
        %v5321 = vshrl.u32 %v5320, 7
        %v5322 = vsub.s32 0, %v5321
        %v5323 = vrot.slane %v5318, %v5322
        %v5329 = vunpack.c.l.b16 %v5314
        %v5330 = vunpack.c.l.b16 %v5315
        %v5331 = vunpack.c.l.b16 %v5316
        %v5332 = vunpack.c.l.b16 %v5317
        %v5333 = vpack.c.b16 %v5330, %v5329
        %v5334 = vpack.c.b16 %v5332, %v5331
        %v5338 = vsel %vm503, %v5313, 0
        %5340 = vmatprep.subr.bf16.mxu0 0
        %5341 = vmatpush1.bf16.msra.mxu0 %v5333
        %5342 = vmatprep.subr.bf16.mxu0 0
        %5343 = vmatpush1.bf16.msra.mxu0 %v5334
        %5344 = vmatprep.subr.bf16.mxu0 0
        %5345 = vmatpush1.bf16.msra.mxu0 0
        %5346 = vmatprep.subr.bf16.mxu0 0
        %5347 = vmatpush1.bf16.msra.mxu0 0
        %5348 = vmatprep.subr.bf16.mxu0 0
        %5349 = vmatpush1.bf16.msra.mxu0 0
        %5350 = vmatprep.subr.bf16.mxu0 0
        %5351 = vmatpush1.bf16.msra.mxu0 0
        %5352 = vmatprep.subr.bf16.mxu0 0
        %5353 = vmatpush1.bf16.msra.mxu0 0
        %5354 = vmatprep.subr.bf16.mxu0 0
        %5355 = vmatpush1.bf16.msra.mxu0 0
        %5356 = vmatprep.subr.bf16.mxu0 0
        %5357 = vmatpush1.bf16.msra.mxu0 0
        %5358 = vmatprep.subr.bf16.mxu0 0
        %5359 = vmatpush1.bf16.msra.mxu0 0
        %5360 = vmatprep.subr.bf16.mxu0 0
        %5361 = vmatpush1.bf16.msra.mxu0 0
        %5362 = vmatprep.subr.bf16.mxu0 0
        %5363 = vmatpush1.bf16.msra.mxu0 0
        %5364 = vmatprep.subr.bf16.mxu0 0
        %5365 = vmatpush1.bf16.msra.mxu0 0
        %5366 = vmatprep.subr.bf16.mxu0 0
        %5367 = vmatpush1.bf16.msra.mxu0 0
        %5368 = vmatprep.subr.bf16.mxu0 0
        %5369 = vmatpush1.bf16.msra.mxu0 0
        %5370 = vmatprep.subr.bf16.mxu0 0
        %5371 = vmatpush1.bf16.msra.mxu0 0
        %5372 = vmatprep.mubr.bf16.mxu0 0
        %5373 = vmatmul.mubr.bf16.gmra.mrb[0].mxu0 %v5338
        %v5374 = vpop.f32.mrb[0].mxu0
        %v5375 = vadd.f32 %v5323, %v5374
        %v5376 = vpop.f32.mrb[0].mxu0
        %v5377 = vpop.f32.mrb[0].mxu0
        %v5378 = vadd.f32 %v5323, %v5377
        %v5379 = vpop.f32.mrb[0].mxu0
        %5380 = vdwg.mxu0
        %v5381 = vmax.f32 %v5375, 0.0
        %v5382 = vmax.f32 %v5378, 0.0
        %v5383 = vpack.c.bf16 %v5382, %v5381
        %v5384 = vld [vmem:[%s9] sm:$0xf]
        %v5385 = vld [vmem:[%s9 + $0x4] sm:$0xf]
        %v5386 = vld [vmem:[%s9 + $0x8] sm:$0xf]
        %v5387 = vld [vmem:[%s9 + $0xc] sm:$0xf]
        %v5388 = vld [vmem:[%s10] sm:$0x1]
        %v5390 = vlaneseq
        %v5391 = vshrl.u32 %v5390, 7
        %v5392 = vsub.s32 0, %v5391
        %v5393 = vrot.slane %v5388, %v5392
        %v5399 = vunpack.c.l.b16 %v5384
        %v5400 = vunpack.c.l.b16 %v5385
        %v5401 = vunpack.c.l.b16 %v5386
        %v5402 = vunpack.c.l.b16 %v5387
        %v5403 = vpack.c.b16 %v5400, %v5399
        %v5404 = vpack.c.b16 %v5402, %v5401
        %v5408 = vsel %vm503, %v5383, 0
        %5410 = vmatprep.subr.bf16.mxu0 0
        %5411 = vmatpush1.bf16.msra.mxu0 %v5403
        %5412 = vmatprep.subr.bf16.mxu0 0
        %5413 = vmatpush1.bf16.msra.mxu0 %v5404
        %5414 = vmatprep.subr.bf16.mxu0 0
        %5415 = vmatpush1.bf16.msra.mxu0 0
        %5416 = vmatprep.subr.bf16.mxu0 0
        %5417 = vmatpush1.bf16.msra.mxu0 0
        %5418 = vmatprep.subr.bf16.mxu0 0
        %5419 = vmatpush1.bf16.msra.mxu0 0
        %5420 = vmatprep.subr.bf16.mxu0 0
        %5421 = vmatpush1.bf16.msra.mxu0 0
        %5422 = vmatprep.subr.bf16.mxu0 0
        %5423 = vmatpush1.bf16.msra.mxu0 0
        %5424 = vmatprep.subr.bf16.mxu0 0
        %5425 = vmatpush1.bf16.msra.mxu0 0
        %5426 = vmatprep.subr.bf16.mxu0 0
        %5427 = vmatpush1.bf16.msra.mxu0 0
        %5428 = vmatprep.subr.bf16.mxu0 0
        %5429 = vmatpush1.bf16.msra.mxu0 0
        %5430 = vmatprep.subr.bf16.mxu0 0
        %5431 = vmatpush1.bf16.msra.mxu0 0
        %5432 = vmatprep.subr.bf16.mxu0 0
        %5433 = vmatpush1.bf16.msra.mxu0 0
        %5434 = vmatprep.subr.bf16.mxu0 0
        %5435 = vmatpush1.bf16.msra.mxu0 0
        %5436 = vmatprep.subr.bf16.mxu0 0
        %5437 = vmatpush1.bf16.msra.mxu0 0
        %5438 = vmatprep.subr.bf16.mxu0 0
        %5439 = vmatpush1.bf16.msra.mxu0 0
        %5440 = vmatprep.subr.bf16.mxu0 0
        %5441 = vmatpush1.bf16.msra.mxu0 0
        %5442 = vmatprep.mubr.bf16.mxu0 0
        %5443 = vmatmul.mubr.bf16.gmra.mrb[0].mxu0 %v5408
        %v5444 = vpop.f32.mrb[0].mxu0
        %v5445 = vadd.f32 %v5393, %v5444
        %v5446 = vpop.f32.mrb[0].mxu0
        %v5447 = vpop.f32.mrb[0].mxu0
        %v5448 = vadd.f32 %v5393, %v5447
        %v5449 = vpop.f32.mrb[0].mxu0
        %5450 = vdwg.mxu0
        %5451 = vst.msk [vmem:[%s473] sm:$0xff] %vm503, %v5445
        %5452 = vst.msk [vmem:[%s473 + $0x8] sm:$0xff] %vm503, %v5448
        %s5453 = sand.u32 %s275, 1
        %s5454 = scalar_lea.sflag [#allocation5], %s5453
        %s5455 = sand.u32 %s275, 1
        %s5456 = smul.addr %s5455, 16
        %s5457 = scalar_lea.vmem [#allocation14], %s5456
        // Predicated region
        $region89: #{tpu_custom_call.1} parent=63 // pred_check
          %p5458 = pneg %p285
        $region90: #{tpu_custom_call.1} parent=63 // pred_check_branch
          %5460 = sbr.rel (%p5458) target = $region92
        $region91: #{tpu_custom_call.1} parent=63 // pred_region
          %s5461 = smul.u32 2, %s31
          %s5463 = ssub.s32 256, 256
          %5464 = vsyncadd %s5454, %s5463
          %s5465 = smul.addr %s5461, 128
          %s5466 = scalar_lea.hbm %s11, %s5465
          %s5467 = sshll.u32 %s5457, 4
          %s5468 = int_to_ptr.vmem [resolvable:$true] %s5467
          %5473 = dma.vmem_to_hbm [thread:$0]  %s5468, 256, %s5466, %s5454, 128, 128, 8
        $region92: #{tpu_custom_call.1} parent=63 // pred_fallthru
          _
      $region64: #{tpu_custom_call.1} parent=5 // pred_fallthru
        _
      %p5474 = scmp.le.s32.totalorder 2, %s26
      // Predicated region
      $region93: #{tpu_custom_call.1} parent=5 // pred_check
        %p5475 = pneg %p5474
      $region94: #{tpu_custom_call.1} parent=5 // pred_check_branch
        %5477 = sbr.rel (%p5475) target = $region96
      $region95: #{tpu_custom_call.1} parent=5 // pred_region
        %s5478 = ssub.s32 %s26, 2
        // Predicated region
        $region97: #{tpu_custom_call.1} parent=95 // pred_check
          %p5479 = pneg %p291
        $region98: #{tpu_custom_call.1} parent=95 // pred_check_branch
          %5481 = sbr.rel (%p5479) target = $region100
        $region99: #{tpu_custom_call.1} parent=95 // pred_region
          %s5482 = sand.u32 %s276, 1
          %s5483 = scalar_lea.sflag [#allocation5], %s5482
          %s5484 = sand.u32 %s276, 1
          %s5485 = smul.addr %s5484, 16
          %s5486 = scalar_lea.vmem [#allocation14], %s5485
          %5487 = dma.done %s5483, 256
        $region100: #{tpu_custom_call.1} parent=95 // pred_fallthru
          _
      $region96: #{tpu_custom_call.1} parent=5 // pred_fallthru
        _
    $region6: #{tpu_custom_call.1} parent=1 // loop_footer
      %s30 = sadd.s32 1, %s26
    $region7: #{tpu_custom_call.1} parent=1 // loop_footer_branch
      %25 = sbr.rel target = $region3
    $region8: #{tpu_custom_call.1} parent=1 // loop_exit
      _
    %5488 = vsyncpa [#allocation4], 1
    %s5489 = scalar_lea.sflag [#allocation4], 1
    %5490 = vsyncpa %s5489, 1
    %5491 = vsyncpa [#allocation7], 1
    %5492 = vsyncpa [#allocation10], 1
    %5493 = vsyncpa [#allocation13], 1
    %5494 = vsyncpa [#allocation5], 1
    %s5495 = scalar_lea.sflag [#allocation5], 1
    %5496 = vsyncpa %s5495, 1

</llo_original>
